<compile_context>
chip_gen: v7x
topology: tpu7x:2x2x1
jax: 0.10.0
libtpu: 0.0.40
codegen_flags: <defaults>
</compile_context>

<pallas_src>
import functools
import math

import jax
import jax.numpy as jnp
from jax import lax
from jax.experimental import pallas as pl
from jax.experimental.pallas import tpu as pltpu

# On v6e/v7x set this to jnp.bfloat16 to feed the MXU bf16 operands and halve
# HBM/VMEM traffic (accumulation stays f32 via preferred_element_type). Default
# f32 exactly preserves the PyTorch module's numerics.
COMPUTE_DTYPE = jnp.float32

_SMALL_VALUE = -(2.0 ** 15) + 1.0  # matches torch.tensor(-2**15 + 1.0)


def _round_up(x, m):
    return (x + m - 1) // m * m


# ----------------------------------------------------------------------------
# Kernel 1: lane-dense 1x1 conv   (Cout, Cin) @ (Cin, M_tile)  + bias [+ relu]
# ----------------------------------------------------------------------------
def _conv1x1_kernel(x_ref, w_ref, b_ref, o_ref, *, relu):
    acc = jnp.dot(w_ref[...], x_ref[0], preferred_element_type=jnp.float32)
    acc = acc + b_ref[...]
    if relu:
        acc = jnp.maximum(acc, 0.0)
    o_ref[0] = acc.astype(o_ref.dtype)


def conv1x1_cf(x_bcm, w, b, *, relu=False, tile_m=512):
    """Channels-first 1x1 conv.  x:(B,Cin,M), w:(Cout,Cin), b:(Cout,) -> (B,Cout,M) f32."""
    B, Cin, M = x_bcm.shape
    Cout = w.shape[0]

    # Pad the pixel axis to a lane-friendly multiple of the tile size.
    Mp = _round_up(M, 128)
    tm = min(tile_m, Mp)
    Mp = _round_up(Mp, tm)
    if Mp != M:
        x_bcm = jnp.pad(x_bcm, ((0, 0), (0, 0), (0, Mp - M)))

    x_c = x_bcm.astype(COMPUTE_DTYPE)
    w_c = w.astype(COMPUTE_DTYPE)
    b2 = b.reshape(Cout, 1).astype(jnp.float32)

    cost = pl.CostEstimate(
        flops=2 * B * Cout * Cin * Mp,
        transcendentals=0,
        bytes_accessed=(x_c.size * x_c.dtype.itemsize
                        + w_c.size * w_c.dtype.itemsize
                        + b2.size * 4 + B * Cout * Mp * 4),
    )
    out = pl.pallas_call(
        functools.partial(_conv1x1_kernel, relu=relu),
        out_shape=jax.ShapeDtypeStruct((B, Cout, Mp), jnp.float32),
        grid=(B, Mp // tm),
        in_specs=[
            pl.BlockSpec((1, Cin, tm), lambda bi, mi: (bi, 0, mi)),
            pl.BlockSpec((Cout, Cin), lambda bi, mi: (0, 0)),
            pl.BlockSpec((Cout, 1), lambda bi, mi: (0, 0)),
        ],
        out_specs=pl.BlockSpec((1, Cout, tm), lambda bi, mi: (bi, 0, mi)),
        compiler_params=pltpu.CompilerParams(
            dimension_semantics=("parallel", "parallel")),
        cost_estimate=cost,
    )(x_c, w_c, b2)
    return out[:, :, :M]


# ----------------------------------------------------------------------------
# Kernel 2: batched temporal self-attention over R = K_heads*B*N rows
# ----------------------------------------------------------------------------
def _attn_kernel(q_ref, k_ref, v_ref, o_ref, *, scale, causal, small_value):
    q = q_ref[...]
    q = q * jnp.asarray(scale, q.dtype)          # fold 1/sqrt(d) into q (T,d mul)
    k = k_ref[...]
    v = v_ref[...]
    s = jnp.einsum("rtd,rsd->rts", q, k,
                   preferred_element_type=jnp.float32)       # (Rblk, T, T) f32
    if causal:
        row = lax.broadcasted_iota(jnp.int32, s.shape, 1)
        col = lax.broadcasted_iota(jnp.int32, s.shape, 2)
        s = jnp.where(col <= row, s, jnp.float32(small_value))
    s = s - jnp.max(s, axis=-1, keepdims=True)
    e = jnp.exp(s)
    p = e * pl.reciprocal(jnp.sum(e, axis=-1, keepdims=True), approx=True)
    o = jnp.einsum("rts,rsd->rtd", p.astype(v.dtype), v,
                   preferred_element_type=jnp.float32)
    o_ref[...] = o.astype(o_ref.dtype)


def attention(qf, kf, vf, d, *, causal, tile_r=256):
    """qf/kf/vf: (R, T, d) with R = K_heads*B*N.  Returns (R, T, d) float32."""
    R, T, dd = qf.shape
    rblk = min(tile_r, R)
    Rp = _round_up(R, rblk)
    if Rp != R:
        pad = ((0, Rp - R), (0, 0), (0, 0))
        qf, kf, vf = (jnp.pad(t, pad) for t in (qf, kf, vf))
    qf = qf.astype(COMPUTE_DTYPE)
    kf = kf.astype(COMPUTE_DTYPE)
    vf = vf.astype(COMPUTE_DTYPE)

    spec = pl.BlockSpec((rblk, T, dd), lambda i: (i, 0, 0))
    cost = pl.CostEstimate(
        flops=4 * Rp * T * T * dd,
        transcendentals=Rp * T * T,
        bytes_accessed=3 * Rp * T * dd * qf.dtype.itemsize + Rp * T * dd * 4,
    )
    out = pl.pallas_call(
        functools.partial(_attn_kernel, scale=1.0 / math.sqrt(d),
                          causal=causal, small_value=_SMALL_VALUE),
        out_shape=jax.ShapeDtypeStruct((Rp, T, dd), jnp.float32),
        grid=(Rp // rblk,),
        in_specs=[spec, spec, spec],
        out_specs=spec,
        compiler_params=pltpu.CompilerParams(dimension_semantics=("parallel",)),
        cost_estimate=cost,
    )(qf, kf, vf)
    return out[:R]


# ----------------------------------------------------------------------------
# TATT forward (layout plumbing between the two kernels)
# ----------------------------------------------------------------------------
def tatt_forward(p, x, tem_embedding, *, K, d, mask=True):
    B, _, N, T = x.shape
    c_out = p["wo"].shape[0]
    assert c_out == K * d

    xc = jnp.concatenate([x, tem_embedding[:, :, :, -T:]], axis=1)   # (B, Cin, N, T)
    Cin = xc.shape[1]
    x_bcm = xc.reshape(B, Cin, N * T)

    # Fused Q/K/V projection: one matmul instead of three.
    w_qkv = jnp.concatenate([p["wq"], p["wk"], p["wv"]], axis=0)     # (3*c_out, Cin)
    b_qkv = jnp.concatenate([p["bq"], p["bk"], p["bv"]], axis=0)     # (3*c_out,)
    qkv = conv1x1_cf(x_bcm, w_qkv, b_qkv, relu=False)                # (B, 3*c_out, N*T)

    # Split into q/k/v and heads:  (B, 3, K, d, N, T) -> (3, K*B*N, T, d)
    qkv = qkv.reshape(B, 3, K, d, N, T).transpose(1, 2, 0, 4, 5, 3)
    qkv = qkv.reshape(3, K * B * N, T, d)
    qf, kf, vf = qkv[0], qkv[1], qkv[2]

    of = attention(qf, kf, vf, d, causal=mask)                       # (K*B*N, T, d)

    # Merge heads back:  (K, B, N, T, d) -> (B, K*d, N*T)
    o = of.reshape(K, B, N, T, d).transpose(1, 0, 4, 2, 3).reshape(B, c_out, N * T)
    out = conv1x1_cf(o, p["wo"], p["bo"], relu=True)                 # (B, c_out, N*T)
    return out.reshape(B, c_out, N, T)


# ----------------------------------------------------------------------------
# Pure-JAX reference (mirrors the PyTorch forward) + deterministic example run
# ----------------------------------------------------------------------------
def tatt_reference(p, x, tem_embedding, K, d, mask=True):
    B, _, N, T = x.shape
    xc = jnp.concatenate([x, tem_embedding[:, :, :, -T:]], axis=1)

    def conv(w, b, inp):
        return jnp.einsum("oc,bcnt->bont", w, inp) + b[None, :, None, None]

    q = conv(p["wq"], p["bq"], xc)
    k = conv(p["wk"], p["bk"], xc)
    v = conv(p["wv"], p["bv"], xc)

    def split_heads(t):
        return jnp.concatenate(jnp.split(t, K, axis=1), axis=0)      # (K*B, d, N, T)

    q, k, v = split_heads(q), split_heads(k), split_heads(v)
    q = q.transpose(0, 2, 3, 1)                                      # (KB, N, T, d)
    kT = k.transpose(0, 2, 1, 3)                                     # (KB, N, d, T)
    v = v.transpose(0, 2, 3, 1)
    att = jnp.matmul(q, kT) / (d ** 0.5)
    if mask:
        tril = jnp.tril(jnp.ones((T, T), bool))
        att = jnp.where(tril[None, None], att, _SMALL_VALUE)
    att = jax.nn.softmax(att, axis=-1)
    o = jnp.matmul(att, v).transpose(0, 3, 1, 2)                     # (KB, d, N, T)
    o = jnp.concatenate(jnp.split(o, K, axis=0), axis=1)             # (B, K*d, N, T)
    out = jnp.einsum("oc,bcnt->bont", p["wo"], o) + p["bo"][None, :, None, None]
    return jnp.maximum(out, 0.0)


def init_tatt_params(key, c_in, c_out):
    ks = jax.random.split(key, 8)

    def rnd(k, shape, scale=0.1):
        return jax.random.normal(k, shape, jnp.float32) * scale

    return {
        "wq": rnd(ks[0], (c_out, c_in)), "bq": rnd(ks[1], (c_out,)),
        "wk": rnd(ks[2], (c_out, c_in)), "bk": rnd(ks[3], (c_out,)),
        "wv": rnd(ks[4], (c_out, c_in)), "bv": rnd(ks[5], (c_out,)),
        "wo": rnd(ks[6], (c_out, c_out)), "bo": rnd(ks[7], (c_out,)),
    }


if __name__ == "__main__":
    # Small deterministic config consistent with the module (c_out = K * d).
    B, c_in_x, N, T = 2, 4, 4, 10
    dim_tem, c_out = 4, 8
    K_heads, d_head = 2, 4
    use_mask = True

    key = jax.random.PRNGKey(0)
    kx, kt, kp = jax.random.split(key, 3)
    x = jax.random.normal(kx, (B, c_in_x, N, T), jnp.float32)
    tem_embedding = jax.random.normal(kt, (B, dim_tem, N, T), jnp.float32)
    params = init_tatt_params(kp, c_in_x + dim_tem, c_out)

    fwd = jax.jit(functools.partial(tatt_forward, K=K_heads, d=d_head, mask=use_mask))
    out = jax.block_until_ready(fwd(params, x, tem_embedding))

    assert out.shape == (B, c_out, N, T), out.shape
    assert bool(jnp.all(jnp.isfinite(out)))

    ref = tatt_reference(params, x, tem_embedding, K_heads, d_head, use_mask)
    err = float(jnp.max(jnp.abs(out - ref)))
    assert err < 5e-2, f"max abs err vs reference: {err}"
    print("KERNEL_OK")
</pallas_src>

<mosaic_0001>
module attributes {stable_mosaic.version = 11 : i64} {
  func.func @_conv1x1_kernel(%arg0: i32, %arg1: i32, %arg2: memref<1x8x128xf32, #tpu.memory_space<vmem>>, %arg3: memref<24x8xf32, #tpu.memory_space<vmem>>, %arg4: memref<24x1xf32, #tpu.memory_space<vmem>>, %arg5: memref<1x24x128xf32, #tpu.memory_space<vmem>>) attributes {dimension_semantics = [#tpu.dimension_semantics<parallel>, #tpu.dimension_semantics<parallel>], iteration_bounds = array<i64: 2, 1>, scalar_prefetch = 0 : i64, scratch_operands = 0 : i64, tpu.core_type = #tpu.core_type<tc>, window_params = [{transform_indices = @transform_0, window_bounds = array<i64: 1, 8, 128>}, {pipeline_mode = #tpu.pipeline_mode<synchronous>, transform_indices = @transform_1, window_bounds = array<i64: 24, 8>}, {pipeline_mode = #tpu.pipeline_mode<synchronous>, transform_indices = @transform_2, window_bounds = array<i64: 24, 1>}, {transform_indices = @transform_3, window_bounds = array<i64: 1, 24, 128>}]} {
    %c0 = arith.constant 0 : index
    %c0_0 = arith.constant 0 : index
    %0 = vector.load %arg3[%c0, %c0_0] : memref<24x8xf32, #tpu.memory_space<vmem>>, vector<24x8xf32>
    %c0_1 = arith.constant 0 : index
    %c0_2 = arith.constant 0 : index
    %c0_3 = arith.constant 0 : index
    %1 = vector.load %arg2[%c0_1, %c0_2, %c0_3] : memref<1x8x128xf32, #tpu.memory_space<vmem>>, vector<1x8x128xf32>
    %2 = vector.shape_cast %1 : vector<1x8x128xf32> to vector<8x128xf32>
    %cst = arith.constant dense<0.000000e+00> : vector<24x128xf32>
    %3 = tpu.matmul %0, %2, %cst {dimension_numbers = #tpu.dot_dimension_numbers<[1], [0], [0], [1], [0, 0, 1, 1], [], []>} : vector<24x8xf32>, vector<8x128xf32>, vector<24x128xf32> -> vector<24x128xf32>
    %c0_4 = arith.constant 0 : index
    %c0_5 = arith.constant 0 : index
    %4 = vector.load %arg4[%c0_4, %c0_5] : memref<24x1xf32, #tpu.memory_space<vmem>>, vector<24x1xf32>
    %5 = vector.broadcast %4 : vector<24x1xf32> to vector<24x128xf32>
    %6 = arith.addf %3, %5 : vector<24x128xf32>
    %c0_6 = arith.constant 0 : index
    %c0_7 = arith.constant 0 : index
    %c0_8 = arith.constant 0 : index
    %7 = vector.load %arg5[%c0_6, %c0_7, %c0_8] : memref<1x24x128xf32, #tpu.memory_space<vmem>>, vector<1x24x128xf32>
    %8 = vector.shape_cast %7 : vector<1x24x128xf32> to vector<24x128xf32>
    %9 = vector.shape_cast %6 : vector<24x128xf32> to vector<1x24x128xf32>
    tpu.vector_store %arg5[%c0_6, %c0_7, %c0_8], %9 {strides = array<i32>} : memref<1x24x128xf32, #tpu.memory_space<vmem>>, vector<1x24x128xf32>,
    return
  }
  func.func @transform_0(%arg0: i32, %arg1: i32) -> (i32, i32, i32) {
    %c0_i32 = arith.constant 0 : i32
    %c0_i32_0 = arith.constant 0 : i32
    return %arg0, %c0_i32, %arg1 : i32, i32, i32
  }
  func.func @transform_1(%arg0: i32, %arg1: i32) -> (i32, i32) {
    %c0_i32 = arith.constant 0 : i32
    %c0_i32_0 = arith.constant 0 : i32
    %c0_i32_1 = arith.constant 0 : i32
    return %c0_i32, %c0_i32_0 : i32, i32
  }
  func.func @transform_2(%arg0: i32, %arg1: i32) -> (i32, i32) {
    %c0_i32 = arith.constant 0 : i32
    %c0_i32_0 = arith.constant 0 : i32
    %c0_i32_1 = arith.constant 0 : i32
    return %c0_i32, %c0_i32_0 : i32, i32
  }
  func.func @transform_3(%arg0: i32, %arg1: i32) -> (i32, i32, i32) {
    %c0_i32 = arith.constant 0 : i32
    %c0_i32_0 = arith.constant 0 : i32
    return %arg0, %c0_i32, %arg1 : i32, i32, i32
  }
}

module attributes {stable_mosaic.version = 11 : i64} {
  func.func @_attn_kernel(%arg0: i32, %arg1: memref<16x10x4xf32, #tpu.memory_space<vmem>>, %arg2: memref<16x10x4xf32, #tpu.memory_space<vmem>>, %arg3: memref<16x10x4xf32, #tpu.memory_space<vmem>>, %arg4: memref<16x10x4xf32, #tpu.memory_space<vmem>>) attributes {dimension_semantics = [#tpu.dimension_semantics<parallel>], iteration_bounds = array<i64: 1>, scalar_prefetch = 0 : i64, scratch_operands = 0 : i64, tpu.core_type = #tpu.core_type<tc>, window_params = [{transform_indices = @transform_0, window_bounds = array<i64: 16, 10, 4>}, {transform_indices = @transform_1, window_bounds = array<i64: 16, 10, 4>}, {transform_indices = @transform_2, window_bounds = array<i64: 16, 10, 4>}, {transform_indices = @transform_3, window_bounds = array<i64: 16, 10, 4>}]} {
    %c0 = arith.constant 0 : index
    %c0_0 = arith.constant 0 : index
    %c0_1 = arith.constant 0 : index
    %0 = vector.load %arg1[%c0, %c0_0, %c0_1] : memref<16x10x4xf32, #tpu.memory_space<vmem>>, vector<16x10x4xf32>
    %cst = arith.constant 5.000000e-01 : f32
    %1 = vector.broadcast %cst : f32 to vector<16x10x4xf32>
    %2 = arith.mulf %0, %1 : vector<16x10x4xf32>
    %c0_2 = arith.constant 0 : index
    %c0_3 = arith.constant 0 : index
    %c0_4 = arith.constant 0 : index
    %3 = vector.load %arg2[%c0_2, %c0_3, %c0_4] : memref<16x10x4xf32, #tpu.memory_space<vmem>>, vector<16x10x4xf32>
    %c0_5 = arith.constant 0 : index
    %c0_6 = arith.constant 0 : index
    %c0_7 = arith.constant 0 : index
    %4 = vector.load %arg3[%c0_5, %c0_6, %c0_7] : memref<16x10x4xf32, #tpu.memory_space<vmem>>, vector<16x10x4xf32>
    "tpu.trace_start"() <{level = 10 : i32, message = "rtd,rsd->rts"}> : () -> ()
    %cst_8 = arith.constant dense<0.000000e+00> : vector<16x10x10xf32>
    %5 = tpu.matmul %2, %3, %cst_8 {dimension_numbers = #tpu.dot_dimension_numbers<[2], [2], [1], [1], [0, 0, 0, 1, 1, 1], [0], [0]>} : vector<16x10x4xf32>, vector<16x10x4xf32>, vector<16x10x10xf32> -> vector<16x10x10xf32>
    "tpu.trace_stop"() : () -> ()
    %6 = tpu.iota {dimensions = array<i32: 1>} : vector<16x10x10xi32>
    %7 = tpu.iota {dimensions = array<i32: 2>} : vector<16x10x10xi32>
    %8 = arith.cmpi sle, %7, %6 : vector<16x10x10xi32>
    %cst_9 = arith.constant -3.276700e+04 : f32
    %9 = vector.broadcast %cst_9 : f32 to vector<16x10x10xf32>
    %10 = arith.select %8, %5, %9 : vector<16x10x10xi1>, vector<16x10x10xf32>
    %cst_10 = arith.constant dense<0xFF800000> : vector<16x10xf32>
    %11 = vector.multi_reduction <maximumf>, %10, %cst_10 [2] : vector<16x10x10xf32> to vector<16x10xf32>
    %12 = vector.shape_cast %11 : vector<16x10xf32> to vector<16x10x1xf32>
    %13 = vector.broadcast %12 : vector<16x10x1xf32> to vector<16x10x10xf32>
    %14 = arith.subf %10, %13 : vector<16x10x10xf32>
    %15 = math.exp %14 : vector<16x10x10xf32>
    %cst_11 = arith.constant dense<0.000000e+00> : vector<16x10xf32>
    %16 = vector.multi_reduction <add>, %15, %cst_11 [2] : vector<16x10x10xf32> to vector<16x10xf32>
    %17 = vector.shape_cast %16 : vector<16x10xf32> to vector<16x10x1xf32>
    %18 = tpu.reciprocal %17 {approx = true} : vector<16x10x1xf32> -> vector<16x10x1xf32>
    %19 = vector.broadcast %18 : vector<16x10x1xf32> to vector<16x10x10xf32>
    %20 = arith.mulf %15, %19 : vector<16x10x10xf32>
    "tpu.trace_start"() <{level = 10 : i32, message = "rts,rsd->rtd"}> : () -> ()
    %cst_12 = arith.constant dense<0.000000e+00> : vector<16x10x4xf32>
    %21 = tpu.matmul %20, %4, %cst_12 {dimension_numbers = #tpu.dot_dimension_numbers<[2], [1], [1], [2], [0, 0, 0, 1, 1, 2], [0], [0]>} : vector<16x10x10xf32>, vector<16x10x4xf32>, vector<16x10x4xf32> -> vector<16x10x4xf32>
    "tpu.trace_stop"() : () -> ()
    %c0_13 = arith.constant 0 : index
    %c0_14 = arith.constant 0 : index
    %c0_15 = arith.constant 0 : index
    %22 = vector.load %arg4[%c0_13, %c0_14, %c0_15] : memref<16x10x4xf32, #tpu.memory_space<vmem>>, vector<16x10x4xf32>
    tpu.vector_store %arg4[%c0_13, %c0_14, %c0_15], %21 {strides = array<i32>} : memref<16x10x4xf32, #tpu.memory_space<vmem>>, vector<16x10x4xf32>,
    return
  }
  func.func @transform_0(%arg0: i32) -> (i32, i32, i32) {
    %c0_i32 = arith.constant 0 : i32
    %c0_i32_0 = arith.constant 0 : i32
    %c0_i32_1 = arith.constant 0 : i32
    return %arg0, %c0_i32, %c0_i32_0 : i32, i32, i32
  }
  func.func @transform_1(%arg0: i32) -> (i32, i32, i32) {
    %c0_i32 = arith.constant 0 : i32
    %c0_i32_0 = arith.constant 0 : i32
    %c0_i32_1 = arith.constant 0 : i32
    return %arg0, %c0_i32, %c0_i32_0 : i32, i32, i32
  }
  func.func @transform_2(%arg0: i32) -> (i32, i32, i32) {
    %c0_i32 = arith.constant 0 : i32
    %c0_i32_0 = arith.constant 0 : i32
    %c0_i32_1 = arith.constant 0 : i32
    return %arg0, %c0_i32, %c0_i32_0 : i32, i32, i32
  }
  func.func @transform_3(%arg0: i32) -> (i32, i32, i32) {
    %c0_i32 = arith.constant 0 : i32
    %c0_i32_0 = arith.constant 0 : i32
    %c0_i32_1 = arith.constant 0 : i32
    return %arg0, %c0_i32, %c0_i32_0 : i32, i32, i32
  }
}

module attributes {stable_mosaic.version = 11 : i64} {
  func.func @_conv1x1_kernel(%arg0: i32, %arg1: i32, %arg2: memref<1x8x128xf32, #tpu.memory_space<vmem>>, %arg3: memref<8x8xf32, #tpu.memory_space<vmem>>, %arg4: memref<8x1xf32, #tpu.memory_space<vmem>>, %arg5: memref<1x8x128xf32, #tpu.memory_space<vmem>>) attributes {dimension_semantics = [#tpu.dimension_semantics<parallel>, #tpu.dimension_semantics<parallel>], iteration_bounds = array<i64: 2, 1>, scalar_prefetch = 0 : i64, scratch_operands = 0 : i64, tpu.core_type = #tpu.core_type<tc>, window_params = [{transform_indices = @transform_0, window_bounds = array<i64: 1, 8, 128>}, {pipeline_mode = #tpu.pipeline_mode<synchronous>, transform_indices = @transform_1, window_bounds = array<i64: 8, 8>}, {pipeline_mode = #tpu.pipeline_mode<synchronous>, transform_indices = @transform_2, window_bounds = array<i64: 8, 1>}, {transform_indices = @transform_3, window_bounds = array<i64: 1, 8, 128>}]} {
    %c0 = arith.constant 0 : index
    %c0_0 = arith.constant 0 : index
    %0 = vector.load %arg3[%c0, %c0_0] : memref<8x8xf32, #tpu.memory_space<vmem>>, vector<8x8xf32>
    %c0_1 = arith.constant 0 : index
    %c0_2 = arith.constant 0 : index
    %c0_3 = arith.constant 0 : index
    %1 = vector.load %arg2[%c0_1, %c0_2, %c0_3] : memref<1x8x128xf32, #tpu.memory_space<vmem>>, vector<1x8x128xf32>
    %2 = vector.shape_cast %1 : vector<1x8x128xf32> to vector<8x128xf32>
    %cst = arith.constant dense<0.000000e+00> : vector<8x128xf32>
    %3 = tpu.matmul %0, %2, %cst {dimension_numbers = #tpu.dot_dimension_numbers<[1], [0], [0], [1], [0, 0, 1, 1], [], []>} : vector<8x8xf32>, vector<8x128xf32>, vector<8x128xf32> -> vector<8x128xf32>
    %c0_4 = arith.constant 0 : index
    %c0_5 = arith.constant 0 : index
    %4 = vector.load %arg4[%c0_4, %c0_5] : memref<8x1xf32, #tpu.memory_space<vmem>>, vector<8x1xf32>
    %5 = vector.broadcast %4 : vector<8x1xf32> to vector<8x128xf32>
    %6 = arith.addf %3, %5 : vector<8x128xf32>
    %cst_6 = arith.constant 0.000000e+00 : f32
    %7 = vector.broadcast %cst_6 : f32 to vector<8x128xf32>
    %8 = arith.maximumf %6, %7 : vector<8x128xf32>
    %c0_7 = arith.constant 0 : index
    %c0_8 = arith.constant 0 : index
    %c0_9 = arith.constant 0 : index
    %9 = vector.load %arg5[%c0_7, %c0_8, %c0_9] : memref<1x8x128xf32, #tpu.memory_space<vmem>>, vector<1x8x128xf32>
    %10 = vector.shape_cast %9 : vector<1x8x128xf32> to vector<8x128xf32>
    %11 = vector.shape_cast %8 : vector<8x128xf32> to vector<1x8x128xf32>
    tpu.vector_store %arg5[%c0_7, %c0_8, %c0_9], %11 {strides = array<i32>} : memref<1x8x128xf32, #tpu.memory_space<vmem>>, vector<1x8x128xf32>,
    return
  }
  func.func @transform_0(%arg0: i32, %arg1: i32) -> (i32, i32, i32) {
    %c0_i32 = arith.constant 0 : i32
    %c0_i32_0 = arith.constant 0 : i32
    return %arg0, %c0_i32, %arg1 : i32, i32, i32
  }
  func.func @transform_1(%arg0: i32, %arg1: i32) -> (i32, i32) {
    %c0_i32 = arith.constant 0 : i32
    %c0_i32_0 = arith.constant 0 : i32
    %c0_i32_1 = arith.constant 0 : i32
    return %c0_i32, %c0_i32_0 : i32, i32
  }
  func.func @transform_2(%arg0: i32, %arg1: i32) -> (i32, i32) {
    %c0_i32 = arith.constant 0 : i32
    %c0_i32_0 = arith.constant 0 : i32
    %c0_i32_1 = arith.constant 0 : i32
    return %c0_i32, %c0_i32_0 : i32, i32
  }
  func.func @transform_3(%arg0: i32, %arg1: i32) -> (i32, i32, i32) {
    %c0_i32 = arith.constant 0 : i32
    %c0_i32_0 = arith.constant 0 : i32
    return %arg0, %c0_i32, %arg1 : i32, i32, i32
  }
}

</mosaic_0001>

<llo_original>
// kernel: tatt_forward.3
$region0: #{tatt_forward.3}
  #allocation0 [shape = 'u32[]', space=smem, size = 0x4, offset = 0x4, fixed_abs, tag = 'smem constant byte address 0x4 - core index']
  #allocation1 [shape = 'u32[144,128]{1,0:T(1,128)}', space=vmem, size = 0x12000, scoped, tag = 'internal scratch']
  %s0 = inlined_call_operand.vmem [shape: f32[2,8,128], index: 0, kind: input, shape index: {}]
  %s1 = inlined_call_operand.vmem [shape: f32[24,8], index: 1, kind: input, shape index: {}]
  %s2 = inlined_call_operand.vmem [shape: f32[24,1], index: 2, kind: input, shape index: {}]
  %s3 = inlined_call_operand.vmem [shape: f32[2,24,128], index: 3, kind: output, shape index: {}]
  %s4 = sld [smem:[#allocation0]]
  $region45: #{tatt_forward.3} parent=0
    _
  %s6 = ssub.s32 1, %s4
  %s7 = scalar_select 0, %s6, %s4
  loop: start=0, step=1, limit=4
  $region2: #{tatt_forward.3} parent=0 // loop_pre_header
    _
  $region3: #{tatt_forward.3} parent=0 // loop_header
    %s9 = sphi 0, %s13
    %p10 = scmp.ge.s32.totalorder %s9, 4
    %s16 = sphi 0, %s28
    %s17 = sphi 0, %s24
    %s18 = sphi 0, %s16
    %s19 = sphi 0, %s17
    %s20 = sphi 0, %s18
    %s21 = sphi 0, %s19
    %s33 = sphi 0, %s35
    %s36 = sphi 0, %s33
    %s37 = sphi 0, %s36
    %s53 = sphi 0, %s37
    %s57 = sphi 0, %s57
    %s59 = sphi 0, %s57
    %s60 = sphi 0, %s59
    %s74 = sphi 0, %s60
    %s78 = sphi 0, %s78
    %s80 = sphi 0, %s78
    %s81 = sphi 0, %s80
    %s95 = sphi 0, %s81
    %s103 = sphi 0, %s105
    %s106 = sphi 0, %s103
    %s107 = sphi 0, %s106
    %s123 = sphi 0, %s107
  $region4: #{tatt_forward.3} parent=0 // loop_header_branch
    %12 = sbr.rel (%p10) target = $region8
  $region5: #{tatt_forward.3} parent=0 // loop_body
    %s14 = ssub.s32 %s9, 1
    %s15 = ssub.s32 %s9, 2
    %s22 = sadd.s32 1, %s17
    %p23 = scmp.ge.s32.totalorder %s22, 1
    %s24 = scalar_select %p23, 0, %s22
    %s25 = sadd.s32 1, %s16
    %s26 = scalar_select %p23, %s25, %s16
    %p27 = scmp.ge.s32.totalorder %s26, 2
    %s28 = scalar_select %p27, 0, %s26
    %s29 = ssub.s32 %s16, %s28
    %s30 = ssub.s32 %s17, %s24
    %s31 = sor.u32 %s29, %s30
    %p32 = scmp.eq.s32.totalorder %s31, 0
    %s34 = sadd.s32 %s33, 1
    %s35 = scalar_select %p32, %s33, %s34
    %p38 = pneg %p32
    %p39 = scmp.eq.s32.totalorder %s9, 1
    %p40 = por %p38, %p39
    %p41 = scmp.ne.s32.totalorder %s33, %s36
    %p42 = scmp.eq.s32.totalorder %s9, 0
    %p43 = por %p41, %p42
    %p44 = scmp.ne.s32.totalorder %s33, %s36
    %p45 = scmp.eq.s32.totalorder %s14, 1
    %p46 = por %p44, %p45
    %p47 = scmp.ne.s32.totalorder %s36, %s37
    %p48 = scmp.eq.s32.totalorder %s14, 0
    %p49 = por %p47, %p48
    %p50 = scmp.ne.s32.totalorder %s36, %s37
    %p51 = scmp.eq.s32.totalorder %s15, 1
    %p52 = por %p50, %p51
    %p54 = scmp.ne.s32.totalorder %s37, %s53
    %p55 = scmp.eq.s32.totalorder %s15, 0
    %p56 = por %p54, %p55
    %s58 = sadd.s32 %s57, 1
    %p61 = scmp.eq.s32.totalorder %s9, 1
    %p62 = scmp.ne.s32.totalorder %s57, %s59
    %p63 = scmp.eq.s32.totalorder %s9, 0
    %p64 = por %p62, %p63
    %p65 = scmp.ne.s32.totalorder %s57, %s59
    %p66 = scmp.eq.s32.totalorder %s14, 1
    %p67 = por %p65, %p66
    %p68 = scmp.ne.s32.totalorder %s59, %s60
    %p69 = scmp.eq.s32.totalorder %s14, 0
    %p70 = por %p68, %p69
    %p71 = scmp.ne.s32.totalorder %s59, %s60
    %p72 = scmp.eq.s32.totalorder %s15, 1
    %p73 = por %p71, %p72
    %p75 = scmp.ne.s32.totalorder %s60, %s74
    %p76 = scmp.eq.s32.totalorder %s15, 0
    %p77 = por %p75, %p76
    %s79 = sadd.s32 %s78, 1
    %p82 = scmp.eq.s32.totalorder %s9, 1
    %p83 = scmp.ne.s32.totalorder %s78, %s80
    %p84 = scmp.eq.s32.totalorder %s9, 0
    %p85 = por %p83, %p84
    %p86 = scmp.ne.s32.totalorder %s78, %s80
    %p87 = scmp.eq.s32.totalorder %s14, 1
    %p88 = por %p86, %p87
    %p89 = scmp.ne.s32.totalorder %s80, %s81
    %p90 = scmp.eq.s32.totalorder %s14, 0
    %p91 = por %p89, %p90
    %p92 = scmp.ne.s32.totalorder %s80, %s81
    %p93 = scmp.eq.s32.totalorder %s15, 1
    %p94 = por %p92, %p93
    %p96 = scmp.ne.s32.totalorder %s81, %s95
    %p97 = scmp.eq.s32.totalorder %s15, 0
    %p98 = por %p96, %p97
    %s99 = ssub.s32 %s16, %s28
    %s100 = ssub.s32 %s17, %s24
    %s101 = sor.u32 %s99, %s100
    %p102 = scmp.eq.s32.totalorder %s101, 0
    %s104 = sadd.s32 %s103, 1
    %s105 = scalar_select %p102, %s103, %s104
    %p108 = pneg %p102
    %p109 = scmp.eq.s32.totalorder %s9, 1
    %p110 = por %p108, %p109
    %p111 = scmp.ne.s32.totalorder %s103, %s106
    %p112 = scmp.eq.s32.totalorder %s9, 0
    %p113 = por %p111, %p112
    %p114 = scmp.ne.s32.totalorder %s103, %s106
    %p115 = scmp.eq.s32.totalorder %s14, 1
    %p116 = por %p114, %p115
    %p117 = scmp.ne.s32.totalorder %s106, %s107
    %p118 = scmp.eq.s32.totalorder %s14, 0
    %p119 = por %p117, %p118
    %p120 = scmp.ne.s32.totalorder %s106, %s107
    %p121 = scmp.eq.s32.totalorder %s15, 1
    %p122 = por %p120, %p121
    %p124 = scmp.ne.s32.totalorder %s107, %s123
    %p125 = scmp.eq.s32.totalorder %s15, 0
    %p126 = por %p124, %p125
    %p127 = scmp.le.s32.totalorder 1, %s9
    %p128 = scmp.lt.s32.totalorder %s9, 3
    %p129 = pnand %p127, %p128
    %p130 = pneg %p129
    // Predicated region
    $region9: #{tatt_forward.3} parent=5 // pred_check
      _
    $region10: #{tatt_forward.3} parent=5 // pred_check_branch
      %132 = sbr.rel (%p129) target = $region12
    $region11: #{tatt_forward.3} parent=5 // pred_region
      %s133 = ssub.s32 %s9, 1
      // Predicated region
      $region13: #{tatt_forward.3} parent=11 // pred_check
        %p134 = pneg %p70
      $region14: #{tatt_forward.3} parent=11 // pred_check_branch
        %136 = sbr.rel (%p134) target = $region16
      $region15: #{tatt_forward.3} parent=11 // pred_region
        _
      $region16: #{tatt_forward.3} parent=11 // pred_fallthru
        _
      // Predicated region
      $region17: #{tatt_forward.3} parent=11 // pred_check
        %p137 = pneg %p91
      $region18: #{tatt_forward.3} parent=11 // pred_check_branch
        %139 = sbr.rel (%p137) target = $region20
      $region19: #{tatt_forward.3} parent=11 // pred_region
        _
      $region20: #{tatt_forward.3} parent=11 // pred_fallthru
        _
    $region12: #{tatt_forward.3} parent=5 // pred_fallthru
      _
    %p140 = scmp.lt.s32.totalorder %s9, 2
    // Predicated region
    $region21: #{tatt_forward.3} parent=5 // pred_check
      %p141 = pneg %p140
    $region22: #{tatt_forward.3} parent=5 // pred_check_branch
      %143 = sbr.rel (%p141) target = $region24
    $region23: #{tatt_forward.3} parent=5 // pred_region
      // Predicated region
      $region25: #{tatt_forward.3} parent=23 // pred_check
        %p144 = pneg %p43
      $region26: #{tatt_forward.3} parent=23 // pred_check_branch
        %146 = sbr.rel (%p144) target = $region28
      $region27: #{tatt_forward.3} parent=23 // pred_region
        %p147 = scmp.lt.s32.totalorder %s16, 1
        %s148 = scalar_select %p147, %s16, 1
        %p149 = scmp.lt.s32.totalorder %s17, 0
        %s150 = scalar_select %p149, %s17, 0
        %s151 = sadd.s32 %s150, %s148
        %s152 = smul.addr %s151, 8
        %s153 = scalar_lea.vmem %s0, %s152
      $region28: #{tatt_forward.3} parent=23 // pred_fallthru
        _
    $region24: #{tatt_forward.3} parent=5 // pred_fallthru
      _
    %p154 = scmp.le.s32.totalorder 1, %s9
    %p155 = scmp.lt.s32.totalorder %s9, 3
    %p156 = pnand %p154, %p155
    %p157 = pneg %p156
    // Predicated region
    $region29: #{tatt_forward.3} parent=5 // pred_check
      _
    $region30: #{tatt_forward.3} parent=5 // pred_check_branch
      %159 = sbr.rel (%p156) target = $region32
    $region31: #{tatt_forward.3} parent=5 // pred_region
      %s160 = ssub.s32 %s9, 1
      %p161 = scmp.lt.s32.totalorder %s18, 1
      %s162 = scalar_select %p161, %s18, 1
      %p163 = scmp.lt.s32.totalorder %s19, 0
      %s164 = scalar_select %p163, %s19, 0
      %s165 = sadd.s32 %s164, %s162
      %s166 = smul.addr %s165, 8
      %s167 = scalar_lea.vmem %s0, %s166
      %p168 = pneg %p49
      %p169 = pneg %p46
      %p170 = pneg %p70
      %p171 = pneg %p67
      %p172 = pneg %p91
      %p173 = pneg %p88
      %p174 = pneg %p119
      %p175 = pneg %p116
      %p176 = scmp.lt.s32.totalorder %s18, 1
      %s177 = scalar_select %p176, %s18, 1
      %p178 = scmp.lt.s32.totalorder %s19, 0
      %s179 = scalar_select %p178, %s19, 0
      %s180 = smul.addr %s177, 3
      %s181 = sadd.s32 %s179, %s180
      %s182 = smul.addr %s181, 8
      %s183 = scalar_lea.vmem %s3, %s182
      %p184 = scmp.lt.s32.totalorder %s18, 1
      %s185 = scalar_select %p184, %s18, 1
      %p186 = scmp.lt.s32.totalorder %s19, 0
      %s187 = scalar_select %p186, %s19, 0
      %s188 = sadd.s32 %s187, %s185
      %s189 = smul.addr %s188, 8
      %s190 = scalar_lea.vmem %s0, %s189
      %p191 = scmp.lt.s32.totalorder %s18, 1
      %s192 = scalar_select %p191, %s18, 1
      %p193 = scmp.lt.s32.totalorder %s19, 0
      %s194 = scalar_select %p193, %s19, 0
      %s195 = smul.addr %s192, 3
      %s196 = sadd.s32 %s194, %s195
      %s197 = smul.addr %s196, 8
      %s198 = scalar_lea.vmem %s3, %s197
      %v199 = vld [vmem:[%s1] sm:$0xff]
      %v200 = vld [vmem:[%s1 + $0x8] sm:$0xff]
      %v201 = vld [vmem:[%s1 + $0x10] sm:$0xff]
      %v202 = vld [vmem:[%s190] sm:$0xff]
      %v203 = vld [vmem:[%s2] sm:$0xff]
      %v204 = vld [vmem:[%s2 + $0x8] sm:$0xff]
      %v205 = vld [vmem:[%s2 + $0x10] sm:$0xff]
      %207 = vset.pattern.permute.xlu0 0
      %208 = vperm.xlu0 %207, %v203
      %v209 = vpop.permute.xlu0 %208
      %212 = vset.pattern.permute.xlu0 0
      %213 = vperm.xlu0 %212, %v204
      %v214 = vpop.permute.xlu0 %213
      %217 = vset.pattern.permute.xlu0 0
      %218 = vperm.xlu0 %217, %v205
      %v219 = vpop.permute.xlu0 %218
      %vm221 = vcmask 64512
      %v223 = vsel %vm221, %v199, 0
      %v226 = vsel %vm221, %v200, 0
      %v229 = vsel %vm221, %v201, 0
      %231 = vmatprep.subr.mxu0 0.0
      %232 = vmatpush1.msra.mxu0 %v202
      %233 = vmatprep.subr.mxu0 0.0
      %234 = vmatpush1.msra.mxu0 0.0
      %235 = vmatprep.subr.mxu0 0.0
      %236 = vmatpush1.msra.mxu0 0.0
      %237 = vmatprep.subr.mxu0 0.0
      %238 = vmatpush1.msra.mxu0 0.0
      %239 = vmatprep.subr.mxu0 0.0
      %240 = vmatpush1.msra.mxu0 0.0
      %241 = vmatprep.subr.mxu0 0.0
      %242 = vmatpush1.msra.mxu0 0.0
      %243 = vmatprep.subr.mxu0 0.0
      %244 = vmatpush1.msra.mxu0 0.0
      %245 = vmatprep.subr.mxu0 0.0
      %246 = vmatpush1.msra.mxu0 0.0
      %247 = vmatprep.subr.mxu0 0.0
      %248 = vmatpush1.msra.mxu0 0.0
      %249 = vmatprep.subr.mxu0 0.0
      %250 = vmatpush1.msra.mxu0 0.0
      %251 = vmatprep.subr.mxu0 0.0
      %252 = vmatpush1.msra.mxu0 0.0
      %253 = vmatprep.subr.mxu0 0.0
      %254 = vmatpush1.msra.mxu0 0.0
      %255 = vmatprep.subr.mxu0 0.0
      %256 = vmatpush1.msra.mxu0 0.0
      %257 = vmatprep.subr.mxu0 0.0
      %258 = vmatpush1.msra.mxu0 0.0
      %259 = vmatprep.subr.mxu0 0.0
      %260 = vmatpush1.msra.mxu0 0.0
      %261 = vmatprep.subr.mxu0 0.0
      %262 = vmatpush1.msra.mxu0 0.0
      %263 = vmatprep.subr.mxu0 0.0
      %264 = vmatpush1.msra.mxu0 0.0
      %265 = vmatprep.subr.mxu0 0.0
      %266 = vmatpush1.msra.mxu0 0.0
      %267 = vmatprep.subr.mxu0 0.0
      %268 = vmatpush1.msra.mxu0 0.0
      %269 = vmatprep.subr.mxu0 0.0
      %270 = vmatpush1.msra.mxu0 0.0
      %271 = vmatprep.subr.mxu0 0.0
      %272 = vmatpush1.msra.mxu0 0.0
      %273 = vmatprep.subr.mxu0 0.0
      %274 = vmatpush1.msra.mxu0 0.0
      %275 = vmatprep.subr.mxu0 0.0
      %276 = vmatpush1.msra.mxu0 0.0
      %277 = vmatprep.subr.mxu0 0.0
      %278 = vmatpush1.msra.mxu0 0.0
      %279 = vmatprep.subr.mxu0 0.0
      %280 = vmatpush1.msra.mxu0 0.0
      %281 = vmatprep.subr.mxu0 0.0
      %282 = vmatpush1.msra.mxu0 0.0
      %283 = vmatprep.subr.mxu0 0.0
      %284 = vmatpush1.msra.mxu0 0.0
      %285 = vmatprep.subr.mxu0 0.0
      %286 = vmatpush1.msra.mxu0 0.0
      %287 = vmatprep.subr.mxu0 0.0
      %288 = vmatpush1.msra.mxu0 0.0
      %289 = vmatprep.subr.mxu0 0.0
      %290 = vmatpush1.msra.mxu0 0.0
      %291 = vmatprep.subr.mxu0 0.0
      %292 = vmatpush1.msra.mxu0 0.0
      %293 = vmatprep.subr.mxu0 0.0
      %294 = vmatpush1.msra.mxu0 0.0
      %295 = vmatprep.mubr.f32.mxu0 0.0
      %296 = vmatmul.mubr.f32.gmra.mrb[0].mxu0 %v223
      %v297 = vpop.f32.mrb[0].mxu0
      %v298 = vadd.f32 %v209, %v297
      %v299 = vpop.f32.mrb[0].mxu0
      %300 = vmatprep.mubr.f32.mxu0 0.0
      %301 = vmatmul.mubr.f32.gmra.mrb[0].mxu0 %v226
      %v302 = vpop.f32.mrb[0].mxu0
      %v303 = vadd.f32 %v214, %v302
      %v304 = vpop.f32.mrb[0].mxu0
      %305 = vmatprep.mubr.f32.mxu0 0.0
      %306 = vmatmul.mubr.f32.gmra.mrb[0].mxu0 %v229
      %v307 = vpop.f32.mrb[0].mxu0
      %v308 = vadd.f32 %v219, %v307
      %v309 = vpop.f32.mrb[0].mxu0
      %310 = vdwg.mxu0
      %311 = vst [vmem:[%s198] sm:$0xff] %v298
      %312 = vst [vmem:[%s198 + $0x8] sm:$0xff] %v303
      %313 = vst [vmem:[%s198 + $0x10] sm:$0xff] %v308
      %p314 = scmp.lt.s32.totalorder %s18, 1
      %s315 = scalar_select %p314, %s18, 1
      %p316 = scmp.lt.s32.totalorder %s19, 0
      %s317 = scalar_select %p316, %s19, 0
      %s318 = smul.addr %s315, 3
      %s319 = sadd.s32 %s317, %s318
      %s320 = smul.addr %s319, 8
      %s321 = scalar_lea.vmem %s3, %s320
      // Predicated region
      $region33: #{tatt_forward.3} parent=31 // pred_check
        %p322 = pneg %p116
      $region34: #{tatt_forward.3} parent=31 // pred_check_branch
        %324 = sbr.rel (%p322) target = $region36
      $region35: #{tatt_forward.3} parent=31 // pred_region
        _
      $region36: #{tatt_forward.3} parent=31 // pred_fallthru
        _
    $region32: #{tatt_forward.3} parent=5 // pred_fallthru
      _
    %p325 = scmp.le.s32.totalorder 2, %s9
    // Predicated region
    $region37: #{tatt_forward.3} parent=5 // pred_check
      %p326 = pneg %p325
    $region38: #{tatt_forward.3} parent=5 // pred_check_branch
      %328 = sbr.rel (%p326) target = $region40
    $region39: #{tatt_forward.3} parent=5 // pred_region
      %s329 = ssub.s32 %s9, 2
      // Predicated region
      $region41: #{tatt_forward.3} parent=39 // pred_check
        %p330 = pneg %p122
      $region42: #{tatt_forward.3} parent=39 // pred_check_branch
        %332 = sbr.rel (%p330) target = $region44
      $region43: #{tatt_forward.3} parent=39 // pred_region
        %p333 = scmp.lt.s32.totalorder %s20, 1
        %s334 = scalar_select %p333, %s20, 1
        %p335 = scmp.lt.s32.totalorder %s21, 0
        %s336 = scalar_select %p335, %s21, 0
        %s337 = smul.addr %s334, 3
        %s338 = sadd.s32 %s336, %s337
        %s339 = smul.addr %s338, 8
        %s340 = scalar_lea.vmem %s3, %s339
      $region44: #{tatt_forward.3} parent=39 // pred_fallthru
        _
    $region40: #{tatt_forward.3} parent=5 // pred_fallthru
      _
  $region6: #{tatt_forward.3} parent=0 // loop_footer
    %s13 = sadd.s32 1, %s9
  $region7: #{tatt_forward.3} parent=0 // loop_footer_branch
    %8 = sbr.rel target = $region3
  $region8: #{tatt_forward.3} parent=0 // loop_exit
    _

// kernel: tatt_forward.5
$region0: #{tatt_forward.5}
  #allocation0 [shape = 'u32[]', space=smem, size = 0x4, offset = 0x4, fixed_abs, tag = 'smem constant byte address 0x4 - core index']
  #allocation1 [shape = 'u32[144,128]{1,0:T(1,128)}', space=vmem, size = 0x12000, scoped, tag = 'internal scratch']
  %s0 = inlined_call_operand.vmem [shape: f32[2,8,128], index: 0, kind: input, shape index: {}]
  %s1 = inlined_call_operand.vmem [shape: f32[8,8], index: 1, kind: input, shape index: {}]
  %s2 = inlined_call_operand.vmem [shape: f32[8,1], index: 2, kind: input, shape index: {}]
  %s3 = inlined_call_operand.vmem [shape: f32[2,8,128], index: 3, kind: output, shape index: {}]
  %s4 = sld [smem:[#allocation0]]
  $region45: #{tatt_forward.5} parent=0
    _
  %s6 = ssub.s32 1, %s4
  %s7 = scalar_select 0, %s6, %s4
  loop: start=0, step=1, limit=4
  $region2: #{tatt_forward.5} parent=0 // loop_pre_header
    _
  $region3: #{tatt_forward.5} parent=0 // loop_header
    %s9 = sphi 0, %s13
    %p10 = scmp.ge.s32.totalorder %s9, 4
    %s16 = sphi 0, %s28
    %s17 = sphi 0, %s24
    %s18 = sphi 0, %s16
    %s19 = sphi 0, %s17
    %s20 = sphi 0, %s18
    %s21 = sphi 0, %s19
    %s33 = sphi 0, %s35
    %s36 = sphi 0, %s33
    %s37 = sphi 0, %s36
    %s53 = sphi 0, %s37
    %s57 = sphi 0, %s57
    %s59 = sphi 0, %s57
    %s60 = sphi 0, %s59
    %s74 = sphi 0, %s60
    %s78 = sphi 0, %s78
    %s80 = sphi 0, %s78
    %s81 = sphi 0, %s80
    %s95 = sphi 0, %s81
    %s103 = sphi 0, %s105
    %s106 = sphi 0, %s103
    %s107 = sphi 0, %s106
    %s123 = sphi 0, %s107
  $region4: #{tatt_forward.5} parent=0 // loop_header_branch
    %12 = sbr.rel (%p10) target = $region8
  $region5: #{tatt_forward.5} parent=0 // loop_body
    %s14 = ssub.s32 %s9, 1
    %s15 = ssub.s32 %s9, 2
    %s22 = sadd.s32 1, %s17
    %p23 = scmp.ge.s32.totalorder %s22, 1
    %s24 = scalar_select %p23, 0, %s22
    %s25 = sadd.s32 1, %s16
    %s26 = scalar_select %p23, %s25, %s16
    %p27 = scmp.ge.s32.totalorder %s26, 2
    %s28 = scalar_select %p27, 0, %s26
    %s29 = ssub.s32 %s16, %s28
    %s30 = ssub.s32 %s17, %s24
    %s31 = sor.u32 %s29, %s30
    %p32 = scmp.eq.s32.totalorder %s31, 0
    %s34 = sadd.s32 %s33, 1
    %s35 = scalar_select %p32, %s33, %s34
    %p38 = pneg %p32
    %p39 = scmp.eq.s32.totalorder %s9, 1
    %p40 = por %p38, %p39
    %p41 = scmp.ne.s32.totalorder %s33, %s36
    %p42 = scmp.eq.s32.totalorder %s9, 0
    %p43 = por %p41, %p42
    %p44 = scmp.ne.s32.totalorder %s33, %s36
    %p45 = scmp.eq.s32.totalorder %s14, 1
    %p46 = por %p44, %p45
    %p47 = scmp.ne.s32.totalorder %s36, %s37
    %p48 = scmp.eq.s32.totalorder %s14, 0
    %p49 = por %p47, %p48
    %p50 = scmp.ne.s32.totalorder %s36, %s37
    %p51 = scmp.eq.s32.totalorder %s15, 1
    %p52 = por %p50, %p51
    %p54 = scmp.ne.s32.totalorder %s37, %s53
    %p55 = scmp.eq.s32.totalorder %s15, 0
    %p56 = por %p54, %p55
    %s58 = sadd.s32 %s57, 1
    %p61 = scmp.eq.s32.totalorder %s9, 1
    %p62 = scmp.ne.s32.totalorder %s57, %s59
    %p63 = scmp.eq.s32.totalorder %s9, 0
    %p64 = por %p62, %p63
    %p65 = scmp.ne.s32.totalorder %s57, %s59
    %p66 = scmp.eq.s32.totalorder %s14, 1
    %p67 = por %p65, %p66
    %p68 = scmp.ne.s32.totalorder %s59, %s60
    %p69 = scmp.eq.s32.totalorder %s14, 0
    %p70 = por %p68, %p69
    %p71 = scmp.ne.s32.totalorder %s59, %s60
    %p72 = scmp.eq.s32.totalorder %s15, 1
    %p73 = por %p71, %p72
    %p75 = scmp.ne.s32.totalorder %s60, %s74
    %p76 = scmp.eq.s32.totalorder %s15, 0
    %p77 = por %p75, %p76
    %s79 = sadd.s32 %s78, 1
    %p82 = scmp.eq.s32.totalorder %s9, 1
    %p83 = scmp.ne.s32.totalorder %s78, %s80
    %p84 = scmp.eq.s32.totalorder %s9, 0
    %p85 = por %p83, %p84
    %p86 = scmp.ne.s32.totalorder %s78, %s80
    %p87 = scmp.eq.s32.totalorder %s14, 1
    %p88 = por %p86, %p87
    %p89 = scmp.ne.s32.totalorder %s80, %s81
    %p90 = scmp.eq.s32.totalorder %s14, 0
    %p91 = por %p89, %p90
    %p92 = scmp.ne.s32.totalorder %s80, %s81
    %p93 = scmp.eq.s32.totalorder %s15, 1
    %p94 = por %p92, %p93
    %p96 = scmp.ne.s32.totalorder %s81, %s95
    %p97 = scmp.eq.s32.totalorder %s15, 0
    %p98 = por %p96, %p97
    %s99 = ssub.s32 %s16, %s28
    %s100 = ssub.s32 %s17, %s24
    %s101 = sor.u32 %s99, %s100
    %p102 = scmp.eq.s32.totalorder %s101, 0
    %s104 = sadd.s32 %s103, 1
    %s105 = scalar_select %p102, %s103, %s104
    %p108 = pneg %p102
    %p109 = scmp.eq.s32.totalorder %s9, 1
    %p110 = por %p108, %p109
    %p111 = scmp.ne.s32.totalorder %s103, %s106
    %p112 = scmp.eq.s32.totalorder %s9, 0
    %p113 = por %p111, %p112
    %p114 = scmp.ne.s32.totalorder %s103, %s106
    %p115 = scmp.eq.s32.totalorder %s14, 1
    %p116 = por %p114, %p115
    %p117 = scmp.ne.s32.totalorder %s106, %s107
    %p118 = scmp.eq.s32.totalorder %s14, 0
    %p119 = por %p117, %p118
    %p120 = scmp.ne.s32.totalorder %s106, %s107
    %p121 = scmp.eq.s32.totalorder %s15, 1
    %p122 = por %p120, %p121
    %p124 = scmp.ne.s32.totalorder %s107, %s123
    %p125 = scmp.eq.s32.totalorder %s15, 0
    %p126 = por %p124, %p125
    %p127 = scmp.le.s32.totalorder 1, %s9
    %p128 = scmp.lt.s32.totalorder %s9, 3
    %p129 = pnand %p127, %p128
    %p130 = pneg %p129
    // Predicated region
    $region9: #{tatt_forward.5} parent=5 // pred_check
      _
    $region10: #{tatt_forward.5} parent=5 // pred_check_branch
      %132 = sbr.rel (%p129) target = $region12
    $region11: #{tatt_forward.5} parent=5 // pred_region
      %s133 = ssub.s32 %s9, 1
      // Predicated region
      $region13: #{tatt_forward.5} parent=11 // pred_check
        %p134 = pneg %p70
      $region14: #{tatt_forward.5} parent=11 // pred_check_branch
        %136 = sbr.rel (%p134) target = $region16
      $region15: #{tatt_forward.5} parent=11 // pred_region
        _
      $region16: #{tatt_forward.5} parent=11 // pred_fallthru
        _
      // Predicated region
      $region17: #{tatt_forward.5} parent=11 // pred_check
        %p137 = pneg %p91
      $region18: #{tatt_forward.5} parent=11 // pred_check_branch
        %139 = sbr.rel (%p137) target = $region20
      $region19: #{tatt_forward.5} parent=11 // pred_region
        _
      $region20: #{tatt_forward.5} parent=11 // pred_fallthru
        _
    $region12: #{tatt_forward.5} parent=5 // pred_fallthru
      _
    %p140 = scmp.lt.s32.totalorder %s9, 2
    // Predicated region
    $region21: #{tatt_forward.5} parent=5 // pred_check
      %p141 = pneg %p140
    $region22: #{tatt_forward.5} parent=5 // pred_check_branch
      %143 = sbr.rel (%p141) target = $region24
    $region23: #{tatt_forward.5} parent=5 // pred_region
      // Predicated region
      $region25: #{tatt_forward.5} parent=23 // pred_check
        %p144 = pneg %p43
      $region26: #{tatt_forward.5} parent=23 // pred_check_branch
        %146 = sbr.rel (%p144) target = $region28
      $region27: #{tatt_forward.5} parent=23 // pred_region
        %p147 = scmp.lt.s32.totalorder %s16, 1
        %s148 = scalar_select %p147, %s16, 1
        %p149 = scmp.lt.s32.totalorder %s17, 0
        %s150 = scalar_select %p149, %s17, 0
        %s151 = sadd.s32 %s150, %s148
        %s152 = smul.addr %s151, 8
        %s153 = scalar_lea.vmem %s0, %s152
      $region28: #{tatt_forward.5} parent=23 // pred_fallthru
        _
    $region24: #{tatt_forward.5} parent=5 // pred_fallthru
      _
    %p154 = scmp.le.s32.totalorder 1, %s9
    %p155 = scmp.lt.s32.totalorder %s9, 3
    %p156 = pnand %p154, %p155
    %p157 = pneg %p156
    // Predicated region
    $region29: #{tatt_forward.5} parent=5 // pred_check
      _
    $region30: #{tatt_forward.5} parent=5 // pred_check_branch
      %159 = sbr.rel (%p156) target = $region32
    $region31: #{tatt_forward.5} parent=5 // pred_region
      %s160 = ssub.s32 %s9, 1
      %p161 = scmp.lt.s32.totalorder %s18, 1
      %s162 = scalar_select %p161, %s18, 1
      %p163 = scmp.lt.s32.totalorder %s19, 0
      %s164 = scalar_select %p163, %s19, 0
      %s165 = sadd.s32 %s164, %s162
      %s166 = smul.addr %s165, 8
      %s167 = scalar_lea.vmem %s0, %s166
      %p168 = pneg %p49
      %p169 = pneg %p46
      %p170 = pneg %p70
      %p171 = pneg %p67
      %p172 = pneg %p91
      %p173 = pneg %p88
      %p174 = pneg %p119
      %p175 = pneg %p116
      %p176 = scmp.lt.s32.totalorder %s18, 1
      %s177 = scalar_select %p176, %s18, 1
      %p178 = scmp.lt.s32.totalorder %s19, 0
      %s179 = scalar_select %p178, %s19, 0
      %s180 = sadd.s32 %s179, %s177
      %s181 = smul.addr %s180, 8
      %s182 = scalar_lea.vmem %s3, %s181
      %p183 = scmp.lt.s32.totalorder %s18, 1
      %s184 = scalar_select %p183, %s18, 1
      %p185 = scmp.lt.s32.totalorder %s19, 0
      %s186 = scalar_select %p185, %s19, 0
      %s187 = sadd.s32 %s186, %s184
      %s188 = smul.addr %s187, 8
      %s189 = scalar_lea.vmem %s0, %s188
      %p190 = scmp.lt.s32.totalorder %s18, 1
      %s191 = scalar_select %p190, %s18, 1
      %p192 = scmp.lt.s32.totalorder %s19, 0
      %s193 = scalar_select %p192, %s19, 0
      %s194 = sadd.s32 %s193, %s191
      %s195 = smul.addr %s194, 8
      %s196 = scalar_lea.vmem %s3, %s195
      %v197 = vld [vmem:[%s1] sm:$0xff]
      %v198 = vld [vmem:[%s189] sm:$0xff]
      %v199 = vld [vmem:[%s2] sm:$0xff]
      %201 = vset.pattern.permute.xlu0 0
      %202 = vperm.xlu0 %201, %v199
      %v203 = vpop.permute.xlu0 %202
      %vm205 = vcmask 64512
      %v207 = vsel %vm205, %v197, 0
      %209 = vmatprep.subr.mxu0 0.0
      %210 = vmatpush1.msra.mxu0 %v198
      %211 = vmatprep.subr.mxu0 0.0
      %212 = vmatpush1.msra.mxu0 0.0
      %213 = vmatprep.subr.mxu0 0.0
      %214 = vmatpush1.msra.mxu0 0.0
      %215 = vmatprep.subr.mxu0 0.0
      %216 = vmatpush1.msra.mxu0 0.0
      %217 = vmatprep.subr.mxu0 0.0
      %218 = vmatpush1.msra.mxu0 0.0
      %219 = vmatprep.subr.mxu0 0.0
      %220 = vmatpush1.msra.mxu0 0.0
      %221 = vmatprep.subr.mxu0 0.0
      %222 = vmatpush1.msra.mxu0 0.0
      %223 = vmatprep.subr.mxu0 0.0
      %224 = vmatpush1.msra.mxu0 0.0
      %225 = vmatprep.subr.mxu0 0.0
      %226 = vmatpush1.msra.mxu0 0.0
      %227 = vmatprep.subr.mxu0 0.0
      %228 = vmatpush1.msra.mxu0 0.0
      %229 = vmatprep.subr.mxu0 0.0
      %230 = vmatpush1.msra.mxu0 0.0
      %231 = vmatprep.subr.mxu0 0.0
      %232 = vmatpush1.msra.mxu0 0.0
      %233 = vmatprep.subr.mxu0 0.0
      %234 = vmatpush1.msra.mxu0 0.0
      %235 = vmatprep.subr.mxu0 0.0
      %236 = vmatpush1.msra.mxu0 0.0
      %237 = vmatprep.subr.mxu0 0.0
      %238 = vmatpush1.msra.mxu0 0.0
      %239 = vmatprep.subr.mxu0 0.0
      %240 = vmatpush1.msra.mxu0 0.0
      %241 = vmatprep.subr.mxu0 0.0
      %242 = vmatpush1.msra.mxu0 0.0
      %243 = vmatprep.subr.mxu0 0.0
      %244 = vmatpush1.msra.mxu0 0.0
      %245 = vmatprep.subr.mxu0 0.0
      %246 = vmatpush1.msra.mxu0 0.0
      %247 = vmatprep.subr.mxu0 0.0
      %248 = vmatpush1.msra.mxu0 0.0
      %249 = vmatprep.subr.mxu0 0.0
      %250 = vmatpush1.msra.mxu0 0.0
      %251 = vmatprep.subr.mxu0 0.0
      %252 = vmatpush1.msra.mxu0 0.0
      %253 = vmatprep.subr.mxu0 0.0
      %254 = vmatpush1.msra.mxu0 0.0
      %255 = vmatprep.subr.mxu0 0.0
      %256 = vmatpush1.msra.mxu0 0.0
      %257 = vmatprep.subr.mxu0 0.0
      %258 = vmatpush1.msra.mxu0 0.0
      %259 = vmatprep.subr.mxu0 0.0
      %260 = vmatpush1.msra.mxu0 0.0
      %261 = vmatprep.subr.mxu0 0.0
      %262 = vmatpush1.msra.mxu0 0.0
      %263 = vmatprep.subr.mxu0 0.0
      %264 = vmatpush1.msra.mxu0 0.0
      %265 = vmatprep.subr.mxu0 0.0
      %266 = vmatpush1.msra.mxu0 0.0
      %267 = vmatprep.subr.mxu0 0.0
      %268 = vmatpush1.msra.mxu0 0.0
      %269 = vmatprep.subr.mxu0 0.0
      %270 = vmatpush1.msra.mxu0 0.0
      %271 = vmatprep.subr.mxu0 0.0
      %272 = vmatpush1.msra.mxu0 0.0
      %273 = vmatprep.mubr.f32.mxu0 0.0
      %274 = vmatmul.mubr.f32.gmra.mrb[0].mxu0 %v207
      %v275 = vpop.f32.mrb[0].mxu0
      %v276 = vadd.f32 %v203, %v275
      %v277 = vpop.f32.mrb[0].mxu0
      %278 = vdwg.mxu0
      %v279 = vmax.f32 %v276, 0.0
      %280 = vst [vmem:[%s196] sm:$0xff] %v279
      %p281 = scmp.lt.s32.totalorder %s18, 1
      %s282 = scalar_select %p281, %s18, 1
      %p283 = scmp.lt.s32.totalorder %s19, 0
      %s284 = scalar_select %p283, %s19, 0
      %s285 = sadd.s32 %s284, %s282
      %s286 = smul.addr %s285, 8
      %s287 = scalar_lea.vmem %s3, %s286
      // Predicated region
      $region33: #{tatt_forward.5} parent=31 // pred_check
        %p288 = pneg %p116
      $region34: #{tatt_forward.5} parent=31 // pred_check_branch
        %290 = sbr.rel (%p288) target = $region36
      $region35: #{tatt_forward.5} parent=31 // pred_region
        _
      $region36: #{tatt_forward.5} parent=31 // pred_fallthru
        _
    $region32: #{tatt_forward.5} parent=5 // pred_fallthru
      _
    %p291 = scmp.le.s32.totalorder 2, %s9
    // Predicated region
    $region37: #{tatt_forward.5} parent=5 // pred_check
      %p292 = pneg %p291
    $region38: #{tatt_forward.5} parent=5 // pred_check_branch
      %294 = sbr.rel (%p292) target = $region40
    $region39: #{tatt_forward.5} parent=5 // pred_region
      %s295 = ssub.s32 %s9, 2
      // Predicated region
      $region41: #{tatt_forward.5} parent=39 // pred_check
        %p296 = pneg %p122
      $region42: #{tatt_forward.5} parent=39 // pred_check_branch
        %298 = sbr.rel (%p296) target = $region44
      $region43: #{tatt_forward.5} parent=39 // pred_region
        %p299 = scmp.lt.s32.totalorder %s20, 1
        %s300 = scalar_select %p299, %s20, 1
        %p301 = scmp.lt.s32.totalorder %s21, 0
        %s302 = scalar_select %p301, %s21, 0
        %s303 = sadd.s32 %s302, %s300
        %s304 = smul.addr %s303, 8
        %s305 = scalar_lea.vmem %s3, %s304
      $region44: #{tatt_forward.5} parent=39 // pred_fallthru
        _
    $region40: #{tatt_forward.5} parent=5 // pred_fallthru
      _
  $region6: #{tatt_forward.5} parent=0 // loop_footer
    %s13 = sadd.s32 1, %s9
  $region7: #{tatt_forward.5} parent=0 // loop_footer_branch
    %8 = sbr.rel target = $region3
  $region8: #{tatt_forward.5} parent=0 // loop_exit
    _

// kernel: tatt_forward.4
$region0: #{tatt_forward.4}
  #allocation0 [shape = 'u32[]', space=smem, size = 0x4, offset = 0x4, fixed_abs, tag = 'smem constant byte address 0x4 - core index']
  #allocation1 [shape = 'u32[144,128]{1,0:T(1,128)}', space=vmem, size = 0x12000, scoped, tag = 'internal scratch']
  %s0 = inlined_call_operand.vmem [shape: f32[16,10,4], index: 0, kind: input, shape index: {}]
  %s1 = inlined_call_operand.vmem [shape: f32[16,10,4], index: 1, kind: input, shape index: {}]
  %s2 = inlined_call_operand.vmem [shape: f32[16,10,4], index: 2, kind: input, shape index: {}]
  %s3 = inlined_call_operand.vmem [shape: f32[16,10,4], index: 3, kind: output, shape index: {}]
  %s4 = sld [smem:[#allocation0]]
  $region22: #{tatt_forward.4} parent=0
    _
  %s6 = ssub.s32 1, %s4
  %s7 = scalar_select 0, %s6, %s4
  // Predicated region
  $region2: #{tatt_forward.4} parent=0 // pred_check
    _
  $region3: #{tatt_forward.4} parent=0 // pred_check_branch
    %9 = sbr.rel (0) target = $region5
  $region4: #{tatt_forward.4} parent=0 // pred_region
    _
  $region5: #{tatt_forward.4} parent=0 // pred_fallthru
    _
  // Predicated region
  $region6: #{tatt_forward.4} parent=0 // pred_check
    _
  $region7: #{tatt_forward.4} parent=0 // pred_check_branch
    %11 = sbr.rel (0) target = $region9
  $region8: #{tatt_forward.4} parent=0 // pred_region
    _
  $region9: #{tatt_forward.4} parent=0 // pred_fallthru
    _
  // Predicated region
  $region10: #{tatt_forward.4} parent=0 // pred_check
    _
  $region11: #{tatt_forward.4} parent=0 // pred_check_branch
    %13 = sbr.rel (0) target = $region13
  $region12: #{tatt_forward.4} parent=0 // pred_region
    _
  $region13: #{tatt_forward.4} parent=0 // pred_fallthru
    _
  %v14 = vld [vmem:[%s0] sm:$0xff]
  %v15 = vld [vmem:[%s0 + $0x8] sm:$0x3]
  %v16 = vld [vmem:[%s0 + $0x10] sm:$0xff]
  %v17 = vld [vmem:[%s0 + $0x18] sm:$0x3]
  %v18 = vld [vmem:[%s0 + $0x20] sm:$0xff]
  %v19 = vld [vmem:[%s0 + $0x28] sm:$0x3]
  %v20 = vld [vmem:[%s0 + $0x30] sm:$0xff]
  %v21 = vld [vmem:[%s0 + $0x38] sm:$0x3]
  %v22 = vld [vmem:[%s0 + $0x40] sm:$0xff]
  %v23 = vld [vmem:[%s0 + $0x48] sm:$0x3]
  %v24 = vld [vmem:[%s0 + $0x50] sm:$0xff]
  %v25 = vld [vmem:[%s0 + $0x58] sm:$0x3]
  %v26 = vld [vmem:[%s0 + $0x60] sm:$0xff]
  %v27 = vld [vmem:[%s0 + $0x68] sm:$0x3]
  %v28 = vld [vmem:[%s0 + $0x70] sm:$0xff]
  %v29 = vld [vmem:[%s0 + $0x78] sm:$0x3]
  %v30 = vld [vmem:[%s0 + $0x80] sm:$0xff]
  %v31 = vld [vmem:[%s0 + $0x88] sm:$0x3]
  %v32 = vld [vmem:[%s0 + $0x90] sm:$0xff]
  %v33 = vld [vmem:[%s0 + $0x98] sm:$0x3]
  %v34 = vld [vmem:[%s0 + $0xa0] sm:$0xff]
  %v35 = vld [vmem:[%s0 + $0xa8] sm:$0x3]
  %v36 = vld [vmem:[%s0 + $0xb0] sm:$0xff]
  %v37 = vld [vmem:[%s0 + $0xb8] sm:$0x3]
  %v38 = vld [vmem:[%s0 + $0xc0] sm:$0xff]
  %v39 = vld [vmem:[%s0 + $0xc8] sm:$0x3]
  %v40 = vld [vmem:[%s0 + $0xd0] sm:$0xff]
  %v41 = vld [vmem:[%s0 + $0xd8] sm:$0x3]
  %v42 = vld [vmem:[%s0 + $0xe0] sm:$0xff]
  %v43 = vld [vmem:[%s0 + $0xe8] sm:$0x3]
  %v44 = vld [vmem:[%s0 + $0xf0] sm:$0xff]
  %v45 = vld [vmem:[%s0 + $0xf8] sm:$0x3]
  %v46 = vmul.f32 %v14, 0.5
  %v47 = vmul.f32 %v15, 0.5
  %v48 = vmul.f32 %v16, 0.5
  %v49 = vmul.f32 %v17, 0.5
  %v50 = vmul.f32 %v18, 0.5
  %v51 = vmul.f32 %v19, 0.5
  %v52 = vmul.f32 %v20, 0.5
  %v53 = vmul.f32 %v21, 0.5
  %v54 = vmul.f32 %v22, 0.5
  %v55 = vmul.f32 %v23, 0.5
  %v56 = vmul.f32 %v24, 0.5
  %v57 = vmul.f32 %v25, 0.5
  %v58 = vmul.f32 %v26, 0.5
  %v59 = vmul.f32 %v27, 0.5
  %v60 = vmul.f32 %v28, 0.5
  %v61 = vmul.f32 %v29, 0.5
  %v62 = vmul.f32 %v30, 0.5
  %v63 = vmul.f32 %v31, 0.5
  %v64 = vmul.f32 %v32, 0.5
  %v65 = vmul.f32 %v33, 0.5
  %v66 = vmul.f32 %v34, 0.5
  %v67 = vmul.f32 %v35, 0.5
  %v68 = vmul.f32 %v36, 0.5
  %v69 = vmul.f32 %v37, 0.5
  %v70 = vmul.f32 %v38, 0.5
  %v71 = vmul.f32 %v39, 0.5
  %v72 = vmul.f32 %v40, 0.5
  %v73 = vmul.f32 %v41, 0.5
  %v74 = vmul.f32 %v42, 0.5
  %v75 = vmul.f32 %v43, 0.5
  %v76 = vmul.f32 %v44, 0.5
  %v77 = vmul.f32 %v45, 0.5
  %v78 = vld [vmem:[%s1] sm:$0xff]
  %v79 = vld [vmem:[%s1 + $0x8] sm:$0x3]
  %v80 = vld [vmem:[%s1 + $0x10] sm:$0xff]
  %v81 = vld [vmem:[%s1 + $0x18] sm:$0x3]
  %v82 = vld [vmem:[%s1 + $0x20] sm:$0xff]
  %v83 = vld [vmem:[%s1 + $0x28] sm:$0x3]
  %v84 = vld [vmem:[%s1 + $0x30] sm:$0xff]
  %v85 = vld [vmem:[%s1 + $0x38] sm:$0x3]
  %v86 = vld [vmem:[%s1 + $0x40] sm:$0xff]
  %v87 = vld [vmem:[%s1 + $0x48] sm:$0x3]
  %v88 = vld [vmem:[%s1 + $0x50] sm:$0xff]
  %v89 = vld [vmem:[%s1 + $0x58] sm:$0x3]
  %v90 = vld [vmem:[%s1 + $0x60] sm:$0xff]
  %v91 = vld [vmem:[%s1 + $0x68] sm:$0x3]
  %v92 = vld [vmem:[%s1 + $0x70] sm:$0xff]
  %v93 = vld [vmem:[%s1 + $0x78] sm:$0x3]
  %v94 = vld [vmem:[%s1 + $0x80] sm:$0xff]
  %v95 = vld [vmem:[%s1 + $0x88] sm:$0x3]
  %v96 = vld [vmem:[%s1 + $0x90] sm:$0xff]
  %v97 = vld [vmem:[%s1 + $0x98] sm:$0x3]
  %v98 = vld [vmem:[%s1 + $0xa0] sm:$0xff]
  %v99 = vld [vmem:[%s1 + $0xa8] sm:$0x3]
  %v100 = vld [vmem:[%s1 + $0xb0] sm:$0xff]
  %v101 = vld [vmem:[%s1 + $0xb8] sm:$0x3]
  %v102 = vld [vmem:[%s1 + $0xc0] sm:$0xff]
  %v103 = vld [vmem:[%s1 + $0xc8] sm:$0x3]
  %v104 = vld [vmem:[%s1 + $0xd0] sm:$0xff]
  %v105 = vld [vmem:[%s1 + $0xd8] sm:$0x3]
  %v106 = vld [vmem:[%s1 + $0xe0] sm:$0xff]
  %v107 = vld [vmem:[%s1 + $0xe8] sm:$0x3]
  %v108 = vld [vmem:[%s1 + $0xf0] sm:$0xff]
  %v109 = vld [vmem:[%s1 + $0xf8] sm:$0x3]
  %v110 = vld [vmem:[%s2] sm:$0xff]
  %v111 = vld [vmem:[%s2 + $0x8] sm:$0x3]
  %v112 = vld [vmem:[%s2 + $0x10] sm:$0xff]
  %v113 = vld [vmem:[%s2 + $0x18] sm:$0x3]
  %v114 = vld [vmem:[%s2 + $0x20] sm:$0xff]
  %v115 = vld [vmem:[%s2 + $0x28] sm:$0x3]
  %v116 = vld [vmem:[%s2 + $0x30] sm:$0xff]
  %v117 = vld [vmem:[%s2 + $0x38] sm:$0x3]
  %v118 = vld [vmem:[%s2 + $0x40] sm:$0xff]
  %v119 = vld [vmem:[%s2 + $0x48] sm:$0x3]
  %v120 = vld [vmem:[%s2 + $0x50] sm:$0xff]
  %v121 = vld [vmem:[%s2 + $0x58] sm:$0x3]
  %v122 = vld [vmem:[%s2 + $0x60] sm:$0xff]
  %v123 = vld [vmem:[%s2 + $0x68] sm:$0x3]
  %v124 = vld [vmem:[%s2 + $0x70] sm:$0xff]
  %v125 = vld [vmem:[%s2 + $0x78] sm:$0x3]
  %v126 = vld [vmem:[%s2 + $0x80] sm:$0xff]
  %v127 = vld [vmem:[%s2 + $0x88] sm:$0x3]
  %v128 = vld [vmem:[%s2 + $0x90] sm:$0xff]
  %v129 = vld [vmem:[%s2 + $0x98] sm:$0x3]
  %v130 = vld [vmem:[%s2 + $0xa0] sm:$0xff]
  %v131 = vld [vmem:[%s2 + $0xa8] sm:$0x3]
  %v132 = vld [vmem:[%s2 + $0xb0] sm:$0xff]
  %v133 = vld [vmem:[%s2 + $0xb8] sm:$0x3]
  %v134 = vld [vmem:[%s2 + $0xc0] sm:$0xff]
  %v135 = vld [vmem:[%s2 + $0xc8] sm:$0x3]
  %v136 = vld [vmem:[%s2 + $0xd0] sm:$0xff]
  %v137 = vld [vmem:[%s2 + $0xd8] sm:$0x3]
  %v138 = vld [vmem:[%s2 + $0xe0] sm:$0xff]
  %v139 = vld [vmem:[%s2 + $0xe8] sm:$0x3]
  %v140 = vld [vmem:[%s2 + $0xf0] sm:$0xff]
  %v141 = vld [vmem:[%s2 + $0xf8] sm:$0x3]
  %vm142 = vcmask 31744
  %v144 = vsel %vm142, %v46, 0
  %v147 = vsel %vm142, %v47, 0
  %v150 = vsel %vm142, %v78, 0
  %v153 = vsel %vm142, %v79, 0
  %155 = vmatprep.subr.mxu0 0.0
  %156 = vmatpush1.xpose.msra.mxu0 %v150
  %157 = vmatprep.subr.mxu0 0.0
  %158 = vmatpush1.xpose.msra.mxu0 %v153
  %159 = vmatprep.subr.mxu0 0.0
  %160 = vmatpush1.xpose.msra.mxu0 0.0
  %161 = vmatprep.subr.mxu0 0.0
  %162 = vmatpush1.xpose.msra.mxu0 0.0
  %163 = vmatprep.subr.mxu0 0.0
  %164 = vmatpush1.xpose.msra.mxu0 0.0
  %165 = vmatprep.subr.mxu0 0.0
  %166 = vmatpush1.xpose.msra.mxu0 0.0
  %167 = vmatprep.subr.mxu0 0.0
  %168 = vmatpush1.xpose.msra.mxu0 0.0
  %169 = vmatprep.subr.mxu0 0.0
  %170 = vmatpush1.xpose.msra.mxu0 0.0
  %171 = vmatprep.subr.mxu0 0.0
  %172 = vmatpush1.xpose.msra.mxu0 0.0
  %173 = vmatprep.subr.mxu0 0.0
  %174 = vmatpush1.xpose.msra.mxu0 0.0
  %175 = vmatprep.subr.mxu0 0.0
  %176 = vmatpush1.xpose.msra.mxu0 0.0
  %177 = vmatprep.subr.mxu0 0.0
  %178 = vmatpush1.xpose.msra.mxu0 0.0
  %179 = vmatprep.subr.mxu0 0.0
  %180 = vmatpush1.xpose.msra.mxu0 0.0
  %181 = vmatprep.subr.mxu0 0.0
  %182 = vmatpush1.xpose.msra.mxu0 0.0
  %183 = vmatprep.subr.mxu0 0.0
  %184 = vmatpush1.xpose.msra.mxu0 0.0
  %185 = vmatprep.subr.mxu0 0.0
  %186 = vmatpush1.xpose.msra.mxu0 0.0
  %187 = vmatprep.subr.mxu0 0.0
  %188 = vmatpush1.xpose.msra.mxu0 0.0
  %189 = vmatprep.subr.mxu0 0.0
  %190 = vmatpush1.xpose.msra.mxu0 0.0
  %191 = vmatprep.subr.mxu0 0.0
  %192 = vmatpush1.xpose.msra.mxu0 0.0
  %193 = vmatprep.subr.mxu0 0.0
  %194 = vmatpush1.xpose.msra.mxu0 0.0
  %195 = vmatprep.subr.mxu0 0.0
  %196 = vmatpush1.xpose.msra.mxu0 0.0
  %197 = vmatprep.subr.mxu0 0.0
  %198 = vmatpush1.xpose.msra.mxu0 0.0
  %199 = vmatprep.subr.mxu0 0.0
  %200 = vmatpush1.xpose.msra.mxu0 0.0
  %201 = vmatprep.subr.mxu0 0.0
  %202 = vmatpush1.xpose.msra.mxu0 0.0
  %203 = vmatprep.subr.mxu0 0.0
  %204 = vmatpush1.xpose.msra.mxu0 0.0
  %205 = vmatprep.subr.mxu0 0.0
  %206 = vmatpush1.xpose.msra.mxu0 0.0
  %207 = vmatprep.subr.mxu0 0.0
  %208 = vmatpush1.xpose.msra.mxu0 0.0
  %209 = vmatprep.subr.mxu0 0.0
  %210 = vmatpush1.xpose.msra.mxu0 0.0
  %211 = vmatprep.subr.mxu0 0.0
  %212 = vmatpush1.xpose.msra.mxu0 0.0
  %213 = vmatprep.subr.mxu0 0.0
  %214 = vmatpush1.xpose.msra.mxu0 0.0
  %215 = vmatprep.subr.mxu0 0.0
  %216 = vmatpush1.xpose.msra.mxu0 0.0
  %217 = vmatprep.subr.mxu0 0.0
  %218 = vmatpush1.xpose.msra.mxu0 0.0
  %219 = vmatprep.mubr.f32.mxu0 0.0
  %220 = vmatmul.mubr.f32.gmra.mrb[0].mxu0 %v144
  %v221 = vpop.f32.mrb[0].mxu0
  %v222 = vadd.f32 0.0, %v221
  %v223 = vpop.f32.mrb[0].mxu0
  %224 = vmatprep.mubr.f32.mxu0 0.0
  %225 = vmatmul.mubr.f32.gmra.mrb[0].mxu0 %v147
  %v226 = vpop.f32.mrb[0].mxu0
  %v227 = vadd.f32 0.0, %v226
  %v228 = vpop.f32.mrb[0].mxu0
  %229 = vdwg.mxu0
  %v231 = vsel %vm142, %v48, 0
  %v234 = vsel %vm142, %v49, 0
  %v237 = vsel %vm142, %v80, 0
  %v240 = vsel %vm142, %v81, 0
  %242 = vmatprep.subr.mxu0 0.0
  %243 = vmatpush1.xpose.msra.mxu0 %v237
  %244 = vmatprep.subr.mxu0 0.0
  %245 = vmatpush1.xpose.msra.mxu0 %v240
  %246 = vmatprep.subr.mxu0 0.0
  %247 = vmatpush1.xpose.msra.mxu0 0.0
  %248 = vmatprep.subr.mxu0 0.0
  %249 = vmatpush1.xpose.msra.mxu0 0.0
  %250 = vmatprep.subr.mxu0 0.0
  %251 = vmatpush1.xpose.msra.mxu0 0.0
  %252 = vmatprep.subr.mxu0 0.0
  %253 = vmatpush1.xpose.msra.mxu0 0.0
  %254 = vmatprep.subr.mxu0 0.0
  %255 = vmatpush1.xpose.msra.mxu0 0.0
  %256 = vmatprep.subr.mxu0 0.0
  %257 = vmatpush1.xpose.msra.mxu0 0.0
  %258 = vmatprep.subr.mxu0 0.0
  %259 = vmatpush1.xpose.msra.mxu0 0.0
  %260 = vmatprep.subr.mxu0 0.0
  %261 = vmatpush1.xpose.msra.mxu0 0.0
  %262 = vmatprep.subr.mxu0 0.0
  %263 = vmatpush1.xpose.msra.mxu0 0.0
  %264 = vmatprep.subr.mxu0 0.0
  %265 = vmatpush1.xpose.msra.mxu0 0.0
  %266 = vmatprep.subr.mxu0 0.0
  %267 = vmatpush1.xpose.msra.mxu0 0.0
  %268 = vmatprep.subr.mxu0 0.0
  %269 = vmatpush1.xpose.msra.mxu0 0.0
  %270 = vmatprep.subr.mxu0 0.0
  %271 = vmatpush1.xpose.msra.mxu0 0.0
  %272 = vmatprep.subr.mxu0 0.0
  %273 = vmatpush1.xpose.msra.mxu0 0.0
  %274 = vmatprep.subr.mxu0 0.0
  %275 = vmatpush1.xpose.msra.mxu0 0.0
  %276 = vmatprep.subr.mxu0 0.0
  %277 = vmatpush1.xpose.msra.mxu0 0.0
  %278 = vmatprep.subr.mxu0 0.0
  %279 = vmatpush1.xpose.msra.mxu0 0.0
  %280 = vmatprep.subr.mxu0 0.0
  %281 = vmatpush1.xpose.msra.mxu0 0.0
  %282 = vmatprep.subr.mxu0 0.0
  %283 = vmatpush1.xpose.msra.mxu0 0.0
  %284 = vmatprep.subr.mxu0 0.0
  %285 = vmatpush1.xpose.msra.mxu0 0.0
  %286 = vmatprep.subr.mxu0 0.0
  %287 = vmatpush1.xpose.msra.mxu0 0.0
  %288 = vmatprep.subr.mxu0 0.0
  %289 = vmatpush1.xpose.msra.mxu0 0.0
  %290 = vmatprep.subr.mxu0 0.0
  %291 = vmatpush1.xpose.msra.mxu0 0.0
  %292 = vmatprep.subr.mxu0 0.0
  %293 = vmatpush1.xpose.msra.mxu0 0.0
  %294 = vmatprep.subr.mxu0 0.0
  %295 = vmatpush1.xpose.msra.mxu0 0.0
  %296 = vmatprep.subr.mxu0 0.0
  %297 = vmatpush1.xpose.msra.mxu0 0.0
  %298 = vmatprep.subr.mxu0 0.0
  %299 = vmatpush1.xpose.msra.mxu0 0.0
  %300 = vmatprep.subr.mxu0 0.0
  %301 = vmatpush1.xpose.msra.mxu0 0.0
  %302 = vmatprep.subr.mxu0 0.0
  %303 = vmatpush1.xpose.msra.mxu0 0.0
  %304 = vmatprep.subr.mxu0 0.0
  %305 = vmatpush1.xpose.msra.mxu0 0.0
  %306 = vmatprep.mubr.f32.mxu0 0.0
  %307 = vmatmul.mubr.f32.gmra.mrb[0].mxu0 %v231
  %v308 = vpop.f32.mrb[0].mxu0
  %v309 = vadd.f32 0.0, %v308
  %v310 = vpop.f32.mrb[0].mxu0
  %311 = vmatprep.mubr.f32.mxu0 0.0
  %312 = vmatmul.mubr.f32.gmra.mrb[0].mxu0 %v234
  %v313 = vpop.f32.mrb[0].mxu0
  %v314 = vadd.f32 0.0, %v313
  %v315 = vpop.f32.mrb[0].mxu0
  %316 = vdwg.mxu0
  %v318 = vsel %vm142, %v50, 0
  %v321 = vsel %vm142, %v51, 0
  %v324 = vsel %vm142, %v82, 0
  %v327 = vsel %vm142, %v83, 0
  %329 = vmatprep.subr.mxu0 0.0
  %330 = vmatpush1.xpose.msra.mxu0 %v324
  %331 = vmatprep.subr.mxu0 0.0
  %332 = vmatpush1.xpose.msra.mxu0 %v327
  %333 = vmatprep.subr.mxu0 0.0
  %334 = vmatpush1.xpose.msra.mxu0 0.0
  %335 = vmatprep.subr.mxu0 0.0
  %336 = vmatpush1.xpose.msra.mxu0 0.0
  %337 = vmatprep.subr.mxu0 0.0
  %338 = vmatpush1.xpose.msra.mxu0 0.0
  %339 = vmatprep.subr.mxu0 0.0
  %340 = vmatpush1.xpose.msra.mxu0 0.0
  %341 = vmatprep.subr.mxu0 0.0
  %342 = vmatpush1.xpose.msra.mxu0 0.0
  %343 = vmatprep.subr.mxu0 0.0
  %344 = vmatpush1.xpose.msra.mxu0 0.0
  %345 = vmatprep.subr.mxu0 0.0
  %346 = vmatpush1.xpose.msra.mxu0 0.0
  %347 = vmatprep.subr.mxu0 0.0
  %348 = vmatpush1.xpose.msra.mxu0 0.0
  %349 = vmatprep.subr.mxu0 0.0
  %350 = vmatpush1.xpose.msra.mxu0 0.0
  %351 = vmatprep.subr.mxu0 0.0
  %352 = vmatpush1.xpose.msra.mxu0 0.0
  %353 = vmatprep.subr.mxu0 0.0
  %354 = vmatpush1.xpose.msra.mxu0 0.0
  %355 = vmatprep.subr.mxu0 0.0
  %356 = vmatpush1.xpose.msra.mxu0 0.0
  %357 = vmatprep.subr.mxu0 0.0
  %358 = vmatpush1.xpose.msra.mxu0 0.0
  %359 = vmatprep.subr.mxu0 0.0
  %360 = vmatpush1.xpose.msra.mxu0 0.0
  %361 = vmatprep.subr.mxu0 0.0
  %362 = vmatpush1.xpose.msra.mxu0 0.0
  %363 = vmatprep.subr.mxu0 0.0
  %364 = vmatpush1.xpose.msra.mxu0 0.0
  %365 = vmatprep.subr.mxu0 0.0
  %366 = vmatpush1.xpose.msra.mxu0 0.0
  %367 = vmatprep.subr.mxu0 0.0
  %368 = vmatpush1.xpose.msra.mxu0 0.0
  %369 = vmatprep.subr.mxu0 0.0
  %370 = vmatpush1.xpose.msra.mxu0 0.0
  %371 = vmatprep.subr.mxu0 0.0
  %372 = vmatpush1.xpose.msra.mxu0 0.0
  %373 = vmatprep.subr.mxu0 0.0
  %374 = vmatpush1.xpose.msra.mxu0 0.0
  %375 = vmatprep.subr.mxu0 0.0
  %376 = vmatpush1.xpose.msra.mxu0 0.0
  %377 = vmatprep.subr.mxu0 0.0
  %378 = vmatpush1.xpose.msra.mxu0 0.0
  %379 = vmatprep.subr.mxu0 0.0
  %380 = vmatpush1.xpose.msra.mxu0 0.0
  %381 = vmatprep.subr.mxu0 0.0
  %382 = vmatpush1.xpose.msra.mxu0 0.0
  %383 = vmatprep.subr.mxu0 0.0
  %384 = vmatpush1.xpose.msra.mxu0 0.0
  %385 = vmatprep.subr.mxu0 0.0
  %386 = vmatpush1.xpose.msra.mxu0 0.0
  %387 = vmatprep.subr.mxu0 0.0
  %388 = vmatpush1.xpose.msra.mxu0 0.0
  %389 = vmatprep.subr.mxu0 0.0
  %390 = vmatpush1.xpose.msra.mxu0 0.0
  %391 = vmatprep.subr.mxu0 0.0
  %392 = vmatpush1.xpose.msra.mxu0 0.0
  %393 = vmatprep.mubr.f32.mxu0 0.0
  %394 = vmatmul.mubr.f32.gmra.mrb[0].mxu0 %v318
  %v395 = vpop.f32.mrb[0].mxu0
  %v396 = vadd.f32 0.0, %v395
  %v397 = vpop.f32.mrb[0].mxu0
  %398 = vmatprep.mubr.f32.mxu0 0.0
  %399 = vmatmul.mubr.f32.gmra.mrb[0].mxu0 %v321
  %v400 = vpop.f32.mrb[0].mxu0
  %v401 = vadd.f32 0.0, %v400
  %v402 = vpop.f32.mrb[0].mxu0
  %403 = vdwg.mxu0
  %v405 = vsel %vm142, %v52, 0
  %v408 = vsel %vm142, %v53, 0
  %v411 = vsel %vm142, %v84, 0
  %v414 = vsel %vm142, %v85, 0
  %416 = vmatprep.subr.mxu0 0.0
  %417 = vmatpush1.xpose.msra.mxu0 %v411
  %418 = vmatprep.subr.mxu0 0.0
  %419 = vmatpush1.xpose.msra.mxu0 %v414
  %420 = vmatprep.subr.mxu0 0.0
  %421 = vmatpush1.xpose.msra.mxu0 0.0
  %422 = vmatprep.subr.mxu0 0.0
  %423 = vmatpush1.xpose.msra.mxu0 0.0
  %424 = vmatprep.subr.mxu0 0.0
  %425 = vmatpush1.xpose.msra.mxu0 0.0
  %426 = vmatprep.subr.mxu0 0.0
  %427 = vmatpush1.xpose.msra.mxu0 0.0
  %428 = vmatprep.subr.mxu0 0.0
  %429 = vmatpush1.xpose.msra.mxu0 0.0
  %430 = vmatprep.subr.mxu0 0.0
  %431 = vmatpush1.xpose.msra.mxu0 0.0
  %432 = vmatprep.subr.mxu0 0.0
  %433 = vmatpush1.xpose.msra.mxu0 0.0
  %434 = vmatprep.subr.mxu0 0.0
  %435 = vmatpush1.xpose.msra.mxu0 0.0
  %436 = vmatprep.subr.mxu0 0.0
  %437 = vmatpush1.xpose.msra.mxu0 0.0
  %438 = vmatprep.subr.mxu0 0.0
  %439 = vmatpush1.xpose.msra.mxu0 0.0
  %440 = vmatprep.subr.mxu0 0.0
  %441 = vmatpush1.xpose.msra.mxu0 0.0
  %442 = vmatprep.subr.mxu0 0.0
  %443 = vmatpush1.xpose.msra.mxu0 0.0
  %444 = vmatprep.subr.mxu0 0.0
  %445 = vmatpush1.xpose.msra.mxu0 0.0
  %446 = vmatprep.subr.mxu0 0.0
  %447 = vmatpush1.xpose.msra.mxu0 0.0
  %448 = vmatprep.subr.mxu0 0.0
  %449 = vmatpush1.xpose.msra.mxu0 0.0
  %450 = vmatprep.subr.mxu0 0.0
  %451 = vmatpush1.xpose.msra.mxu0 0.0
  %452 = vmatprep.subr.mxu0 0.0
  %453 = vmatpush1.xpose.msra.mxu0 0.0
  %454 = vmatprep.subr.mxu0 0.0
  %455 = vmatpush1.xpose.msra.mxu0 0.0
  %456 = vmatprep.subr.mxu0 0.0
  %457 = vmatpush1.xpose.msra.mxu0 0.0
  %458 = vmatprep.subr.mxu0 0.0
  %459 = vmatpush1.xpose.msra.mxu0 0.0
  %460 = vmatprep.subr.mxu0 0.0
  %461 = vmatpush1.xpose.msra.mxu0 0.0
  %462 = vmatprep.subr.mxu0 0.0
  %463 = vmatpush1.xpose.msra.mxu0 0.0
  %464 = vmatprep.subr.mxu0 0.0
  %465 = vmatpush1.xpose.msra.mxu0 0.0
  %466 = vmatprep.subr.mxu0 0.0
  %467 = vmatpush1.xpose.msra.mxu0 0.0
  %468 = vmatprep.subr.mxu0 0.0
  %469 = vmatpush1.xpose.msra.mxu0 0.0
  %470 = vmatprep.subr.mxu0 0.0
  %471 = vmatpush1.xpose.msra.mxu0 0.0
  %472 = vmatprep.subr.mxu0 0.0
  %473 = vmatpush1.xpose.msra.mxu0 0.0
  %474 = vmatprep.subr.mxu0 0.0
  %475 = vmatpush1.xpose.msra.mxu0 0.0
  %476 = vmatprep.subr.mxu0 0.0
  %477 = vmatpush1.xpose.msra.mxu0 0.0
  %478 = vmatprep.subr.mxu0 0.0
  %479 = vmatpush1.xpose.msra.mxu0 0.0
  %480 = vmatprep.mubr.f32.mxu0 0.0
  %481 = vmatmul.mubr.f32.gmra.mrb[0].mxu0 %v405
  %v482 = vpop.f32.mrb[0].mxu0
  %v483 = vadd.f32 0.0, %v482
  %v484 = vpop.f32.mrb[0].mxu0
  %485 = vmatprep.mubr.f32.mxu0 0.0
  %486 = vmatmul.mubr.f32.gmra.mrb[0].mxu0 %v408
  %v487 = vpop.f32.mrb[0].mxu0
  %v488 = vadd.f32 0.0, %v487
  %v489 = vpop.f32.mrb[0].mxu0
  %490 = vdwg.mxu0
  %v492 = vsel %vm142, %v54, 0
  %v495 = vsel %vm142, %v55, 0
  %v498 = vsel %vm142, %v86, 0
  %v501 = vsel %vm142, %v87, 0
  %503 = vmatprep.subr.mxu0 0.0
  %504 = vmatpush1.xpose.msra.mxu0 %v498
  %505 = vmatprep.subr.mxu0 0.0
  %506 = vmatpush1.xpose.msra.mxu0 %v501
  %507 = vmatprep.subr.mxu0 0.0
  %508 = vmatpush1.xpose.msra.mxu0 0.0
  %509 = vmatprep.subr.mxu0 0.0
  %510 = vmatpush1.xpose.msra.mxu0 0.0
  %511 = vmatprep.subr.mxu0 0.0
  %512 = vmatpush1.xpose.msra.mxu0 0.0
  %513 = vmatprep.subr.mxu0 0.0
  %514 = vmatpush1.xpose.msra.mxu0 0.0
  %515 = vmatprep.subr.mxu0 0.0
  %516 = vmatpush1.xpose.msra.mxu0 0.0
  %517 = vmatprep.subr.mxu0 0.0
  %518 = vmatpush1.xpose.msra.mxu0 0.0
  %519 = vmatprep.subr.mxu0 0.0
  %520 = vmatpush1.xpose.msra.mxu0 0.0
  %521 = vmatprep.subr.mxu0 0.0
  %522 = vmatpush1.xpose.msra.mxu0 0.0
  %523 = vmatprep.subr.mxu0 0.0
  %524 = vmatpush1.xpose.msra.mxu0 0.0
  %525 = vmatprep.subr.mxu0 0.0
  %526 = vmatpush1.xpose.msra.mxu0 0.0
  %527 = vmatprep.subr.mxu0 0.0
  %528 = vmatpush1.xpose.msra.mxu0 0.0
  %529 = vmatprep.subr.mxu0 0.0
  %530 = vmatpush1.xpose.msra.mxu0 0.0
  %531 = vmatprep.subr.mxu0 0.0
  %532 = vmatpush1.xpose.msra.mxu0 0.0
  %533 = vmatprep.subr.mxu0 0.0
  %534 = vmatpush1.xpose.msra.mxu0 0.0
  %535 = vmatprep.subr.mxu0 0.0
  %536 = vmatpush1.xpose.msra.mxu0 0.0
  %537 = vmatprep.subr.mxu0 0.0
  %538 = vmatpush1.xpose.msra.mxu0 0.0
  %539 = vmatprep.subr.mxu0 0.0
  %540 = vmatpush1.xpose.msra.mxu0 0.0
  %541 = vmatprep.subr.mxu0 0.0
  %542 = vmatpush1.xpose.msra.mxu0 0.0
  %543 = vmatprep.subr.mxu0 0.0
  %544 = vmatpush1.xpose.msra.mxu0 0.0
  %545 = vmatprep.subr.mxu0 0.0
  %546 = vmatpush1.xpose.msra.mxu0 0.0
  %547 = vmatprep.subr.mxu0 0.0
  %548 = vmatpush1.xpose.msra.mxu0 0.0
  %549 = vmatprep.subr.mxu0 0.0
  %550 = vmatpush1.xpose.msra.mxu0 0.0
  %551 = vmatprep.subr.mxu0 0.0
  %552 = vmatpush1.xpose.msra.mxu0 0.0
  %553 = vmatprep.subr.mxu0 0.0
  %554 = vmatpush1.xpose.msra.mxu0 0.0
  %555 = vmatprep.subr.mxu0 0.0
  %556 = vmatpush1.xpose.msra.mxu0 0.0
  %557 = vmatprep.subr.mxu0 0.0
  %558 = vmatpush1.xpose.msra.mxu0 0.0
  %559 = vmatprep.subr.mxu0 0.0
  %560 = vmatpush1.xpose.msra.mxu0 0.0
  %561 = vmatprep.subr.mxu0 0.0
  %562 = vmatpush1.xpose.msra.mxu0 0.0
  %563 = vmatprep.subr.mxu0 0.0
  %564 = vmatpush1.xpose.msra.mxu0 0.0
  %565 = vmatprep.subr.mxu0 0.0
  %566 = vmatpush1.xpose.msra.mxu0 0.0
  %567 = vmatprep.mubr.f32.mxu0 0.0
  %568 = vmatmul.mubr.f32.gmra.mrb[0].mxu0 %v492
  %v569 = vpop.f32.mrb[0].mxu0
  %v570 = vadd.f32 0.0, %v569
  %v571 = vpop.f32.mrb[0].mxu0
  %572 = vmatprep.mubr.f32.mxu0 0.0
  %573 = vmatmul.mubr.f32.gmra.mrb[0].mxu0 %v495
  %v574 = vpop.f32.mrb[0].mxu0
  %v575 = vadd.f32 0.0, %v574
  %v576 = vpop.f32.mrb[0].mxu0
  %577 = vdwg.mxu0
  %v579 = vsel %vm142, %v56, 0
  %v582 = vsel %vm142, %v57, 0
  %v585 = vsel %vm142, %v88, 0
  %v588 = vsel %vm142, %v89, 0
  %590 = vmatprep.subr.mxu0 0.0
  %591 = vmatpush1.xpose.msra.mxu0 %v585
  %592 = vmatprep.subr.mxu0 0.0
  %593 = vmatpush1.xpose.msra.mxu0 %v588
  %594 = vmatprep.subr.mxu0 0.0
  %595 = vmatpush1.xpose.msra.mxu0 0.0
  %596 = vmatprep.subr.mxu0 0.0
  %597 = vmatpush1.xpose.msra.mxu0 0.0
  %598 = vmatprep.subr.mxu0 0.0
  %599 = vmatpush1.xpose.msra.mxu0 0.0
  %600 = vmatprep.subr.mxu0 0.0
  %601 = vmatpush1.xpose.msra.mxu0 0.0
  %602 = vmatprep.subr.mxu0 0.0
  %603 = vmatpush1.xpose.msra.mxu0 0.0
  %604 = vmatprep.subr.mxu0 0.0
  %605 = vmatpush1.xpose.msra.mxu0 0.0
  %606 = vmatprep.subr.mxu0 0.0
  %607 = vmatpush1.xpose.msra.mxu0 0.0
  %608 = vmatprep.subr.mxu0 0.0
  %609 = vmatpush1.xpose.msra.mxu0 0.0
  %610 = vmatprep.subr.mxu0 0.0
  %611 = vmatpush1.xpose.msra.mxu0 0.0
  %612 = vmatprep.subr.mxu0 0.0
  %613 = vmatpush1.xpose.msra.mxu0 0.0
  %614 = vmatprep.subr.mxu0 0.0
  %615 = vmatpush1.xpose.msra.mxu0 0.0
  %616 = vmatprep.subr.mxu0 0.0
  %617 = vmatpush1.xpose.msra.mxu0 0.0
  %618 = vmatprep.subr.mxu0 0.0
  %619 = vmatpush1.xpose.msra.mxu0 0.0
  %620 = vmatprep.subr.mxu0 0.0
  %621 = vmatpush1.xpose.msra.mxu0 0.0
  %622 = vmatprep.subr.mxu0 0.0
  %623 = vmatpush1.xpose.msra.mxu0 0.0
  %624 = vmatprep.subr.mxu0 0.0
  %625 = vmatpush1.xpose.msra.mxu0 0.0
  %626 = vmatprep.subr.mxu0 0.0
  %627 = vmatpush1.xpose.msra.mxu0 0.0
  %628 = vmatprep.subr.mxu0 0.0
  %629 = vmatpush1.xpose.msra.mxu0 0.0
  %630 = vmatprep.subr.mxu0 0.0
  %631 = vmatpush1.xpose.msra.mxu0 0.0
  %632 = vmatprep.subr.mxu0 0.0
  %633 = vmatpush1.xpose.msra.mxu0 0.0
  %634 = vmatprep.subr.mxu0 0.0
  %635 = vmatpush1.xpose.msra.mxu0 0.0
  %636 = vmatprep.subr.mxu0 0.0
  %637 = vmatpush1.xpose.msra.mxu0 0.0
  %638 = vmatprep.subr.mxu0 0.0
  %639 = vmatpush1.xpose.msra.mxu0 0.0
  %640 = vmatprep.subr.mxu0 0.0
  %641 = vmatpush1.xpose.msra.mxu0 0.0
  %642 = vmatprep.subr.mxu0 0.0
  %643 = vmatpush1.xpose.msra.mxu0 0.0
  %644 = vmatprep.subr.mxu0 0.0
  %645 = vmatpush1.xpose.msra.mxu0 0.0
  %646 = vmatprep.subr.mxu0 0.0
  %647 = vmatpush1.xpose.msra.mxu0 0.0
  %648 = vmatprep.subr.mxu0 0.0
  %649 = vmatpush1.xpose.msra.mxu0 0.0
  %650 = vmatprep.subr.mxu0 0.0
  %651 = vmatpush1.xpose.msra.mxu0 0.0
  %652 = vmatprep.subr.mxu0 0.0
  %653 = vmatpush1.xpose.msra.mxu0 0.0
  %654 = vmatprep.mubr.f32.mxu0 0.0
  %655 = vmatmul.mubr.f32.gmra.mrb[0].mxu0 %v579
  %v656 = vpop.f32.mrb[0].mxu0
  %v657 = vadd.f32 0.0, %v656
  %v658 = vpop.f32.mrb[0].mxu0
  %659 = vmatprep.mubr.f32.mxu0 0.0
  %660 = vmatmul.mubr.f32.gmra.mrb[0].mxu0 %v582
  %v661 = vpop.f32.mrb[0].mxu0
  %v662 = vadd.f32 0.0, %v661
  %v663 = vpop.f32.mrb[0].mxu0
  %664 = vdwg.mxu0
  %v666 = vsel %vm142, %v58, 0
  %v669 = vsel %vm142, %v59, 0
  %v672 = vsel %vm142, %v90, 0
  %v675 = vsel %vm142, %v91, 0
  %677 = vmatprep.subr.mxu0 0.0
  %678 = vmatpush1.xpose.msra.mxu0 %v672
  %679 = vmatprep.subr.mxu0 0.0
  %680 = vmatpush1.xpose.msra.mxu0 %v675
  %681 = vmatprep.subr.mxu0 0.0
  %682 = vmatpush1.xpose.msra.mxu0 0.0
  %683 = vmatprep.subr.mxu0 0.0
  %684 = vmatpush1.xpose.msra.mxu0 0.0
  %685 = vmatprep.subr.mxu0 0.0
  %686 = vmatpush1.xpose.msra.mxu0 0.0
  %687 = vmatprep.subr.mxu0 0.0
  %688 = vmatpush1.xpose.msra.mxu0 0.0
  %689 = vmatprep.subr.mxu0 0.0
  %690 = vmatpush1.xpose.msra.mxu0 0.0
  %691 = vmatprep.subr.mxu0 0.0
  %692 = vmatpush1.xpose.msra.mxu0 0.0
  %693 = vmatprep.subr.mxu0 0.0
  %694 = vmatpush1.xpose.msra.mxu0 0.0
  %695 = vmatprep.subr.mxu0 0.0
  %696 = vmatpush1.xpose.msra.mxu0 0.0
  %697 = vmatprep.subr.mxu0 0.0
  %698 = vmatpush1.xpose.msra.mxu0 0.0
  %699 = vmatprep.subr.mxu0 0.0
  %700 = vmatpush1.xpose.msra.mxu0 0.0
  %701 = vmatprep.subr.mxu0 0.0
  %702 = vmatpush1.xpose.msra.mxu0 0.0
  %703 = vmatprep.subr.mxu0 0.0
  %704 = vmatpush1.xpose.msra.mxu0 0.0
  %705 = vmatprep.subr.mxu0 0.0
  %706 = vmatpush1.xpose.msra.mxu0 0.0
  %707 = vmatprep.subr.mxu0 0.0
  %708 = vmatpush1.xpose.msra.mxu0 0.0
  %709 = vmatprep.subr.mxu0 0.0
  %710 = vmatpush1.xpose.msra.mxu0 0.0
  %711 = vmatprep.subr.mxu0 0.0
  %712 = vmatpush1.xpose.msra.mxu0 0.0
  %713 = vmatprep.subr.mxu0 0.0
  %714 = vmatpush1.xpose.msra.mxu0 0.0
  %715 = vmatprep.subr.mxu0 0.0
  %716 = vmatpush1.xpose.msra.mxu0 0.0
  %717 = vmatprep.subr.mxu0 0.0
  %718 = vmatpush1.xpose.msra.mxu0 0.0
  %719 = vmatprep.subr.mxu0 0.0
  %720 = vmatpush1.xpose.msra.mxu0 0.0
  %721 = vmatprep.subr.mxu0 0.0
  %722 = vmatpush1.xpose.msra.mxu0 0.0
  %723 = vmatprep.subr.mxu0 0.0
  %724 = vmatpush1.xpose.msra.mxu0 0.0
  %725 = vmatprep.subr.mxu0 0.0
  %726 = vmatpush1.xpose.msra.mxu0 0.0
  %727 = vmatprep.subr.mxu0 0.0
  %728 = vmatpush1.xpose.msra.mxu0 0.0
  %729 = vmatprep.subr.mxu0 0.0
  %730 = vmatpush1.xpose.msra.mxu0 0.0
  %731 = vmatprep.subr.mxu0 0.0
  %732 = vmatpush1.xpose.msra.mxu0 0.0
  %733 = vmatprep.subr.mxu0 0.0
  %734 = vmatpush1.xpose.msra.mxu0 0.0
  %735 = vmatprep.subr.mxu0 0.0
  %736 = vmatpush1.xpose.msra.mxu0 0.0
  %737 = vmatprep.subr.mxu0 0.0
  %738 = vmatpush1.xpose.msra.mxu0 0.0
  %739 = vmatprep.subr.mxu0 0.0
  %740 = vmatpush1.xpose.msra.mxu0 0.0
  %741 = vmatprep.mubr.f32.mxu0 0.0
  %742 = vmatmul.mubr.f32.gmra.mrb[0].mxu0 %v666
  %v743 = vpop.f32.mrb[0].mxu0
  %v744 = vadd.f32 0.0, %v743
  %v745 = vpop.f32.mrb[0].mxu0
  %746 = vmatprep.mubr.f32.mxu0 0.0
  %747 = vmatmul.mubr.f32.gmra.mrb[0].mxu0 %v669
  %v748 = vpop.f32.mrb[0].mxu0
  %v749 = vadd.f32 0.0, %v748
  %v750 = vpop.f32.mrb[0].mxu0
  %751 = vdwg.mxu0
  %v753 = vsel %vm142, %v60, 0
  %v756 = vsel %vm142, %v61, 0
  %v759 = vsel %vm142, %v92, 0
  %v762 = vsel %vm142, %v93, 0
  %764 = vmatprep.subr.mxu0 0.0
  %765 = vmatpush1.xpose.msra.mxu0 %v759
  %766 = vmatprep.subr.mxu0 0.0
  %767 = vmatpush1.xpose.msra.mxu0 %v762
  %768 = vmatprep.subr.mxu0 0.0
  %769 = vmatpush1.xpose.msra.mxu0 0.0
  %770 = vmatprep.subr.mxu0 0.0
  %771 = vmatpush1.xpose.msra.mxu0 0.0
  %772 = vmatprep.subr.mxu0 0.0
  %773 = vmatpush1.xpose.msra.mxu0 0.0
  %774 = vmatprep.subr.mxu0 0.0
  %775 = vmatpush1.xpose.msra.mxu0 0.0
  %776 = vmatprep.subr.mxu0 0.0
  %777 = vmatpush1.xpose.msra.mxu0 0.0
  %778 = vmatprep.subr.mxu0 0.0
  %779 = vmatpush1.xpose.msra.mxu0 0.0
  %780 = vmatprep.subr.mxu0 0.0
  %781 = vmatpush1.xpose.msra.mxu0 0.0
  %782 = vmatprep.subr.mxu0 0.0
  %783 = vmatpush1.xpose.msra.mxu0 0.0
  %784 = vmatprep.subr.mxu0 0.0
  %785 = vmatpush1.xpose.msra.mxu0 0.0
  %786 = vmatprep.subr.mxu0 0.0
  %787 = vmatpush1.xpose.msra.mxu0 0.0
  %788 = vmatprep.subr.mxu0 0.0
  %789 = vmatpush1.xpose.msra.mxu0 0.0
  %790 = vmatprep.subr.mxu0 0.0
  %791 = vmatpush1.xpose.msra.mxu0 0.0
  %792 = vmatprep.subr.mxu0 0.0
  %793 = vmatpush1.xpose.msra.mxu0 0.0
  %794 = vmatprep.subr.mxu0 0.0
  %795 = vmatpush1.xpose.msra.mxu0 0.0
  %796 = vmatprep.subr.mxu0 0.0
  %797 = vmatpush1.xpose.msra.mxu0 0.0
  %798 = vmatprep.subr.mxu0 0.0
  %799 = vmatpush1.xpose.msra.mxu0 0.0
  %800 = vmatprep.subr.mxu0 0.0
  %801 = vmatpush1.xpose.msra.mxu0 0.0
  %802 = vmatprep.subr.mxu0 0.0
  %803 = vmatpush1.xpose.msra.mxu0 0.0
  %804 = vmatprep.subr.mxu0 0.0
  %805 = vmatpush1.xpose.msra.mxu0 0.0
  %806 = vmatprep.subr.mxu0 0.0
  %807 = vmatpush1.xpose.msra.mxu0 0.0
  %808 = vmatprep.subr.mxu0 0.0
  %809 = vmatpush1.xpose.msra.mxu0 0.0
  %810 = vmatprep.subr.mxu0 0.0
  %811 = vmatpush1.xpose.msra.mxu0 0.0
  %812 = vmatprep.subr.mxu0 0.0
  %813 = vmatpush1.xpose.msra.mxu0 0.0
  %814 = vmatprep.subr.mxu0 0.0
  %815 = vmatpush1.xpose.msra.mxu0 0.0
  %816 = vmatprep.subr.mxu0 0.0
  %817 = vmatpush1.xpose.msra.mxu0 0.0
  %818 = vmatprep.subr.mxu0 0.0
  %819 = vmatpush1.xpose.msra.mxu0 0.0
  %820 = vmatprep.subr.mxu0 0.0
  %821 = vmatpush1.xpose.msra.mxu0 0.0
  %822 = vmatprep.subr.mxu0 0.0
  %823 = vmatpush1.xpose.msra.mxu0 0.0
  %824 = vmatprep.subr.mxu0 0.0
  %825 = vmatpush1.xpose.msra.mxu0 0.0
  %826 = vmatprep.subr.mxu0 0.0
  %827 = vmatpush1.xpose.msra.mxu0 0.0
  %828 = vmatprep.mubr.f32.mxu0 0.0
  %829 = vmatmul.mubr.f32.gmra.mrb[0].mxu0 %v753
  %v830 = vpop.f32.mrb[0].mxu0
  %v831 = vadd.f32 0.0, %v830
  %v832 = vpop.f32.mrb[0].mxu0
  %833 = vmatprep.mubr.f32.mxu0 0.0
  %834 = vmatmul.mubr.f32.gmra.mrb[0].mxu0 %v756
  %v835 = vpop.f32.mrb[0].mxu0
  %v836 = vadd.f32 0.0, %v835
  %v837 = vpop.f32.mrb[0].mxu0
  %838 = vdwg.mxu0
  %v840 = vsel %vm142, %v62, 0
  %v843 = vsel %vm142, %v63, 0
  %v846 = vsel %vm142, %v94, 0
  %v849 = vsel %vm142, %v95, 0
  %851 = vmatprep.subr.mxu0 0.0
  %852 = vmatpush1.xpose.msra.mxu0 %v846
  %853 = vmatprep.subr.mxu0 0.0
  %854 = vmatpush1.xpose.msra.mxu0 %v849
  %855 = vmatprep.subr.mxu0 0.0
  %856 = vmatpush1.xpose.msra.mxu0 0.0
  %857 = vmatprep.subr.mxu0 0.0
  %858 = vmatpush1.xpose.msra.mxu0 0.0
  %859 = vmatprep.subr.mxu0 0.0
  %860 = vmatpush1.xpose.msra.mxu0 0.0
  %861 = vmatprep.subr.mxu0 0.0
  %862 = vmatpush1.xpose.msra.mxu0 0.0
  %863 = vmatprep.subr.mxu0 0.0
  %864 = vmatpush1.xpose.msra.mxu0 0.0
  %865 = vmatprep.subr.mxu0 0.0
  %866 = vmatpush1.xpose.msra.mxu0 0.0
  %867 = vmatprep.subr.mxu0 0.0
  %868 = vmatpush1.xpose.msra.mxu0 0.0
  %869 = vmatprep.subr.mxu0 0.0
  %870 = vmatpush1.xpose.msra.mxu0 0.0
  %871 = vmatprep.subr.mxu0 0.0
  %872 = vmatpush1.xpose.msra.mxu0 0.0
  %873 = vmatprep.subr.mxu0 0.0
  %874 = vmatpush1.xpose.msra.mxu0 0.0
  %875 = vmatprep.subr.mxu0 0.0
  %876 = vmatpush1.xpose.msra.mxu0 0.0
  %877 = vmatprep.subr.mxu0 0.0
  %878 = vmatpush1.xpose.msra.mxu0 0.0
  %879 = vmatprep.subr.mxu0 0.0
  %880 = vmatpush1.xpose.msra.mxu0 0.0
  %881 = vmatprep.subr.mxu0 0.0
  %882 = vmatpush1.xpose.msra.mxu0 0.0
  %883 = vmatprep.subr.mxu0 0.0
  %884 = vmatpush1.xpose.msra.mxu0 0.0
  %885 = vmatprep.subr.mxu0 0.0
  %886 = vmatpush1.xpose.msra.mxu0 0.0
  %887 = vmatprep.subr.mxu0 0.0
  %888 = vmatpush1.xpose.msra.mxu0 0.0
  %889 = vmatprep.subr.mxu0 0.0
  %890 = vmatpush1.xpose.msra.mxu0 0.0
  %891 = vmatprep.subr.mxu0 0.0
  %892 = vmatpush1.xpose.msra.mxu0 0.0
  %893 = vmatprep.subr.mxu0 0.0
  %894 = vmatpush1.xpose.msra.mxu0 0.0
  %895 = vmatprep.subr.mxu0 0.0
  %896 = vmatpush1.xpose.msra.mxu0 0.0
  %897 = vmatprep.subr.mxu0 0.0
  %898 = vmatpush1.xpose.msra.mxu0 0.0
  %899 = vmatprep.subr.mxu0 0.0
  %900 = vmatpush1.xpose.msra.mxu0 0.0
  %901 = vmatprep.subr.mxu0 0.0
  %902 = vmatpush1.xpose.msra.mxu0 0.0
  %903 = vmatprep.subr.mxu0 0.0
  %904 = vmatpush1.xpose.msra.mxu0 0.0
  %905 = vmatprep.subr.mxu0 0.0
  %906 = vmatpush1.xpose.msra.mxu0 0.0
  %907 = vmatprep.subr.mxu0 0.0
  %908 = vmatpush1.xpose.msra.mxu0 0.0
  %909 = vmatprep.subr.mxu0 0.0
  %910 = vmatpush1.xpose.msra.mxu0 0.0
  %911 = vmatprep.subr.mxu0 0.0
  %912 = vmatpush1.xpose.msra.mxu0 0.0
  %913 = vmatprep.subr.mxu0 0.0
  %914 = vmatpush1.xpose.msra.mxu0 0.0
  %915 = vmatprep.mubr.f32.mxu0 0.0
  %916 = vmatmul.mubr.f32.gmra.mrb[0].mxu0 %v840
  %v917 = vpop.f32.mrb[0].mxu0
  %v918 = vadd.f32 0.0, %v917
  %v919 = vpop.f32.mrb[0].mxu0
  %920 = vmatprep.mubr.f32.mxu0 0.0
  %921 = vmatmul.mubr.f32.gmra.mrb[0].mxu0 %v843
  %v922 = vpop.f32.mrb[0].mxu0
  %v923 = vadd.f32 0.0, %v922
  %v924 = vpop.f32.mrb[0].mxu0
  %925 = vdwg.mxu0
  %v927 = vsel %vm142, %v64, 0
  %v930 = vsel %vm142, %v65, 0
  %v933 = vsel %vm142, %v96, 0
  %v936 = vsel %vm142, %v97, 0
  %938 = vmatprep.subr.mxu0 0.0
  %939 = vmatpush1.xpose.msra.mxu0 %v933
  %940 = vmatprep.subr.mxu0 0.0
  %941 = vmatpush1.xpose.msra.mxu0 %v936
  %942 = vmatprep.subr.mxu0 0.0
  %943 = vmatpush1.xpose.msra.mxu0 0.0
  %944 = vmatprep.subr.mxu0 0.0
  %945 = vmatpush1.xpose.msra.mxu0 0.0
  %946 = vmatprep.subr.mxu0 0.0
  %947 = vmatpush1.xpose.msra.mxu0 0.0
  %948 = vmatprep.subr.mxu0 0.0
  %949 = vmatpush1.xpose.msra.mxu0 0.0
  %950 = vmatprep.subr.mxu0 0.0
  %951 = vmatpush1.xpose.msra.mxu0 0.0
  %952 = vmatprep.subr.mxu0 0.0
  %953 = vmatpush1.xpose.msra.mxu0 0.0
  %954 = vmatprep.subr.mxu0 0.0
  %955 = vmatpush1.xpose.msra.mxu0 0.0
  %956 = vmatprep.subr.mxu0 0.0
  %957 = vmatpush1.xpose.msra.mxu0 0.0
  %958 = vmatprep.subr.mxu0 0.0
  %959 = vmatpush1.xpose.msra.mxu0 0.0
  %960 = vmatprep.subr.mxu0 0.0
  %961 = vmatpush1.xpose.msra.mxu0 0.0
  %962 = vmatprep.subr.mxu0 0.0
  %963 = vmatpush1.xpose.msra.mxu0 0.0
  %964 = vmatprep.subr.mxu0 0.0
  %965 = vmatpush1.xpose.msra.mxu0 0.0
  %966 = vmatprep.subr.mxu0 0.0
  %967 = vmatpush1.xpose.msra.mxu0 0.0
  %968 = vmatprep.subr.mxu0 0.0
  %969 = vmatpush1.xpose.msra.mxu0 0.0
  %970 = vmatprep.subr.mxu0 0.0
  %971 = vmatpush1.xpose.msra.mxu0 0.0
  %972 = vmatprep.subr.mxu0 0.0
  %973 = vmatpush1.xpose.msra.mxu0 0.0
  %974 = vmatprep.subr.mxu0 0.0
  %975 = vmatpush1.xpose.msra.mxu0 0.0
  %976 = vmatprep.subr.mxu0 0.0
  %977 = vmatpush1.xpose.msra.mxu0 0.0
  %978 = vmatprep.subr.mxu0 0.0
  %979 = vmatpush1.xpose.msra.mxu0 0.0
  %980 = vmatprep.subr.mxu0 0.0
  %981 = vmatpush1.xpose.msra.mxu0 0.0
  %982 = vmatprep.subr.mxu0 0.0
  %983 = vmatpush1.xpose.msra.mxu0 0.0
  %984 = vmatprep.subr.mxu0 0.0
  %985 = vmatpush1.xpose.msra.mxu0 0.0
  %986 = vmatprep.subr.mxu0 0.0
  %987 = vmatpush1.xpose.msra.mxu0 0.0
  %988 = vmatprep.subr.mxu0 0.0
  %989 = vmatpush1.xpose.msra.mxu0 0.0
  %990 = vmatprep.subr.mxu0 0.0
  %991 = vmatpush1.xpose.msra.mxu0 0.0
  %992 = vmatprep.subr.mxu0 0.0
  %993 = vmatpush1.xpose.msra.mxu0 0.0
  %994 = vmatprep.subr.mxu0 0.0
  %995 = vmatpush1.xpose.msra.mxu0 0.0
  %996 = vmatprep.subr.mxu0 0.0
  %997 = vmatpush1.xpose.msra.mxu0 0.0
  %998 = vmatprep.subr.mxu0 0.0
  %999 = vmatpush1.xpose.msra.mxu0 0.0
  %1000 = vmatprep.subr.mxu0 0.0
  %1001 = vmatpush1.xpose.msra.mxu0 0.0
  %1002 = vmatprep.mubr.f32.mxu0 0.0
  %1003 = vmatmul.mubr.f32.gmra.mrb[0].mxu0 %v927
  %v1004 = vpop.f32.mrb[0].mxu0
  %v1005 = vadd.f32 0.0, %v1004
  %v1006 = vpop.f32.mrb[0].mxu0
  %1007 = vmatprep.mubr.f32.mxu0 0.0
  %1008 = vmatmul.mubr.f32.gmra.mrb[0].mxu0 %v930
  %v1009 = vpop.f32.mrb[0].mxu0
  %v1010 = vadd.f32 0.0, %v1009
  %v1011 = vpop.f32.mrb[0].mxu0
  %1012 = vdwg.mxu0
  %v1014 = vsel %vm142, %v66, 0
  %v1017 = vsel %vm142, %v67, 0
  %v1020 = vsel %vm142, %v98, 0
  %v1023 = vsel %vm142, %v99, 0
  %1025 = vmatprep.subr.mxu0 0.0
  %1026 = vmatpush1.xpose.msra.mxu0 %v1020
  %1027 = vmatprep.subr.mxu0 0.0
  %1028 = vmatpush1.xpose.msra.mxu0 %v1023
  %1029 = vmatprep.subr.mxu0 0.0
  %1030 = vmatpush1.xpose.msra.mxu0 0.0
  %1031 = vmatprep.subr.mxu0 0.0
  %1032 = vmatpush1.xpose.msra.mxu0 0.0
  %1033 = vmatprep.subr.mxu0 0.0
  %1034 = vmatpush1.xpose.msra.mxu0 0.0
  %1035 = vmatprep.subr.mxu0 0.0
  %1036 = vmatpush1.xpose.msra.mxu0 0.0
  %1037 = vmatprep.subr.mxu0 0.0
  %1038 = vmatpush1.xpose.msra.mxu0 0.0
  %1039 = vmatprep.subr.mxu0 0.0
  %1040 = vmatpush1.xpose.msra.mxu0 0.0
  %1041 = vmatprep.subr.mxu0 0.0
  %1042 = vmatpush1.xpose.msra.mxu0 0.0
  %1043 = vmatprep.subr.mxu0 0.0
  %1044 = vmatpush1.xpose.msra.mxu0 0.0
  %1045 = vmatprep.subr.mxu0 0.0
  %1046 = vmatpush1.xpose.msra.mxu0 0.0
  %1047 = vmatprep.subr.mxu0 0.0
  %1048 = vmatpush1.xpose.msra.mxu0 0.0
  %1049 = vmatprep.subr.mxu0 0.0
  %1050 = vmatpush1.xpose.msra.mxu0 0.0
  %1051 = vmatprep.subr.mxu0 0.0
  %1052 = vmatpush1.xpose.msra.mxu0 0.0
  %1053 = vmatprep.subr.mxu0 0.0
  %1054 = vmatpush1.xpose.msra.mxu0 0.0
  %1055 = vmatprep.subr.mxu0 0.0
  %1056 = vmatpush1.xpose.msra.mxu0 0.0
  %1057 = vmatprep.subr.mxu0 0.0
  %1058 = vmatpush1.xpose.msra.mxu0 0.0
  %1059 = vmatprep.subr.mxu0 0.0
  %1060 = vmatpush1.xpose.msra.mxu0 0.0
  %1061 = vmatprep.subr.mxu0 0.0
  %1062 = vmatpush1.xpose.msra.mxu0 0.0
  %1063 = vmatprep.subr.mxu0 0.0
  %1064 = vmatpush1.xpose.msra.mxu0 0.0
  %1065 = vmatprep.subr.mxu0 0.0
  %1066 = vmatpush1.xpose.msra.mxu0 0.0
  %1067 = vmatprep.subr.mxu0 0.0
  %1068 = vmatpush1.xpose.msra.mxu0 0.0
  %1069 = vmatprep.subr.mxu0 0.0
  %1070 = vmatpush1.xpose.msra.mxu0 0.0
  %1071 = vmatprep.subr.mxu0 0.0
  %1072 = vmatpush1.xpose.msra.mxu0 0.0
  %1073 = vmatprep.subr.mxu0 0.0
  %1074 = vmatpush1.xpose.msra.mxu0 0.0
  %1075 = vmatprep.subr.mxu0 0.0
  %1076 = vmatpush1.xpose.msra.mxu0 0.0
  %1077 = vmatprep.subr.mxu0 0.0
  %1078 = vmatpush1.xpose.msra.mxu0 0.0
  %1079 = vmatprep.subr.mxu0 0.0
  %1080 = vmatpush1.xpose.msra.mxu0 0.0
  %1081 = vmatprep.subr.mxu0 0.0
  %1082 = vmatpush1.xpose.msra.mxu0 0.0
  %1083 = vmatprep.subr.mxu0 0.0
  %1084 = vmatpush1.xpose.msra.mxu0 0.0
  %1085 = vmatprep.subr.mxu0 0.0
  %1086 = vmatpush1.xpose.msra.mxu0 0.0
  %1087 = vmatprep.subr.mxu0 0.0
  %1088 = vmatpush1.xpose.msra.mxu0 0.0
  %1089 = vmatprep.mubr.f32.mxu0 0.0
  %1090 = vmatmul.mubr.f32.gmra.mrb[0].mxu0 %v1014
  %v1091 = vpop.f32.mrb[0].mxu0
  %v1092 = vadd.f32 0.0, %v1091
  %v1093 = vpop.f32.mrb[0].mxu0
  %1094 = vmatprep.mubr.f32.mxu0 0.0
  %1095 = vmatmul.mubr.f32.gmra.mrb[0].mxu0 %v1017
  %v1096 = vpop.f32.mrb[0].mxu0
  %v1097 = vadd.f32 0.0, %v1096
  %v1098 = vpop.f32.mrb[0].mxu0
  %1099 = vdwg.mxu0
  %v1101 = vsel %vm142, %v68, 0
  %v1104 = vsel %vm142, %v69, 0
  %v1107 = vsel %vm142, %v100, 0
  %v1110 = vsel %vm142, %v101, 0
  %1112 = vmatprep.subr.mxu0 0.0
  %1113 = vmatpush1.xpose.msra.mxu0 %v1107
  %1114 = vmatprep.subr.mxu0 0.0
  %1115 = vmatpush1.xpose.msra.mxu0 %v1110
  %1116 = vmatprep.subr.mxu0 0.0
  %1117 = vmatpush1.xpose.msra.mxu0 0.0
  %1118 = vmatprep.subr.mxu0 0.0
  %1119 = vmatpush1.xpose.msra.mxu0 0.0
  %1120 = vmatprep.subr.mxu0 0.0
  %1121 = vmatpush1.xpose.msra.mxu0 0.0
  %1122 = vmatprep.subr.mxu0 0.0
  %1123 = vmatpush1.xpose.msra.mxu0 0.0
  %1124 = vmatprep.subr.mxu0 0.0
  %1125 = vmatpush1.xpose.msra.mxu0 0.0
  %1126 = vmatprep.subr.mxu0 0.0
  %1127 = vmatpush1.xpose.msra.mxu0 0.0
  %1128 = vmatprep.subr.mxu0 0.0
  %1129 = vmatpush1.xpose.msra.mxu0 0.0
  %1130 = vmatprep.subr.mxu0 0.0
  %1131 = vmatpush1.xpose.msra.mxu0 0.0
  %1132 = vmatprep.subr.mxu0 0.0
  %1133 = vmatpush1.xpose.msra.mxu0 0.0
  %1134 = vmatprep.subr.mxu0 0.0
  %1135 = vmatpush1.xpose.msra.mxu0 0.0
  %1136 = vmatprep.subr.mxu0 0.0
  %1137 = vmatpush1.xpose.msra.mxu0 0.0
  %1138 = vmatprep.subr.mxu0 0.0
  %1139 = vmatpush1.xpose.msra.mxu0 0.0
  %1140 = vmatprep.subr.mxu0 0.0
  %1141 = vmatpush1.xpose.msra.mxu0 0.0
  %1142 = vmatprep.subr.mxu0 0.0
  %1143 = vmatpush1.xpose.msra.mxu0 0.0
  %1144 = vmatprep.subr.mxu0 0.0
  %1145 = vmatpush1.xpose.msra.mxu0 0.0
  %1146 = vmatprep.subr.mxu0 0.0
  %1147 = vmatpush1.xpose.msra.mxu0 0.0
  %1148 = vmatprep.subr.mxu0 0.0
  %1149 = vmatpush1.xpose.msra.mxu0 0.0
  %1150 = vmatprep.subr.mxu0 0.0
  %1151 = vmatpush1.xpose.msra.mxu0 0.0
  %1152 = vmatprep.subr.mxu0 0.0
  %1153 = vmatpush1.xpose.msra.mxu0 0.0
  %1154 = vmatprep.subr.mxu0 0.0
  %1155 = vmatpush1.xpose.msra.mxu0 0.0
  %1156 = vmatprep.subr.mxu0 0.0
  %1157 = vmatpush1.xpose.msra.mxu0 0.0
  %1158 = vmatprep.subr.mxu0 0.0
  %1159 = vmatpush1.xpose.msra.mxu0 0.0
  %1160 = vmatprep.subr.mxu0 0.0
  %1161 = vmatpush1.xpose.msra.mxu0 0.0
  %1162 = vmatprep.subr.mxu0 0.0
  %1163 = vmatpush1.xpose.msra.mxu0 0.0
  %1164 = vmatprep.subr.mxu0 0.0
  %1165 = vmatpush1.xpose.msra.mxu0 0.0
  %1166 = vmatprep.subr.mxu0 0.0
  %1167 = vmatpush1.xpose.msra.mxu0 0.0
  %1168 = vmatprep.subr.mxu0 0.0
  %1169 = vmatpush1.xpose.msra.mxu0 0.0
  %1170 = vmatprep.subr.mxu0 0.0
  %1171 = vmatpush1.xpose.msra.mxu0 0.0
  %1172 = vmatprep.subr.mxu0 0.0
  %1173 = vmatpush1.xpose.msra.mxu0 0.0
  %1174 = vmatprep.subr.mxu0 0.0
  %1175 = vmatpush1.xpose.msra.mxu0 0.0
  %1176 = vmatprep.mubr.f32.mxu0 0.0
  %1177 = vmatmul.mubr.f32.gmra.mrb[0].mxu0 %v1101
  %v1178 = vpop.f32.mrb[0].mxu0
  %v1179 = vadd.f32 0.0, %v1178
  %v1180 = vpop.f32.mrb[0].mxu0
  %1181 = vmatprep.mubr.f32.mxu0 0.0
  %1182 = vmatmul.mubr.f32.gmra.mrb[0].mxu0 %v1104
  %v1183 = vpop.f32.mrb[0].mxu0
  %v1184 = vadd.f32 0.0, %v1183
  %v1185 = vpop.f32.mrb[0].mxu0
  %1186 = vdwg.mxu0
  %v1188 = vsel %vm142, %v70, 0
  %v1191 = vsel %vm142, %v71, 0
  %v1194 = vsel %vm142, %v102, 0
  %v1197 = vsel %vm142, %v103, 0
  %1199 = vmatprep.subr.mxu0 0.0
  %1200 = vmatpush1.xpose.msra.mxu0 %v1194
  %1201 = vmatprep.subr.mxu0 0.0
  %1202 = vmatpush1.xpose.msra.mxu0 %v1197
  %1203 = vmatprep.subr.mxu0 0.0
  %1204 = vmatpush1.xpose.msra.mxu0 0.0
  %1205 = vmatprep.subr.mxu0 0.0
  %1206 = vmatpush1.xpose.msra.mxu0 0.0
  %1207 = vmatprep.subr.mxu0 0.0
  %1208 = vmatpush1.xpose.msra.mxu0 0.0
  %1209 = vmatprep.subr.mxu0 0.0
  %1210 = vmatpush1.xpose.msra.mxu0 0.0
  %1211 = vmatprep.subr.mxu0 0.0
  %1212 = vmatpush1.xpose.msra.mxu0 0.0
  %1213 = vmatprep.subr.mxu0 0.0
  %1214 = vmatpush1.xpose.msra.mxu0 0.0
  %1215 = vmatprep.subr.mxu0 0.0
  %1216 = vmatpush1.xpose.msra.mxu0 0.0
  %1217 = vmatprep.subr.mxu0 0.0
  %1218 = vmatpush1.xpose.msra.mxu0 0.0
  %1219 = vmatprep.subr.mxu0 0.0
  %1220 = vmatpush1.xpose.msra.mxu0 0.0
  %1221 = vmatprep.subr.mxu0 0.0
  %1222 = vmatpush1.xpose.msra.mxu0 0.0
  %1223 = vmatprep.subr.mxu0 0.0
  %1224 = vmatpush1.xpose.msra.mxu0 0.0
  %1225 = vmatprep.subr.mxu0 0.0
  %1226 = vmatpush1.xpose.msra.mxu0 0.0
  %1227 = vmatprep.subr.mxu0 0.0
  %1228 = vmatpush1.xpose.msra.mxu0 0.0
  %1229 = vmatprep.subr.mxu0 0.0
  %1230 = vmatpush1.xpose.msra.mxu0 0.0
  %1231 = vmatprep.subr.mxu0 0.0
  %1232 = vmatpush1.xpose.msra.mxu0 0.0
  %1233 = vmatprep.subr.mxu0 0.0
  %1234 = vmatpush1.xpose.msra.mxu0 0.0
  %1235 = vmatprep.subr.mxu0 0.0
  %1236 = vmatpush1.xpose.msra.mxu0 0.0
  %1237 = vmatprep.subr.mxu0 0.0
  %1238 = vmatpush1.xpose.msra.mxu0 0.0
  %1239 = vmatprep.subr.mxu0 0.0
  %1240 = vmatpush1.xpose.msra.mxu0 0.0
  %1241 = vmatprep.subr.mxu0 0.0
  %1242 = vmatpush1.xpose.msra.mxu0 0.0
  %1243 = vmatprep.subr.mxu0 0.0
  %1244 = vmatpush1.xpose.msra.mxu0 0.0
  %1245 = vmatprep.subr.mxu0 0.0
  %1246 = vmatpush1.xpose.msra.mxu0 0.0
  %1247 = vmatprep.subr.mxu0 0.0
  %1248 = vmatpush1.xpose.msra.mxu0 0.0
  %1249 = vmatprep.subr.mxu0 0.0
  %1250 = vmatpush1.xpose.msra.mxu0 0.0
  %1251 = vmatprep.subr.mxu0 0.0
  %1252 = vmatpush1.xpose.msra.mxu0 0.0
  %1253 = vmatprep.subr.mxu0 0.0
  %1254 = vmatpush1.xpose.msra.mxu0 0.0
  %1255 = vmatprep.subr.mxu0 0.0
  %1256 = vmatpush1.xpose.msra.mxu0 0.0
  %1257 = vmatprep.subr.mxu0 0.0
  %1258 = vmatpush1.xpose.msra.mxu0 0.0
  %1259 = vmatprep.subr.mxu0 0.0
  %1260 = vmatpush1.xpose.msra.mxu0 0.0
  %1261 = vmatprep.subr.mxu0 0.0
  %1262 = vmatpush1.xpose.msra.mxu0 0.0
  %1263 = vmatprep.mubr.f32.mxu0 0.0
  %1264 = vmatmul.mubr.f32.gmra.mrb[0].mxu0 %v1188
  %v1265 = vpop.f32.mrb[0].mxu0
  %v1266 = vadd.f32 0.0, %v1265
  %v1267 = vpop.f32.mrb[0].mxu0
  %1268 = vmatprep.mubr.f32.mxu0 0.0
  %1269 = vmatmul.mubr.f32.gmra.mrb[0].mxu0 %v1191
  %v1270 = vpop.f32.mrb[0].mxu0
  %v1271 = vadd.f32 0.0, %v1270
  %v1272 = vpop.f32.mrb[0].mxu0
  %1273 = vdwg.mxu0
  %v1275 = vsel %vm142, %v72, 0
  %v1278 = vsel %vm142, %v73, 0
  %v1281 = vsel %vm142, %v104, 0
  %v1284 = vsel %vm142, %v105, 0
  %1286 = vmatprep.subr.mxu0 0.0
  %1287 = vmatpush1.xpose.msra.mxu0 %v1281
  %1288 = vmatprep.subr.mxu0 0.0
  %1289 = vmatpush1.xpose.msra.mxu0 %v1284
  %1290 = vmatprep.subr.mxu0 0.0
  %1291 = vmatpush1.xpose.msra.mxu0 0.0
  %1292 = vmatprep.subr.mxu0 0.0
  %1293 = vmatpush1.xpose.msra.mxu0 0.0
  %1294 = vmatprep.subr.mxu0 0.0
  %1295 = vmatpush1.xpose.msra.mxu0 0.0
  %1296 = vmatprep.subr.mxu0 0.0
  %1297 = vmatpush1.xpose.msra.mxu0 0.0
  %1298 = vmatprep.subr.mxu0 0.0
  %1299 = vmatpush1.xpose.msra.mxu0 0.0
  %1300 = vmatprep.subr.mxu0 0.0
  %1301 = vmatpush1.xpose.msra.mxu0 0.0
  %1302 = vmatprep.subr.mxu0 0.0
  %1303 = vmatpush1.xpose.msra.mxu0 0.0
  %1304 = vmatprep.subr.mxu0 0.0
  %1305 = vmatpush1.xpose.msra.mxu0 0.0
  %1306 = vmatprep.subr.mxu0 0.0
  %1307 = vmatpush1.xpose.msra.mxu0 0.0
  %1308 = vmatprep.subr.mxu0 0.0
  %1309 = vmatpush1.xpose.msra.mxu0 0.0
  %1310 = vmatprep.subr.mxu0 0.0
  %1311 = vmatpush1.xpose.msra.mxu0 0.0
  %1312 = vmatprep.subr.mxu0 0.0
  %1313 = vmatpush1.xpose.msra.mxu0 0.0
  %1314 = vmatprep.subr.mxu0 0.0
  %1315 = vmatpush1.xpose.msra.mxu0 0.0
  %1316 = vmatprep.subr.mxu0 0.0
  %1317 = vmatpush1.xpose.msra.mxu0 0.0
  %1318 = vmatprep.subr.mxu0 0.0
  %1319 = vmatpush1.xpose.msra.mxu0 0.0
  %1320 = vmatprep.subr.mxu0 0.0
  %1321 = vmatpush1.xpose.msra.mxu0 0.0
  %1322 = vmatprep.subr.mxu0 0.0
  %1323 = vmatpush1.xpose.msra.mxu0 0.0
  %1324 = vmatprep.subr.mxu0 0.0
  %1325 = vmatpush1.xpose.msra.mxu0 0.0
  %1326 = vmatprep.subr.mxu0 0.0
  %1327 = vmatpush1.xpose.msra.mxu0 0.0
  %1328 = vmatprep.subr.mxu0 0.0
  %1329 = vmatpush1.xpose.msra.mxu0 0.0
  %1330 = vmatprep.subr.mxu0 0.0
  %1331 = vmatpush1.xpose.msra.mxu0 0.0
  %1332 = vmatprep.subr.mxu0 0.0
  %1333 = vmatpush1.xpose.msra.mxu0 0.0
  %1334 = vmatprep.subr.mxu0 0.0
  %1335 = vmatpush1.xpose.msra.mxu0 0.0
  %1336 = vmatprep.subr.mxu0 0.0
  %1337 = vmatpush1.xpose.msra.mxu0 0.0
  %1338 = vmatprep.subr.mxu0 0.0
  %1339 = vmatpush1.xpose.msra.mxu0 0.0
  %1340 = vmatprep.subr.mxu0 0.0
  %1341 = vmatpush1.xpose.msra.mxu0 0.0
  %1342 = vmatprep.subr.mxu0 0.0
  %1343 = vmatpush1.xpose.msra.mxu0 0.0
  %1344 = vmatprep.subr.mxu0 0.0
  %1345 = vmatpush1.xpose.msra.mxu0 0.0
  %1346 = vmatprep.subr.mxu0 0.0
  %1347 = vmatpush1.xpose.msra.mxu0 0.0
  %1348 = vmatprep.subr.mxu0 0.0
  %1349 = vmatpush1.xpose.msra.mxu0 0.0
  %1350 = vmatprep.mubr.f32.mxu0 0.0
  %1351 = vmatmul.mubr.f32.gmra.mrb[0].mxu0 %v1275
  %v1352 = vpop.f32.mrb[0].mxu0
  %v1353 = vadd.f32 0.0, %v1352
  %v1354 = vpop.f32.mrb[0].mxu0
  %1355 = vmatprep.mubr.f32.mxu0 0.0
  %1356 = vmatmul.mubr.f32.gmra.mrb[0].mxu0 %v1278
  %v1357 = vpop.f32.mrb[0].mxu0
  %v1358 = vadd.f32 0.0, %v1357
  %v1359 = vpop.f32.mrb[0].mxu0
  %1360 = vdwg.mxu0
  %v1362 = vsel %vm142, %v74, 0
  %v1365 = vsel %vm142, %v75, 0
  %v1368 = vsel %vm142, %v106, 0
  %v1371 = vsel %vm142, %v107, 0
  %1373 = vmatprep.subr.mxu0 0.0
  %1374 = vmatpush1.xpose.msra.mxu0 %v1368
  %1375 = vmatprep.subr.mxu0 0.0
  %1376 = vmatpush1.xpose.msra.mxu0 %v1371
  %1377 = vmatprep.subr.mxu0 0.0
  %1378 = vmatpush1.xpose.msra.mxu0 0.0
  %1379 = vmatprep.subr.mxu0 0.0
  %1380 = vmatpush1.xpose.msra.mxu0 0.0
  %1381 = vmatprep.subr.mxu0 0.0
  %1382 = vmatpush1.xpose.msra.mxu0 0.0
  %1383 = vmatprep.subr.mxu0 0.0
  %1384 = vmatpush1.xpose.msra.mxu0 0.0
  %1385 = vmatprep.subr.mxu0 0.0
  %1386 = vmatpush1.xpose.msra.mxu0 0.0
  %1387 = vmatprep.subr.mxu0 0.0
  %1388 = vmatpush1.xpose.msra.mxu0 0.0
  %1389 = vmatprep.subr.mxu0 0.0
  %1390 = vmatpush1.xpose.msra.mxu0 0.0
  %1391 = vmatprep.subr.mxu0 0.0
  %1392 = vmatpush1.xpose.msra.mxu0 0.0
  %1393 = vmatprep.subr.mxu0 0.0
  %1394 = vmatpush1.xpose.msra.mxu0 0.0
  %1395 = vmatprep.subr.mxu0 0.0
  %1396 = vmatpush1.xpose.msra.mxu0 0.0
  %1397 = vmatprep.subr.mxu0 0.0
  %1398 = vmatpush1.xpose.msra.mxu0 0.0
  %1399 = vmatprep.subr.mxu0 0.0
  %1400 = vmatpush1.xpose.msra.mxu0 0.0
  %1401 = vmatprep.subr.mxu0 0.0
  %1402 = vmatpush1.xpose.msra.mxu0 0.0
  %1403 = vmatprep.subr.mxu0 0.0
  %1404 = vmatpush1.xpose.msra.mxu0 0.0
  %1405 = vmatprep.subr.mxu0 0.0
  %1406 = vmatpush1.xpose.msra.mxu0 0.0
  %1407 = vmatprep.subr.mxu0 0.0
  %1408 = vmatpush1.xpose.msra.mxu0 0.0
  %1409 = vmatprep.subr.mxu0 0.0
  %1410 = vmatpush1.xpose.msra.mxu0 0.0
  %1411 = vmatprep.subr.mxu0 0.0
  %1412 = vmatpush1.xpose.msra.mxu0 0.0
  %1413 = vmatprep.subr.mxu0 0.0
  %1414 = vmatpush1.xpose.msra.mxu0 0.0
  %1415 = vmatprep.subr.mxu0 0.0
  %1416 = vmatpush1.xpose.msra.mxu0 0.0
  %1417 = vmatprep.subr.mxu0 0.0
  %1418 = vmatpush1.xpose.msra.mxu0 0.0
  %1419 = vmatprep.subr.mxu0 0.0
  %1420 = vmatpush1.xpose.msra.mxu0 0.0
  %1421 = vmatprep.subr.mxu0 0.0
  %1422 = vmatpush1.xpose.msra.mxu0 0.0
  %1423 = vmatprep.subr.mxu0 0.0
  %1424 = vmatpush1.xpose.msra.mxu0 0.0
  %1425 = vmatprep.subr.mxu0 0.0
  %1426 = vmatpush1.xpose.msra.mxu0 0.0
  %1427 = vmatprep.subr.mxu0 0.0
  %1428 = vmatpush1.xpose.msra.mxu0 0.0
  %1429 = vmatprep.subr.mxu0 0.0
  %1430 = vmatpush1.xpose.msra.mxu0 0.0
  %1431 = vmatprep.subr.mxu0 0.0
  %1432 = vmatpush1.xpose.msra.mxu0 0.0
  %1433 = vmatprep.subr.mxu0 0.0
  %1434 = vmatpush1.xpose.msra.mxu0 0.0
  %1435 = vmatprep.subr.mxu0 0.0
  %1436 = vmatpush1.xpose.msra.mxu0 0.0
  %1437 = vmatprep.mubr.f32.mxu0 0.0
  %1438 = vmatmul.mubr.f32.gmra.mrb[0].mxu0 %v1362
  %v1439 = vpop.f32.mrb[0].mxu0
  %v1440 = vadd.f32 0.0, %v1439
  %v1441 = vpop.f32.mrb[0].mxu0
  %1442 = vmatprep.mubr.f32.mxu0 0.0
  %1443 = vmatmul.mubr.f32.gmra.mrb[0].mxu0 %v1365
  %v1444 = vpop.f32.mrb[0].mxu0
  %v1445 = vadd.f32 0.0, %v1444
  %v1446 = vpop.f32.mrb[0].mxu0
  %1447 = vdwg.mxu0
  %v1449 = vsel %vm142, %v76, 0
  %v1452 = vsel %vm142, %v77, 0
  %v1455 = vsel %vm142, %v108, 0
  %v1458 = vsel %vm142, %v109, 0
  %1460 = vmatprep.subr.mxu0 0.0
  %1461 = vmatpush1.xpose.msra.mxu0 %v1455
  %1462 = vmatprep.subr.mxu0 0.0
  %1463 = vmatpush1.xpose.msra.mxu0 %v1458
  %1464 = vmatprep.subr.mxu0 0.0
  %1465 = vmatpush1.xpose.msra.mxu0 0.0
  %1466 = vmatprep.subr.mxu0 0.0
  %1467 = vmatpush1.xpose.msra.mxu0 0.0
  %1468 = vmatprep.subr.mxu0 0.0
  %1469 = vmatpush1.xpose.msra.mxu0 0.0
  %1470 = vmatprep.subr.mxu0 0.0
  %1471 = vmatpush1.xpose.msra.mxu0 0.0
  %1472 = vmatprep.subr.mxu0 0.0
  %1473 = vmatpush1.xpose.msra.mxu0 0.0
  %1474 = vmatprep.subr.mxu0 0.0
  %1475 = vmatpush1.xpose.msra.mxu0 0.0
  %1476 = vmatprep.subr.mxu0 0.0
  %1477 = vmatpush1.xpose.msra.mxu0 0.0
  %1478 = vmatprep.subr.mxu0 0.0
  %1479 = vmatpush1.xpose.msra.mxu0 0.0
  %1480 = vmatprep.subr.mxu0 0.0
  %1481 = vmatpush1.xpose.msra.mxu0 0.0
  %1482 = vmatprep.subr.mxu0 0.0
  %1483 = vmatpush1.xpose.msra.mxu0 0.0
  %1484 = vmatprep.subr.mxu0 0.0
  %1485 = vmatpush1.xpose.msra.mxu0 0.0
  %1486 = vmatprep.subr.mxu0 0.0
  %1487 = vmatpush1.xpose.msra.mxu0 0.0
  %1488 = vmatprep.subr.mxu0 0.0
  %1489 = vmatpush1.xpose.msra.mxu0 0.0
  %1490 = vmatprep.subr.mxu0 0.0
  %1491 = vmatpush1.xpose.msra.mxu0 0.0
  %1492 = vmatprep.subr.mxu0 0.0
  %1493 = vmatpush1.xpose.msra.mxu0 0.0
  %1494 = vmatprep.subr.mxu0 0.0
  %1495 = vmatpush1.xpose.msra.mxu0 0.0
  %1496 = vmatprep.subr.mxu0 0.0
  %1497 = vmatpush1.xpose.msra.mxu0 0.0
  %1498 = vmatprep.subr.mxu0 0.0
  %1499 = vmatpush1.xpose.msra.mxu0 0.0
  %1500 = vmatprep.subr.mxu0 0.0
  %1501 = vmatpush1.xpose.msra.mxu0 0.0
  %1502 = vmatprep.subr.mxu0 0.0
  %1503 = vmatpush1.xpose.msra.mxu0 0.0
  %1504 = vmatprep.subr.mxu0 0.0
  %1505 = vmatpush1.xpose.msra.mxu0 0.0
  %1506 = vmatprep.subr.mxu0 0.0
  %1507 = vmatpush1.xpose.msra.mxu0 0.0
  %1508 = vmatprep.subr.mxu0 0.0
  %1509 = vmatpush1.xpose.msra.mxu0 0.0
  %1510 = vmatprep.subr.mxu0 0.0
  %1511 = vmatpush1.xpose.msra.mxu0 0.0
  %1512 = vmatprep.subr.mxu0 0.0
  %1513 = vmatpush1.xpose.msra.mxu0 0.0
  %1514 = vmatprep.subr.mxu0 0.0
  %1515 = vmatpush1.xpose.msra.mxu0 0.0
  %1516 = vmatprep.subr.mxu0 0.0
  %1517 = vmatpush1.xpose.msra.mxu0 0.0
  %1518 = vmatprep.subr.mxu0 0.0
  %1519 = vmatpush1.xpose.msra.mxu0 0.0
  %1520 = vmatprep.subr.mxu0 0.0
  %1521 = vmatpush1.xpose.msra.mxu0 0.0
  %1522 = vmatprep.subr.mxu0 0.0
  %1523 = vmatpush1.xpose.msra.mxu0 0.0
  %1524 = vmatprep.mubr.f32.mxu0 0.0
  %1525 = vmatmul.mubr.f32.gmra.mrb[0].mxu0 %v1449
  %v1526 = vpop.f32.mrb[0].mxu0
  %v1527 = vadd.f32 0.0, %v1526
  %v1528 = vpop.f32.mrb[0].mxu0
  %1529 = vmatprep.mubr.f32.mxu0 0.0
  %1530 = vmatmul.mubr.f32.gmra.mrb[0].mxu0 %v1452
  %v1531 = vpop.f32.mrb[0].mxu0
  %v1532 = vadd.f32 0.0, %v1531
  %v1533 = vpop.f32.mrb[0].mxu0
  %1534 = vdwg.mxu0
  %v1535 = vlaneseq
  %v1536 = vshrl.u32 %v1535, 7
  %v1537 = vadd.s32 %v1536, 8
  %v1538 = vlaneseq
  %v1539 = vand.u32 %v1538, 127
  %vm1540 = vcmp.le.s32.totalorder %v1539, %v1536
  %vm1541 = vcmp.le.s32.totalorder %v1539, %v1537
  %v1542 = vsel %vm1540, %v222, -32767.0
  %v1543 = vsel %vm1541, %v227, -32767.0
  %v1544 = vsel %vm1540, %v309, -32767.0
  %v1545 = vsel %vm1541, %v314, -32767.0
  %v1546 = vsel %vm1540, %v396, -32767.0
  %v1547 = vsel %vm1541, %v401, -32767.0
  %v1548 = vsel %vm1540, %v483, -32767.0
  %v1549 = vsel %vm1541, %v488, -32767.0
  %v1550 = vsel %vm1540, %v570, -32767.0
  %v1551 = vsel %vm1541, %v575, -32767.0
  %v1552 = vsel %vm1540, %v657, -32767.0
  %v1553 = vsel %vm1541, %v662, -32767.0
  %v1554 = vsel %vm1540, %v744, -32767.0
  %v1555 = vsel %vm1541, %v749, -32767.0
  %v1556 = vsel %vm1540, %v831, -32767.0
  %v1557 = vsel %vm1541, %v836, -32767.0
  %v1558 = vsel %vm1540, %v918, -32767.0
  %v1559 = vsel %vm1541, %v923, -32767.0
  %v1560 = vsel %vm1540, %v1005, -32767.0
  %v1561 = vsel %vm1541, %v1010, -32767.0
  %v1562 = vsel %vm1540, %v1092, -32767.0
  %v1563 = vsel %vm1541, %v1097, -32767.0
  %v1564 = vsel %vm1540, %v1179, -32767.0
  %v1565 = vsel %vm1541, %v1184, -32767.0
  %v1566 = vsel %vm1540, %v1266, -32767.0
  %v1567 = vsel %vm1541, %v1271, -32767.0
  %v1568 = vsel %vm1540, %v1353, -32767.0
  %v1569 = vsel %vm1541, %v1358, -32767.0
  %v1570 = vsel %vm1540, %v1440, -32767.0
  %v1571 = vsel %vm1541, %v1445, -32767.0
  %v1572 = vsel %vm1540, %v1527, -32767.0
  %v1573 = vsel %vm1541, %v1532, -32767.0
  %vm1574 = vcmask 80896
  %v1575 = vsel %vm1574, %v1542, -inf
  %1576 = vmax.xlane.f32.xlu0 %v1575
  %v1577 = vpop.xlane.xlu0 %1576
  %vm1578 = vcmask 74752
  %v1579 = vsel %vm1578, %v1543, -inf
  %1580 = vmax.xlane.f32.xlu0 %v1579
  %v1581 = vpop.xlane.xlu0 %1580
  %v1582 = vsel %vm1574, %v1544, -inf
  %1583 = vmax.xlane.f32.xlu0 %v1582
  %v1584 = vpop.xlane.xlu0 %1583
  %v1585 = vsel %vm1578, %v1545, -inf
  %1586 = vmax.xlane.f32.xlu0 %v1585
  %v1587 = vpop.xlane.xlu0 %1586
  %v1588 = vsel %vm1574, %v1546, -inf
  %1589 = vmax.xlane.f32.xlu0 %v1588
  %v1590 = vpop.xlane.xlu0 %1589
  %v1591 = vsel %vm1578, %v1547, -inf
  %1592 = vmax.xlane.f32.xlu0 %v1591
  %v1593 = vpop.xlane.xlu0 %1592
  %v1594 = vsel %vm1574, %v1548, -inf
  %1595 = vmax.xlane.f32.xlu0 %v1594
  %v1596 = vpop.xlane.xlu0 %1595
  %v1597 = vsel %vm1578, %v1549, -inf
  %1598 = vmax.xlane.f32.xlu0 %v1597
  %v1599 = vpop.xlane.xlu0 %1598
  %v1600 = vsel %vm1574, %v1550, -inf
  %1601 = vmax.xlane.f32.xlu0 %v1600
  %v1602 = vpop.xlane.xlu0 %1601
  %v1603 = vsel %vm1578, %v1551, -inf
  %1604 = vmax.xlane.f32.xlu0 %v1603
  %v1605 = vpop.xlane.xlu0 %1604
  %v1606 = vsel %vm1574, %v1552, -inf
  %1607 = vmax.xlane.f32.xlu0 %v1606
  %v1608 = vpop.xlane.xlu0 %1607
  %v1609 = vsel %vm1578, %v1553, -inf
  %1610 = vmax.xlane.f32.xlu0 %v1609
  %v1611 = vpop.xlane.xlu0 %1610
  %v1612 = vsel %vm1574, %v1554, -inf
  %1613 = vmax.xlane.f32.xlu0 %v1612
  %v1614 = vpop.xlane.xlu0 %1613
  %v1615 = vsel %vm1578, %v1555, -inf
  %1616 = vmax.xlane.f32.xlu0 %v1615
  %v1617 = vpop.xlane.xlu0 %1616
  %v1618 = vsel %vm1574, %v1556, -inf
  %1619 = vmax.xlane.f32.xlu0 %v1618
  %v1620 = vpop.xlane.xlu0 %1619
  %v1621 = vsel %vm1578, %v1557, -inf
  %1622 = vmax.xlane.f32.xlu0 %v1621
  %v1623 = vpop.xlane.xlu0 %1622
  %v1624 = vsel %vm1574, %v1558, -inf
  %1625 = vmax.xlane.f32.xlu0 %v1624
  %v1626 = vpop.xlane.xlu0 %1625
  %v1627 = vsel %vm1578, %v1559, -inf
  %1628 = vmax.xlane.f32.xlu0 %v1627
  %v1629 = vpop.xlane.xlu0 %1628
  %v1630 = vsel %vm1574, %v1560, -inf
  %1631 = vmax.xlane.f32.xlu0 %v1630
  %v1632 = vpop.xlane.xlu0 %1631
  %v1633 = vsel %vm1578, %v1561, -inf
  %1634 = vmax.xlane.f32.xlu0 %v1633
  %v1635 = vpop.xlane.xlu0 %1634
  %v1636 = vsel %vm1574, %v1562, -inf
  %1637 = vmax.xlane.f32.xlu0 %v1636
  %v1638 = vpop.xlane.xlu0 %1637
  %v1639 = vsel %vm1578, %v1563, -inf
  %1640 = vmax.xlane.f32.xlu0 %v1639
  %v1641 = vpop.xlane.xlu0 %1640
  %v1642 = vsel %vm1574, %v1564, -inf
  %1643 = vmax.xlane.f32.xlu0 %v1642
  %v1644 = vpop.xlane.xlu0 %1643
  %v1645 = vsel %vm1578, %v1565, -inf
  %1646 = vmax.xlane.f32.xlu0 %v1645
  %v1647 = vpop.xlane.xlu0 %1646
  %v1648 = vsel %vm1574, %v1566, -inf
  %1649 = vmax.xlane.f32.xlu0 %v1648
  %v1650 = vpop.xlane.xlu0 %1649
  %v1651 = vsel %vm1578, %v1567, -inf
  %1652 = vmax.xlane.f32.xlu0 %v1651
  %v1653 = vpop.xlane.xlu0 %1652
  %v1654 = vsel %vm1574, %v1568, -inf
  %1655 = vmax.xlane.f32.xlu0 %v1654
  %v1656 = vpop.xlane.xlu0 %1655
  %v1657 = vsel %vm1578, %v1569, -inf
  %1658 = vmax.xlane.f32.xlu0 %v1657
  %v1659 = vpop.xlane.xlu0 %1658
  %v1660 = vsel %vm1574, %v1570, -inf
  %1661 = vmax.xlane.f32.xlu0 %v1660
  %v1662 = vpop.xlane.xlu0 %1661
  %v1663 = vsel %vm1578, %v1571, -inf
  %1664 = vmax.xlane.f32.xlu0 %v1663
  %v1665 = vpop.xlane.xlu0 %1664
  %v1666 = vsel %vm1574, %v1572, -inf
  %1667 = vmax.xlane.f32.xlu0 %v1666
  %v1668 = vpop.xlane.xlu0 %1667
  %v1669 = vsel %vm1578, %v1573, -inf
  %1670 = vmax.xlane.f32.xlu0 %v1669
  %v1671 = vpop.xlane.xlu0 %1670
  %v1672 = vsub.f32 %v1542, %v1577
  %v1673 = vsub.f32 %v1543, %v1581
  %v1674 = vsub.f32 %v1544, %v1584
  %v1675 = vsub.f32 %v1545, %v1587
  %v1676 = vsub.f32 %v1546, %v1590
  %v1677 = vsub.f32 %v1547, %v1593
  %v1678 = vsub.f32 %v1548, %v1596
  %v1679 = vsub.f32 %v1549, %v1599
  %v1680 = vsub.f32 %v1550, %v1602
  %v1681 = vsub.f32 %v1551, %v1605
  %v1682 = vsub.f32 %v1552, %v1608
  %v1683 = vsub.f32 %v1553, %v1611
  %v1684 = vsub.f32 %v1554, %v1614
  %v1685 = vsub.f32 %v1555, %v1617
  %v1686 = vsub.f32 %v1556, %v1620
  %v1687 = vsub.f32 %v1557, %v1623
  %v1688 = vsub.f32 %v1558, %v1626
  %v1689 = vsub.f32 %v1559, %v1629
  %v1690 = vsub.f32 %v1560, %v1632
  %v1691 = vsub.f32 %v1561, %v1635
  %v1692 = vsub.f32 %v1562, %v1638
  %v1693 = vsub.f32 %v1563, %v1641
  %v1694 = vsub.f32 %v1564, %v1644
  %v1695 = vsub.f32 %v1565, %v1647
  %v1696 = vsub.f32 %v1566, %v1650
  %v1697 = vsub.f32 %v1567, %v1653
  %v1698 = vsub.f32 %v1568, %v1656
  %v1699 = vsub.f32 %v1569, %v1659
  %v1700 = vsub.f32 %v1570, %v1662
  %v1701 = vsub.f32 %v1571, %v1665
  %v1702 = vsub.f32 %v1572, %v1668
  %v1703 = vsub.f32 %v1573, %v1671
  %v1704 = vmul.f32 %v1672, 1.442695
  %v1705 = vpow.pop %v1704
  %v1706 = vmul.f32 %v1673, 1.442695
  %v1707 = vpow.pop %v1706
  %v1708 = vmul.f32 %v1674, 1.442695
  %v1709 = vpow.pop %v1708
  %v1710 = vmul.f32 %v1675, 1.442695
  %v1711 = vpow.pop %v1710
  %v1712 = vmul.f32 %v1676, 1.442695
  %v1713 = vpow.pop %v1712
  %v1714 = vmul.f32 %v1677, 1.442695
  %v1715 = vpow.pop %v1714
  %v1716 = vmul.f32 %v1678, 1.442695
  %v1717 = vpow.pop %v1716
  %v1718 = vmul.f32 %v1679, 1.442695
  %v1719 = vpow.pop %v1718
  %v1720 = vmul.f32 %v1680, 1.442695
  %v1721 = vpow.pop %v1720
  %v1722 = vmul.f32 %v1681, 1.442695
  %v1723 = vpow.pop %v1722
  %v1724 = vmul.f32 %v1682, 1.442695
  %v1725 = vpow.pop %v1724
  %v1726 = vmul.f32 %v1683, 1.442695
  %v1727 = vpow.pop %v1726
  %v1728 = vmul.f32 %v1684, 1.442695
  %v1729 = vpow.pop %v1728
  %v1730 = vmul.f32 %v1685, 1.442695
  %v1731 = vpow.pop %v1730
  %v1732 = vmul.f32 %v1686, 1.442695
  %v1733 = vpow.pop %v1732
  %v1734 = vmul.f32 %v1687, 1.442695
  %v1735 = vpow.pop %v1734
  %v1736 = vmul.f32 %v1688, 1.442695
  %v1737 = vpow.pop %v1736
  %v1738 = vmul.f32 %v1689, 1.442695
  %v1739 = vpow.pop %v1738
  %v1740 = vmul.f32 %v1690, 1.442695
  %v1741 = vpow.pop %v1740
  %v1742 = vmul.f32 %v1691, 1.442695
  %v1743 = vpow.pop %v1742
  %v1744 = vmul.f32 %v1692, 1.442695
  %v1745 = vpow.pop %v1744
  %v1746 = vmul.f32 %v1693, 1.442695
  %v1747 = vpow.pop %v1746
  %v1748 = vmul.f32 %v1694, 1.442695
  %v1749 = vpow.pop %v1748
  %v1750 = vmul.f32 %v1695, 1.442695
  %v1751 = vpow.pop %v1750
  %v1752 = vmul.f32 %v1696, 1.442695
  %v1753 = vpow.pop %v1752
  %v1754 = vmul.f32 %v1697, 1.442695
  %v1755 = vpow.pop %v1754
  %v1756 = vmul.f32 %v1698, 1.442695
  %v1757 = vpow.pop %v1756
  %v1758 = vmul.f32 %v1699, 1.442695
  %v1759 = vpow.pop %v1758
  %v1760 = vmul.f32 %v1700, 1.442695
  %v1761 = vpow.pop %v1760
  %v1762 = vmul.f32 %v1701, 1.442695
  %v1763 = vpow.pop %v1762
  %v1764 = vmul.f32 %v1702, 1.442695
  %v1765 = vpow.pop %v1764
  %v1766 = vmul.f32 %v1703, 1.442695
  %v1767 = vpow.pop %v1766
  %v1768 = vsel %vm1574, %v1705, 0.0
  %1769 = vadd.xlane.f32.xlu0 %v1768
  %v1770 = vpop.xlane.xlu0 %1769
  %v1771 = vsel %vm1578, %v1707, 0.0
  %1772 = vadd.xlane.f32.xlu0 %v1771
  %v1773 = vpop.xlane.xlu0 %1772
  %v1774 = vsel %vm1574, %v1709, 0.0
  %1775 = vadd.xlane.f32.xlu0 %v1774
  %v1776 = vpop.xlane.xlu0 %1775
  %v1777 = vsel %vm1578, %v1711, 0.0
  %1778 = vadd.xlane.f32.xlu0 %v1777
  %v1779 = vpop.xlane.xlu0 %1778
  %v1780 = vsel %vm1574, %v1713, 0.0
  %1781 = vadd.xlane.f32.xlu0 %v1780
  %v1782 = vpop.xlane.xlu0 %1781
  %v1783 = vsel %vm1578, %v1715, 0.0
  %1784 = vadd.xlane.f32.xlu0 %v1783
  %v1785 = vpop.xlane.xlu0 %1784
  %v1786 = vsel %vm1574, %v1717, 0.0
  %1787 = vadd.xlane.f32.xlu0 %v1786
  %v1788 = vpop.xlane.xlu0 %1787
  %v1789 = vsel %vm1578, %v1719, 0.0
  %1790 = vadd.xlane.f32.xlu0 %v1789
  %v1791 = vpop.xlane.xlu0 %1790
  %v1792 = vsel %vm1574, %v1721, 0.0
  %1793 = vadd.xlane.f32.xlu0 %v1792
  %v1794 = vpop.xlane.xlu0 %1793
  %v1795 = vsel %vm1578, %v1723, 0.0
  %1796 = vadd.xlane.f32.xlu0 %v1795
  %v1797 = vpop.xlane.xlu0 %1796
  %v1798 = vsel %vm1574, %v1725, 0.0
  %1799 = vadd.xlane.f32.xlu0 %v1798
  %v1800 = vpop.xlane.xlu0 %1799
  %v1801 = vsel %vm1578, %v1727, 0.0
  %1802 = vadd.xlane.f32.xlu0 %v1801
  %v1803 = vpop.xlane.xlu0 %1802
  %v1804 = vsel %vm1574, %v1729, 0.0
  %1805 = vadd.xlane.f32.xlu0 %v1804
  %v1806 = vpop.xlane.xlu0 %1805
  %v1807 = vsel %vm1578, %v1731, 0.0
  %1808 = vadd.xlane.f32.xlu0 %v1807
  %v1809 = vpop.xlane.xlu0 %1808
  %v1810 = vsel %vm1574, %v1733, 0.0
  %1811 = vadd.xlane.f32.xlu0 %v1810
  %v1812 = vpop.xlane.xlu0 %1811
  %v1813 = vsel %vm1578, %v1735, 0.0
  %1814 = vadd.xlane.f32.xlu0 %v1813
  %v1815 = vpop.xlane.xlu0 %1814
  %v1816 = vsel %vm1574, %v1737, 0.0
  %1817 = vadd.xlane.f32.xlu0 %v1816
  %v1818 = vpop.xlane.xlu0 %1817
  %v1819 = vsel %vm1578, %v1739, 0.0
  %1820 = vadd.xlane.f32.xlu0 %v1819
  %v1821 = vpop.xlane.xlu0 %1820
  %v1822 = vsel %vm1574, %v1741, 0.0
  %1823 = vadd.xlane.f32.xlu0 %v1822
  %v1824 = vpop.xlane.xlu0 %1823
  %v1825 = vsel %vm1578, %v1743, 0.0
  %1826 = vadd.xlane.f32.xlu0 %v1825
  %v1827 = vpop.xlane.xlu0 %1826
  %v1828 = vsel %vm1574, %v1745, 0.0
  %1829 = vadd.xlane.f32.xlu0 %v1828
  %v1830 = vpop.xlane.xlu0 %1829
  %v1831 = vsel %vm1578, %v1747, 0.0
  %1832 = vadd.xlane.f32.xlu0 %v1831
  %v1833 = vpop.xlane.xlu0 %1832
  %v1834 = vsel %vm1574, %v1749, 0.0
  %1835 = vadd.xlane.f32.xlu0 %v1834
  %v1836 = vpop.xlane.xlu0 %1835
  %v1837 = vsel %vm1578, %v1751, 0.0
  %1838 = vadd.xlane.f32.xlu0 %v1837
  %v1839 = vpop.xlane.xlu0 %1838
  %v1840 = vsel %vm1574, %v1753, 0.0
  %1841 = vadd.xlane.f32.xlu0 %v1840
  %v1842 = vpop.xlane.xlu0 %1841
  %v1843 = vsel %vm1578, %v1755, 0.0
  %1844 = vadd.xlane.f32.xlu0 %v1843
  %v1845 = vpop.xlane.xlu0 %1844
  %v1846 = vsel %vm1574, %v1757, 0.0
  %1847 = vadd.xlane.f32.xlu0 %v1846
  %v1848 = vpop.xlane.xlu0 %1847
  %v1849 = vsel %vm1578, %v1759, 0.0
  %1850 = vadd.xlane.f32.xlu0 %v1849
  %v1851 = vpop.xlane.xlu0 %1850
  %v1852 = vsel %vm1574, %v1761, 0.0
  %1853 = vadd.xlane.f32.xlu0 %v1852
  %v1854 = vpop.xlane.xlu0 %1853
  %v1855 = vsel %vm1578, %v1763, 0.0
  %1856 = vadd.xlane.f32.xlu0 %v1855
  %v1857 = vpop.xlane.xlu0 %1856
  %v1858 = vsel %vm1574, %v1765, 0.0
  %1859 = vadd.xlane.f32.xlu0 %v1858
  %v1860 = vpop.xlane.xlu0 %1859
  %v1861 = vsel %vm1578, %v1767, 0.0
  %1862 = vadd.xlane.f32.xlu0 %v1861
  %v1863 = vpop.xlane.xlu0 %1862
  %v1864 = vrcp.pop %v1770
  %v1865 = vrcp.pop %v1773
  %v1866 = vrcp.pop %v1776
  %v1867 = vrcp.pop %v1779
  %v1868 = vrcp.pop %v1782
  %v1869 = vrcp.pop %v1785
  %v1870 = vrcp.pop %v1788
  %v1871 = vrcp.pop %v1791
  %v1872 = vrcp.pop %v1794
  %v1873 = vrcp.pop %v1797
  %v1874 = vrcp.pop %v1800
  %v1875 = vrcp.pop %v1803
  %v1876 = vrcp.pop %v1806
  %v1877 = vrcp.pop %v1809
  %v1878 = vrcp.pop %v1812
  %v1879 = vrcp.pop %v1815
  %v1880 = vrcp.pop %v1818
  %v1881 = vrcp.pop %v1821
  %v1882 = vrcp.pop %v1824
  %v1883 = vrcp.pop %v1827
  %v1884 = vrcp.pop %v1830
  %v1885 = vrcp.pop %v1833
  %v1886 = vrcp.pop %v1836
  %v1887 = vrcp.pop %v1839
  %v1888 = vrcp.pop %v1842
  %v1889 = vrcp.pop %v1845
  %v1890 = vrcp.pop %v1848
  %v1891 = vrcp.pop %v1851
  %v1892 = vrcp.pop %v1854
  %v1893 = vrcp.pop %v1857
  %v1894 = vrcp.pop %v1860
  %v1895 = vrcp.pop %v1863
  %v1896 = vmul.f32 %v1705, %v1864
  %v1897 = vmul.f32 %v1707, %v1865
  %v1898 = vmul.f32 %v1709, %v1866
  %v1899 = vmul.f32 %v1711, %v1867
  %v1900 = vmul.f32 %v1713, %v1868
  %v1901 = vmul.f32 %v1715, %v1869
  %v1902 = vmul.f32 %v1717, %v1870
  %v1903 = vmul.f32 %v1719, %v1871
  %v1904 = vmul.f32 %v1721, %v1872
  %v1905 = vmul.f32 %v1723, %v1873
  %v1906 = vmul.f32 %v1725, %v1874
  %v1907 = vmul.f32 %v1727, %v1875
  %v1908 = vmul.f32 %v1729, %v1876
  %v1909 = vmul.f32 %v1731, %v1877
  %v1910 = vmul.f32 %v1733, %v1878
  %v1911 = vmul.f32 %v1735, %v1879
  %v1912 = vmul.f32 %v1737, %v1880
  %v1913 = vmul.f32 %v1739, %v1881
  %v1914 = vmul.f32 %v1741, %v1882
  %v1915 = vmul.f32 %v1743, %v1883
  %v1916 = vmul.f32 %v1745, %v1884
  %v1917 = vmul.f32 %v1747, %v1885
  %v1918 = vmul.f32 %v1749, %v1886
  %v1919 = vmul.f32 %v1751, %v1887
  %v1920 = vmul.f32 %v1753, %v1888
  %v1921 = vmul.f32 %v1755, %v1889
  %v1922 = vmul.f32 %v1757, %v1890
  %v1923 = vmul.f32 %v1759, %v1891
  %v1924 = vmul.f32 %v1761, %v1892
  %v1925 = vmul.f32 %v1763, %v1893
  %v1926 = vmul.f32 %v1765, %v1894
  %v1927 = vmul.f32 %v1767, %v1895
  %v1929 = vsel %vm1574, %v1896, 0
  %v1932 = vsel %vm1574, %v1897, 0
  %vm1934 = vcmask 1041408
  %v1936 = vsel %vm1934, %v111, 0
  %1938 = vmatprep.subr.mxu0 0.0
  %1939 = vmatpush1.msra.mxu0 %v110
  %1940 = vmatprep.subr.mxu0 0.0
  %1941 = vmatpush1.msra.mxu0 %v1936
  %1942 = vmatprep.subr.mxu0 0.0
  %1943 = vmatpush1.msra.mxu0 0.0
  %1944 = vmatprep.subr.mxu0 0.0
  %1945 = vmatpush1.msra.mxu0 0.0
  %1946 = vmatprep.subr.mxu0 0.0
  %1947 = vmatpush1.msra.mxu0 0.0
  %1948 = vmatprep.subr.mxu0 0.0
  %1949 = vmatpush1.msra.mxu0 0.0
  %1950 = vmatprep.subr.mxu0 0.0
  %1951 = vmatpush1.msra.mxu0 0.0
  %1952 = vmatprep.subr.mxu0 0.0
  %1953 = vmatpush1.msra.mxu0 0.0
  %1954 = vmatprep.subr.mxu0 0.0
  %1955 = vmatpush1.msra.mxu0 0.0
  %1956 = vmatprep.subr.mxu0 0.0
  %1957 = vmatpush1.msra.mxu0 0.0
  %1958 = vmatprep.subr.mxu0 0.0
  %1959 = vmatpush1.msra.mxu0 0.0
  %1960 = vmatprep.subr.mxu0 0.0
  %1961 = vmatpush1.msra.mxu0 0.0
  %1962 = vmatprep.subr.mxu0 0.0
  %1963 = vmatpush1.msra.mxu0 0.0
  %1964 = vmatprep.subr.mxu0 0.0
  %1965 = vmatpush1.msra.mxu0 0.0
  %1966 = vmatprep.subr.mxu0 0.0
  %1967 = vmatpush1.msra.mxu0 0.0
  %1968 = vmatprep.subr.mxu0 0.0
  %1969 = vmatpush1.msra.mxu0 0.0
  %1970 = vmatprep.subr.mxu0 0.0
  %1971 = vmatpush1.msra.mxu0 0.0
  %1972 = vmatprep.subr.mxu0 0.0
  %1973 = vmatpush1.msra.mxu0 0.0
  %1974 = vmatprep.subr.mxu0 0.0
  %1975 = vmatpush1.msra.mxu0 0.0
  %1976 = vmatprep.subr.mxu0 0.0
  %1977 = vmatpush1.msra.mxu0 0.0
  %1978 = vmatprep.subr.mxu0 0.0
  %1979 = vmatpush1.msra.mxu0 0.0
  %1980 = vmatprep.subr.mxu0 0.0
  %1981 = vmatpush1.msra.mxu0 0.0
  %1982 = vmatprep.subr.mxu0 0.0
  %1983 = vmatpush1.msra.mxu0 0.0
  %1984 = vmatprep.subr.mxu0 0.0
  %1985 = vmatpush1.msra.mxu0 0.0
  %1986 = vmatprep.subr.mxu0 0.0
  %1987 = vmatpush1.msra.mxu0 0.0
  %1988 = vmatprep.subr.mxu0 0.0
  %1989 = vmatpush1.msra.mxu0 0.0
  %1990 = vmatprep.subr.mxu0 0.0
  %1991 = vmatpush1.msra.mxu0 0.0
  %1992 = vmatprep.subr.mxu0 0.0
  %1993 = vmatpush1.msra.mxu0 0.0
  %1994 = vmatprep.subr.mxu0 0.0
  %1995 = vmatpush1.msra.mxu0 0.0
  %1996 = vmatprep.subr.mxu0 0.0
  %1997 = vmatpush1.msra.mxu0 0.0
  %1998 = vmatprep.subr.mxu0 0.0
  %1999 = vmatpush1.msra.mxu0 0.0
  %2000 = vmatprep.subr.mxu0 0.0
  %2001 = vmatpush1.msra.mxu0 0.0
  %2002 = vmatprep.mubr.f32.mxu0 0.0
  %2003 = vmatmul.mubr.f32.gmra.mrb[0].mxu0 %v1929
  %v2004 = vpop.f32.mrb[0].mxu0
  %v2005 = vadd.f32 0.0, %v2004
  %v2006 = vpop.f32.mrb[0].mxu0
  %2007 = vmatprep.mubr.f32.mxu0 0.0
  %2008 = vmatmul.mubr.f32.gmra.mrb[0].mxu0 %v1932
  %v2009 = vpop.f32.mrb[0].mxu0
  %v2010 = vadd.f32 0.0, %v2009
  %v2011 = vpop.f32.mrb[0].mxu0
  %2012 = vdwg.mxu0
  %v2014 = vsel %vm1574, %v1898, 0
  %v2017 = vsel %vm1574, %v1899, 0
  %v2020 = vsel %vm1934, %v113, 0
  %2022 = vmatprep.subr.mxu0 0.0
  %2023 = vmatpush1.msra.mxu0 %v112
  %2024 = vmatprep.subr.mxu0 0.0
  %2025 = vmatpush1.msra.mxu0 %v2020
  %2026 = vmatprep.subr.mxu0 0.0
  %2027 = vmatpush1.msra.mxu0 0.0
  %2028 = vmatprep.subr.mxu0 0.0
  %2029 = vmatpush1.msra.mxu0 0.0
  %2030 = vmatprep.subr.mxu0 0.0
  %2031 = vmatpush1.msra.mxu0 0.0
  %2032 = vmatprep.subr.mxu0 0.0
  %2033 = vmatpush1.msra.mxu0 0.0
  %2034 = vmatprep.subr.mxu0 0.0
  %2035 = vmatpush1.msra.mxu0 0.0
  %2036 = vmatprep.subr.mxu0 0.0
  %2037 = vmatpush1.msra.mxu0 0.0
  %2038 = vmatprep.subr.mxu0 0.0
  %2039 = vmatpush1.msra.mxu0 0.0
  %2040 = vmatprep.subr.mxu0 0.0
  %2041 = vmatpush1.msra.mxu0 0.0
  %2042 = vmatprep.subr.mxu0 0.0
  %2043 = vmatpush1.msra.mxu0 0.0
  %2044 = vmatprep.subr.mxu0 0.0
  %2045 = vmatpush1.msra.mxu0 0.0
  %2046 = vmatprep.subr.mxu0 0.0
  %2047 = vmatpush1.msra.mxu0 0.0
  %2048 = vmatprep.subr.mxu0 0.0
  %2049 = vmatpush1.msra.mxu0 0.0
  %2050 = vmatprep.subr.mxu0 0.0
  %2051 = vmatpush1.msra.mxu0 0.0
  %2052 = vmatprep.subr.mxu0 0.0
  %2053 = vmatpush1.msra.mxu0 0.0
  %2054 = vmatprep.subr.mxu0 0.0
  %2055 = vmatpush1.msra.mxu0 0.0
  %2056 = vmatprep.subr.mxu0 0.0
  %2057 = vmatpush1.msra.mxu0 0.0
  %2058 = vmatprep.subr.mxu0 0.0
  %2059 = vmatpush1.msra.mxu0 0.0
  %2060 = vmatprep.subr.mxu0 0.0
  %2061 = vmatpush1.msra.mxu0 0.0
  %2062 = vmatprep.subr.mxu0 0.0
  %2063 = vmatpush1.msra.mxu0 0.0
  %2064 = vmatprep.subr.mxu0 0.0
  %2065 = vmatpush1.msra.mxu0 0.0
  %2066 = vmatprep.subr.mxu0 0.0
  %2067 = vmatpush1.msra.mxu0 0.0
  %2068 = vmatprep.subr.mxu0 0.0
  %2069 = vmatpush1.msra.mxu0 0.0
  %2070 = vmatprep.subr.mxu0 0.0
  %2071 = vmatpush1.msra.mxu0 0.0
  %2072 = vmatprep.subr.mxu0 0.0
  %2073 = vmatpush1.msra.mxu0 0.0
  %2074 = vmatprep.subr.mxu0 0.0
  %2075 = vmatpush1.msra.mxu0 0.0
  %2076 = vmatprep.subr.mxu0 0.0
  %2077 = vmatpush1.msra.mxu0 0.0
  %2078 = vmatprep.subr.mxu0 0.0
  %2079 = vmatpush1.msra.mxu0 0.0
  %2080 = vmatprep.subr.mxu0 0.0
  %2081 = vmatpush1.msra.mxu0 0.0
  %2082 = vmatprep.subr.mxu0 0.0
  %2083 = vmatpush1.msra.mxu0 0.0
  %2084 = vmatprep.subr.mxu0 0.0
  %2085 = vmatpush1.msra.mxu0 0.0
  %2086 = vmatprep.mubr.f32.mxu0 0.0
  %2087 = vmatmul.mubr.f32.gmra.mrb[0].mxu0 %v2014
  %v2088 = vpop.f32.mrb[0].mxu0
  %v2089 = vadd.f32 0.0, %v2088
  %v2090 = vpop.f32.mrb[0].mxu0
  %2091 = vmatprep.mubr.f32.mxu0 0.0
  %2092 = vmatmul.mubr.f32.gmra.mrb[0].mxu0 %v2017
  %v2093 = vpop.f32.mrb[0].mxu0
  %v2094 = vadd.f32 0.0, %v2093
  %v2095 = vpop.f32.mrb[0].mxu0
  %2096 = vdwg.mxu0
  %v2098 = vsel %vm1574, %v1900, 0
  %v2101 = vsel %vm1574, %v1901, 0
  %v2104 = vsel %vm1934, %v115, 0
  %2106 = vmatprep.subr.mxu0 0.0
  %2107 = vmatpush1.msra.mxu0 %v114
  %2108 = vmatprep.subr.mxu0 0.0
  %2109 = vmatpush1.msra.mxu0 %v2104
  %2110 = vmatprep.subr.mxu0 0.0
  %2111 = vmatpush1.msra.mxu0 0.0
  %2112 = vmatprep.subr.mxu0 0.0
  %2113 = vmatpush1.msra.mxu0 0.0
  %2114 = vmatprep.subr.mxu0 0.0
  %2115 = vmatpush1.msra.mxu0 0.0
  %2116 = vmatprep.subr.mxu0 0.0
  %2117 = vmatpush1.msra.mxu0 0.0
  %2118 = vmatprep.subr.mxu0 0.0
  %2119 = vmatpush1.msra.mxu0 0.0
  %2120 = vmatprep.subr.mxu0 0.0
  %2121 = vmatpush1.msra.mxu0 0.0
  %2122 = vmatprep.subr.mxu0 0.0
  %2123 = vmatpush1.msra.mxu0 0.0
  %2124 = vmatprep.subr.mxu0 0.0
  %2125 = vmatpush1.msra.mxu0 0.0
  %2126 = vmatprep.subr.mxu0 0.0
  %2127 = vmatpush1.msra.mxu0 0.0
  %2128 = vmatprep.subr.mxu0 0.0
  %2129 = vmatpush1.msra.mxu0 0.0
  %2130 = vmatprep.subr.mxu0 0.0
  %2131 = vmatpush1.msra.mxu0 0.0
  %2132 = vmatprep.subr.mxu0 0.0
  %2133 = vmatpush1.msra.mxu0 0.0
  %2134 = vmatprep.subr.mxu0 0.0
  %2135 = vmatpush1.msra.mxu0 0.0
  %2136 = vmatprep.subr.mxu0 0.0
  %2137 = vmatpush1.msra.mxu0 0.0
  %2138 = vmatprep.subr.mxu0 0.0
  %2139 = vmatpush1.msra.mxu0 0.0
  %2140 = vmatprep.subr.mxu0 0.0
  %2141 = vmatpush1.msra.mxu0 0.0
  %2142 = vmatprep.subr.mxu0 0.0
  %2143 = vmatpush1.msra.mxu0 0.0
  %2144 = vmatprep.subr.mxu0 0.0
  %2145 = vmatpush1.msra.mxu0 0.0
  %2146 = vmatprep.subr.mxu0 0.0
  %2147 = vmatpush1.msra.mxu0 0.0
  %2148 = vmatprep.subr.mxu0 0.0
  %2149 = vmatpush1.msra.mxu0 0.0
  %2150 = vmatprep.subr.mxu0 0.0
  %2151 = vmatpush1.msra.mxu0 0.0
  %2152 = vmatprep.subr.mxu0 0.0
  %2153 = vmatpush1.msra.mxu0 0.0
  %2154 = vmatprep.subr.mxu0 0.0
  %2155 = vmatpush1.msra.mxu0 0.0
  %2156 = vmatprep.subr.mxu0 0.0
  %2157 = vmatpush1.msra.mxu0 0.0
  %2158 = vmatprep.subr.mxu0 0.0
  %2159 = vmatpush1.msra.mxu0 0.0
  %2160 = vmatprep.subr.mxu0 0.0
  %2161 = vmatpush1.msra.mxu0 0.0
  %2162 = vmatprep.subr.mxu0 0.0
  %2163 = vmatpush1.msra.mxu0 0.0
  %2164 = vmatprep.subr.mxu0 0.0
  %2165 = vmatpush1.msra.mxu0 0.0
  %2166 = vmatprep.subr.mxu0 0.0
  %2167 = vmatpush1.msra.mxu0 0.0
  %2168 = vmatprep.subr.mxu0 0.0
  %2169 = vmatpush1.msra.mxu0 0.0
  %2170 = vmatprep.mubr.f32.mxu0 0.0
  %2171 = vmatmul.mubr.f32.gmra.mrb[0].mxu0 %v2098
  %v2172 = vpop.f32.mrb[0].mxu0
  %v2173 = vadd.f32 0.0, %v2172
  %v2174 = vpop.f32.mrb[0].mxu0
  %2175 = vmatprep.mubr.f32.mxu0 0.0
  %2176 = vmatmul.mubr.f32.gmra.mrb[0].mxu0 %v2101
  %v2177 = vpop.f32.mrb[0].mxu0
  %v2178 = vadd.f32 0.0, %v2177
  %v2179 = vpop.f32.mrb[0].mxu0
  %2180 = vdwg.mxu0
  %v2182 = vsel %vm1574, %v1902, 0
  %v2185 = vsel %vm1574, %v1903, 0
  %v2188 = vsel %vm1934, %v117, 0
  %2190 = vmatprep.subr.mxu0 0.0
  %2191 = vmatpush1.msra.mxu0 %v116
  %2192 = vmatprep.subr.mxu0 0.0
  %2193 = vmatpush1.msra.mxu0 %v2188
  %2194 = vmatprep.subr.mxu0 0.0
  %2195 = vmatpush1.msra.mxu0 0.0
  %2196 = vmatprep.subr.mxu0 0.0
  %2197 = vmatpush1.msra.mxu0 0.0
  %2198 = vmatprep.subr.mxu0 0.0
  %2199 = vmatpush1.msra.mxu0 0.0
  %2200 = vmatprep.subr.mxu0 0.0
  %2201 = vmatpush1.msra.mxu0 0.0
  %2202 = vmatprep.subr.mxu0 0.0
  %2203 = vmatpush1.msra.mxu0 0.0
  %2204 = vmatprep.subr.mxu0 0.0
  %2205 = vmatpush1.msra.mxu0 0.0
  %2206 = vmatprep.subr.mxu0 0.0
  %2207 = vmatpush1.msra.mxu0 0.0
  %2208 = vmatprep.subr.mxu0 0.0
  %2209 = vmatpush1.msra.mxu0 0.0
  %2210 = vmatprep.subr.mxu0 0.0
  %2211 = vmatpush1.msra.mxu0 0.0
  %2212 = vmatprep.subr.mxu0 0.0
  %2213 = vmatpush1.msra.mxu0 0.0
  %2214 = vmatprep.subr.mxu0 0.0
  %2215 = vmatpush1.msra.mxu0 0.0
  %2216 = vmatprep.subr.mxu0 0.0
  %2217 = vmatpush1.msra.mxu0 0.0
  %2218 = vmatprep.subr.mxu0 0.0
  %2219 = vmatpush1.msra.mxu0 0.0
  %2220 = vmatprep.subr.mxu0 0.0
  %2221 = vmatpush1.msra.mxu0 0.0
  %2222 = vmatprep.subr.mxu0 0.0
  %2223 = vmatpush1.msra.mxu0 0.0
  %2224 = vmatprep.subr.mxu0 0.0
  %2225 = vmatpush1.msra.mxu0 0.0
  %2226 = vmatprep.subr.mxu0 0.0
  %2227 = vmatpush1.msra.mxu0 0.0
  %2228 = vmatprep.subr.mxu0 0.0
  %2229 = vmatpush1.msra.mxu0 0.0
  %2230 = vmatprep.subr.mxu0 0.0
  %2231 = vmatpush1.msra.mxu0 0.0
  %2232 = vmatprep.subr.mxu0 0.0
  %2233 = vmatpush1.msra.mxu0 0.0
  %2234 = vmatprep.subr.mxu0 0.0
  %2235 = vmatpush1.msra.mxu0 0.0
  %2236 = vmatprep.subr.mxu0 0.0
  %2237 = vmatpush1.msra.mxu0 0.0
  %2238 = vmatprep.subr.mxu0 0.0
  %2239 = vmatpush1.msra.mxu0 0.0
  %2240 = vmatprep.subr.mxu0 0.0
  %2241 = vmatpush1.msra.mxu0 0.0
  %2242 = vmatprep.subr.mxu0 0.0
  %2243 = vmatpush1.msra.mxu0 0.0
  %2244 = vmatprep.subr.mxu0 0.0
  %2245 = vmatpush1.msra.mxu0 0.0
  %2246 = vmatprep.subr.mxu0 0.0
  %2247 = vmatpush1.msra.mxu0 0.0
  %2248 = vmatprep.subr.mxu0 0.0
  %2249 = vmatpush1.msra.mxu0 0.0
  %2250 = vmatprep.subr.mxu0 0.0
  %2251 = vmatpush1.msra.mxu0 0.0
  %2252 = vmatprep.subr.mxu0 0.0
  %2253 = vmatpush1.msra.mxu0 0.0
  %2254 = vmatprep.mubr.f32.mxu0 0.0
  %2255 = vmatmul.mubr.f32.gmra.mrb[0].mxu0 %v2182
  %v2256 = vpop.f32.mrb[0].mxu0
  %v2257 = vadd.f32 0.0, %v2256
  %v2258 = vpop.f32.mrb[0].mxu0
  %2259 = vmatprep.mubr.f32.mxu0 0.0
  %2260 = vmatmul.mubr.f32.gmra.mrb[0].mxu0 %v2185
  %v2261 = vpop.f32.mrb[0].mxu0
  %v2262 = vadd.f32 0.0, %v2261
  %v2263 = vpop.f32.mrb[0].mxu0
  %2264 = vdwg.mxu0
  %v2266 = vsel %vm1574, %v1904, 0
  %v2269 = vsel %vm1574, %v1905, 0
  %v2272 = vsel %vm1934, %v119, 0
  %2274 = vmatprep.subr.mxu0 0.0
  %2275 = vmatpush1.msra.mxu0 %v118
  %2276 = vmatprep.subr.mxu0 0.0
  %2277 = vmatpush1.msra.mxu0 %v2272
  %2278 = vmatprep.subr.mxu0 0.0
  %2279 = vmatpush1.msra.mxu0 0.0
  %2280 = vmatprep.subr.mxu0 0.0
  %2281 = vmatpush1.msra.mxu0 0.0
  %2282 = vmatprep.subr.mxu0 0.0
  %2283 = vmatpush1.msra.mxu0 0.0
  %2284 = vmatprep.subr.mxu0 0.0
  %2285 = vmatpush1.msra.mxu0 0.0
  %2286 = vmatprep.subr.mxu0 0.0
  %2287 = vmatpush1.msra.mxu0 0.0
  %2288 = vmatprep.subr.mxu0 0.0
  %2289 = vmatpush1.msra.mxu0 0.0
  %2290 = vmatprep.subr.mxu0 0.0
  %2291 = vmatpush1.msra.mxu0 0.0
  %2292 = vmatprep.subr.mxu0 0.0
  %2293 = vmatpush1.msra.mxu0 0.0
  %2294 = vmatprep.subr.mxu0 0.0
  %2295 = vmatpush1.msra.mxu0 0.0
  %2296 = vmatprep.subr.mxu0 0.0
  %2297 = vmatpush1.msra.mxu0 0.0
  %2298 = vmatprep.subr.mxu0 0.0
  %2299 = vmatpush1.msra.mxu0 0.0
  %2300 = vmatprep.subr.mxu0 0.0
  %2301 = vmatpush1.msra.mxu0 0.0
  %2302 = vmatprep.subr.mxu0 0.0
  %2303 = vmatpush1.msra.mxu0 0.0
  %2304 = vmatprep.subr.mxu0 0.0
  %2305 = vmatpush1.msra.mxu0 0.0
  %2306 = vmatprep.subr.mxu0 0.0
  %2307 = vmatpush1.msra.mxu0 0.0
  %2308 = vmatprep.subr.mxu0 0.0
  %2309 = vmatpush1.msra.mxu0 0.0
  %2310 = vmatprep.subr.mxu0 0.0
  %2311 = vmatpush1.msra.mxu0 0.0
  %2312 = vmatprep.subr.mxu0 0.0
  %2313 = vmatpush1.msra.mxu0 0.0
  %2314 = vmatprep.subr.mxu0 0.0
  %2315 = vmatpush1.msra.mxu0 0.0
  %2316 = vmatprep.subr.mxu0 0.0
  %2317 = vmatpush1.msra.mxu0 0.0
  %2318 = vmatprep.subr.mxu0 0.0
  %2319 = vmatpush1.msra.mxu0 0.0
  %2320 = vmatprep.subr.mxu0 0.0
  %2321 = vmatpush1.msra.mxu0 0.0
  %2322 = vmatprep.subr.mxu0 0.0
  %2323 = vmatpush1.msra.mxu0 0.0
  %2324 = vmatprep.subr.mxu0 0.0
  %2325 = vmatpush1.msra.mxu0 0.0
  %2326 = vmatprep.subr.mxu0 0.0
  %2327 = vmatpush1.msra.mxu0 0.0
  %2328 = vmatprep.subr.mxu0 0.0
  %2329 = vmatpush1.msra.mxu0 0.0
  %2330 = vmatprep.subr.mxu0 0.0
  %2331 = vmatpush1.msra.mxu0 0.0
  %2332 = vmatprep.subr.mxu0 0.0
  %2333 = vmatpush1.msra.mxu0 0.0
  %2334 = vmatprep.subr.mxu0 0.0
  %2335 = vmatpush1.msra.mxu0 0.0
  %2336 = vmatprep.subr.mxu0 0.0
  %2337 = vmatpush1.msra.mxu0 0.0
  %2338 = vmatprep.mubr.f32.mxu0 0.0
  %2339 = vmatmul.mubr.f32.gmra.mrb[0].mxu0 %v2266
  %v2340 = vpop.f32.mrb[0].mxu0
  %v2341 = vadd.f32 0.0, %v2340
  %v2342 = vpop.f32.mrb[0].mxu0
  %2343 = vmatprep.mubr.f32.mxu0 0.0
  %2344 = vmatmul.mubr.f32.gmra.mrb[0].mxu0 %v2269
  %v2345 = vpop.f32.mrb[0].mxu0
  %v2346 = vadd.f32 0.0, %v2345
  %v2347 = vpop.f32.mrb[0].mxu0
  %2348 = vdwg.mxu0
  %v2350 = vsel %vm1574, %v1906, 0
  %v2353 = vsel %vm1574, %v1907, 0
  %v2356 = vsel %vm1934, %v121, 0
  %2358 = vmatprep.subr.mxu0 0.0
  %2359 = vmatpush1.msra.mxu0 %v120
  %2360 = vmatprep.subr.mxu0 0.0
  %2361 = vmatpush1.msra.mxu0 %v2356
  %2362 = vmatprep.subr.mxu0 0.0
  %2363 = vmatpush1.msra.mxu0 0.0
  %2364 = vmatprep.subr.mxu0 0.0
  %2365 = vmatpush1.msra.mxu0 0.0
  %2366 = vmatprep.subr.mxu0 0.0
  %2367 = vmatpush1.msra.mxu0 0.0
  %2368 = vmatprep.subr.mxu0 0.0
  %2369 = vmatpush1.msra.mxu0 0.0
  %2370 = vmatprep.subr.mxu0 0.0
  %2371 = vmatpush1.msra.mxu0 0.0
  %2372 = vmatprep.subr.mxu0 0.0
  %2373 = vmatpush1.msra.mxu0 0.0
  %2374 = vmatprep.subr.mxu0 0.0
  %2375 = vmatpush1.msra.mxu0 0.0
  %2376 = vmatprep.subr.mxu0 0.0
  %2377 = vmatpush1.msra.mxu0 0.0
  %2378 = vmatprep.subr.mxu0 0.0
  %2379 = vmatpush1.msra.mxu0 0.0
  %2380 = vmatprep.subr.mxu0 0.0
  %2381 = vmatpush1.msra.mxu0 0.0
  %2382 = vmatprep.subr.mxu0 0.0
  %2383 = vmatpush1.msra.mxu0 0.0
  %2384 = vmatprep.subr.mxu0 0.0
  %2385 = vmatpush1.msra.mxu0 0.0
  %2386 = vmatprep.subr.mxu0 0.0
  %2387 = vmatpush1.msra.mxu0 0.0
  %2388 = vmatprep.subr.mxu0 0.0
  %2389 = vmatpush1.msra.mxu0 0.0
  %2390 = vmatprep.subr.mxu0 0.0
  %2391 = vmatpush1.msra.mxu0 0.0
  %2392 = vmatprep.subr.mxu0 0.0
  %2393 = vmatpush1.msra.mxu0 0.0
  %2394 = vmatprep.subr.mxu0 0.0
  %2395 = vmatpush1.msra.mxu0 0.0
  %2396 = vmatprep.subr.mxu0 0.0
  %2397 = vmatpush1.msra.mxu0 0.0
  %2398 = vmatprep.subr.mxu0 0.0
  %2399 = vmatpush1.msra.mxu0 0.0
  %2400 = vmatprep.subr.mxu0 0.0
  %2401 = vmatpush1.msra.mxu0 0.0
  %2402 = vmatprep.subr.mxu0 0.0
  %2403 = vmatpush1.msra.mxu0 0.0
  %2404 = vmatprep.subr.mxu0 0.0
  %2405 = vmatpush1.msra.mxu0 0.0
  %2406 = vmatprep.subr.mxu0 0.0
  %2407 = vmatpush1.msra.mxu0 0.0
  %2408 = vmatprep.subr.mxu0 0.0
  %2409 = vmatpush1.msra.mxu0 0.0
  %2410 = vmatprep.subr.mxu0 0.0
  %2411 = vmatpush1.msra.mxu0 0.0
  %2412 = vmatprep.subr.mxu0 0.0
  %2413 = vmatpush1.msra.mxu0 0.0
  %2414 = vmatprep.subr.mxu0 0.0
  %2415 = vmatpush1.msra.mxu0 0.0
  %2416 = vmatprep.subr.mxu0 0.0
  %2417 = vmatpush1.msra.mxu0 0.0
  %2418 = vmatprep.subr.mxu0 0.0
  %2419 = vmatpush1.msra.mxu0 0.0
  %2420 = vmatprep.subr.mxu0 0.0
  %2421 = vmatpush1.msra.mxu0 0.0
  %2422 = vmatprep.mubr.f32.mxu0 0.0
  %2423 = vmatmul.mubr.f32.gmra.mrb[0].mxu0 %v2350
  %v2424 = vpop.f32.mrb[0].mxu0
  %v2425 = vadd.f32 0.0, %v2424
  %v2426 = vpop.f32.mrb[0].mxu0
  %2427 = vmatprep.mubr.f32.mxu0 0.0
  %2428 = vmatmul.mubr.f32.gmra.mrb[0].mxu0 %v2353
  %v2429 = vpop.f32.mrb[0].mxu0
  %v2430 = vadd.f32 0.0, %v2429
  %v2431 = vpop.f32.mrb[0].mxu0
  %2432 = vdwg.mxu0
  %v2434 = vsel %vm1574, %v1908, 0
  %v2437 = vsel %vm1574, %v1909, 0
  %v2440 = vsel %vm1934, %v123, 0
  %2442 = vmatprep.subr.mxu0 0.0
  %2443 = vmatpush1.msra.mxu0 %v122
  %2444 = vmatprep.subr.mxu0 0.0
  %2445 = vmatpush1.msra.mxu0 %v2440
  %2446 = vmatprep.subr.mxu0 0.0
  %2447 = vmatpush1.msra.mxu0 0.0
  %2448 = vmatprep.subr.mxu0 0.0
  %2449 = vmatpush1.msra.mxu0 0.0
  %2450 = vmatprep.subr.mxu0 0.0
  %2451 = vmatpush1.msra.mxu0 0.0
  %2452 = vmatprep.subr.mxu0 0.0
  %2453 = vmatpush1.msra.mxu0 0.0
  %2454 = vmatprep.subr.mxu0 0.0
  %2455 = vmatpush1.msra.mxu0 0.0
  %2456 = vmatprep.subr.mxu0 0.0
  %2457 = vmatpush1.msra.mxu0 0.0
  %2458 = vmatprep.subr.mxu0 0.0
  %2459 = vmatpush1.msra.mxu0 0.0
  %2460 = vmatprep.subr.mxu0 0.0
  %2461 = vmatpush1.msra.mxu0 0.0
  %2462 = vmatprep.subr.mxu0 0.0
  %2463 = vmatpush1.msra.mxu0 0.0
  %2464 = vmatprep.subr.mxu0 0.0
  %2465 = vmatpush1.msra.mxu0 0.0
  %2466 = vmatprep.subr.mxu0 0.0
  %2467 = vmatpush1.msra.mxu0 0.0
  %2468 = vmatprep.subr.mxu0 0.0
  %2469 = vmatpush1.msra.mxu0 0.0
  %2470 = vmatprep.subr.mxu0 0.0
  %2471 = vmatpush1.msra.mxu0 0.0
  %2472 = vmatprep.subr.mxu0 0.0
  %2473 = vmatpush1.msra.mxu0 0.0
  %2474 = vmatprep.subr.mxu0 0.0
  %2475 = vmatpush1.msra.mxu0 0.0
  %2476 = vmatprep.subr.mxu0 0.0
  %2477 = vmatpush1.msra.mxu0 0.0
  %2478 = vmatprep.subr.mxu0 0.0
  %2479 = vmatpush1.msra.mxu0 0.0
  %2480 = vmatprep.subr.mxu0 0.0
  %2481 = vmatpush1.msra.mxu0 0.0
  %2482 = vmatprep.subr.mxu0 0.0
  %2483 = vmatpush1.msra.mxu0 0.0
  %2484 = vmatprep.subr.mxu0 0.0
  %2485 = vmatpush1.msra.mxu0 0.0
  %2486 = vmatprep.subr.mxu0 0.0
  %2487 = vmatpush1.msra.mxu0 0.0
  %2488 = vmatprep.subr.mxu0 0.0
  %2489 = vmatpush1.msra.mxu0 0.0
  %2490 = vmatprep.subr.mxu0 0.0
  %2491 = vmatpush1.msra.mxu0 0.0
  %2492 = vmatprep.subr.mxu0 0.0
  %2493 = vmatpush1.msra.mxu0 0.0
  %2494 = vmatprep.subr.mxu0 0.0
  %2495 = vmatpush1.msra.mxu0 0.0
  %2496 = vmatprep.subr.mxu0 0.0
  %2497 = vmatpush1.msra.mxu0 0.0
  %2498 = vmatprep.subr.mxu0 0.0
  %2499 = vmatpush1.msra.mxu0 0.0
  %2500 = vmatprep.subr.mxu0 0.0
  %2501 = vmatpush1.msra.mxu0 0.0
  %2502 = vmatprep.subr.mxu0 0.0
  %2503 = vmatpush1.msra.mxu0 0.0
  %2504 = vmatprep.subr.mxu0 0.0
  %2505 = vmatpush1.msra.mxu0 0.0
  %2506 = vmatprep.mubr.f32.mxu0 0.0
  %2507 = vmatmul.mubr.f32.gmra.mrb[0].mxu0 %v2434
  %v2508 = vpop.f32.mrb[0].mxu0
  %v2509 = vadd.f32 0.0, %v2508
  %v2510 = vpop.f32.mrb[0].mxu0
  %2511 = vmatprep.mubr.f32.mxu0 0.0
  %2512 = vmatmul.mubr.f32.gmra.mrb[0].mxu0 %v2437
  %v2513 = vpop.f32.mrb[0].mxu0
  %v2514 = vadd.f32 0.0, %v2513
  %v2515 = vpop.f32.mrb[0].mxu0
  %2516 = vdwg.mxu0
  %v2518 = vsel %vm1574, %v1910, 0
  %v2521 = vsel %vm1574, %v1911, 0
  %v2524 = vsel %vm1934, %v125, 0
  %2526 = vmatprep.subr.mxu0 0.0
  %2527 = vmatpush1.msra.mxu0 %v124
  %2528 = vmatprep.subr.mxu0 0.0
  %2529 = vmatpush1.msra.mxu0 %v2524
  %2530 = vmatprep.subr.mxu0 0.0
  %2531 = vmatpush1.msra.mxu0 0.0
  %2532 = vmatprep.subr.mxu0 0.0
  %2533 = vmatpush1.msra.mxu0 0.0
  %2534 = vmatprep.subr.mxu0 0.0
  %2535 = vmatpush1.msra.mxu0 0.0
  %2536 = vmatprep.subr.mxu0 0.0
  %2537 = vmatpush1.msra.mxu0 0.0
  %2538 = vmatprep.subr.mxu0 0.0
  %2539 = vmatpush1.msra.mxu0 0.0
  %2540 = vmatprep.subr.mxu0 0.0
  %2541 = vmatpush1.msra.mxu0 0.0
  %2542 = vmatprep.subr.mxu0 0.0
  %2543 = vmatpush1.msra.mxu0 0.0
  %2544 = vmatprep.subr.mxu0 0.0
  %2545 = vmatpush1.msra.mxu0 0.0
  %2546 = vmatprep.subr.mxu0 0.0
  %2547 = vmatpush1.msra.mxu0 0.0
  %2548 = vmatprep.subr.mxu0 0.0
  %2549 = vmatpush1.msra.mxu0 0.0
  %2550 = vmatprep.subr.mxu0 0.0
  %2551 = vmatpush1.msra.mxu0 0.0
  %2552 = vmatprep.subr.mxu0 0.0
  %2553 = vmatpush1.msra.mxu0 0.0
  %2554 = vmatprep.subr.mxu0 0.0
  %2555 = vmatpush1.msra.mxu0 0.0
  %2556 = vmatprep.subr.mxu0 0.0
  %2557 = vmatpush1.msra.mxu0 0.0
  %2558 = vmatprep.subr.mxu0 0.0
  %2559 = vmatpush1.msra.mxu0 0.0
  %2560 = vmatprep.subr.mxu0 0.0
  %2561 = vmatpush1.msra.mxu0 0.0
  %2562 = vmatprep.subr.mxu0 0.0
  %2563 = vmatpush1.msra.mxu0 0.0
  %2564 = vmatprep.subr.mxu0 0.0
  %2565 = vmatpush1.msra.mxu0 0.0
  %2566 = vmatprep.subr.mxu0 0.0
  %2567 = vmatpush1.msra.mxu0 0.0
  %2568 = vmatprep.subr.mxu0 0.0
  %2569 = vmatpush1.msra.mxu0 0.0
  %2570 = vmatprep.subr.mxu0 0.0
  %2571 = vmatpush1.msra.mxu0 0.0
  %2572 = vmatprep.subr.mxu0 0.0
  %2573 = vmatpush1.msra.mxu0 0.0
  %2574 = vmatprep.subr.mxu0 0.0
  %2575 = vmatpush1.msra.mxu0 0.0
  %2576 = vmatprep.subr.mxu0 0.0
  %2577 = vmatpush1.msra.mxu0 0.0
  %2578 = vmatprep.subr.mxu0 0.0
  %2579 = vmatpush1.msra.mxu0 0.0
  %2580 = vmatprep.subr.mxu0 0.0
  %2581 = vmatpush1.msra.mxu0 0.0
  %2582 = vmatprep.subr.mxu0 0.0
  %2583 = vmatpush1.msra.mxu0 0.0
  %2584 = vmatprep.subr.mxu0 0.0
  %2585 = vmatpush1.msra.mxu0 0.0
  %2586 = vmatprep.subr.mxu0 0.0
  %2587 = vmatpush1.msra.mxu0 0.0
  %2588 = vmatprep.subr.mxu0 0.0
  %2589 = vmatpush1.msra.mxu0 0.0
  %2590 = vmatprep.mubr.f32.mxu0 0.0
  %2591 = vmatmul.mubr.f32.gmra.mrb[0].mxu0 %v2518
  %v2592 = vpop.f32.mrb[0].mxu0
  %v2593 = vadd.f32 0.0, %v2592
  %v2594 = vpop.f32.mrb[0].mxu0
  %2595 = vmatprep.mubr.f32.mxu0 0.0
  %2596 = vmatmul.mubr.f32.gmra.mrb[0].mxu0 %v2521
  %v2597 = vpop.f32.mrb[0].mxu0
  %v2598 = vadd.f32 0.0, %v2597
  %v2599 = vpop.f32.mrb[0].mxu0
  %2600 = vdwg.mxu0
  %v2602 = vsel %vm1574, %v1912, 0
  %v2605 = vsel %vm1574, %v1913, 0
  %v2608 = vsel %vm1934, %v127, 0
  %2610 = vmatprep.subr.mxu0 0.0
  %2611 = vmatpush1.msra.mxu0 %v126
  %2612 = vmatprep.subr.mxu0 0.0
  %2613 = vmatpush1.msra.mxu0 %v2608
  %2614 = vmatprep.subr.mxu0 0.0
  %2615 = vmatpush1.msra.mxu0 0.0
  %2616 = vmatprep.subr.mxu0 0.0
  %2617 = vmatpush1.msra.mxu0 0.0
  %2618 = vmatprep.subr.mxu0 0.0
  %2619 = vmatpush1.msra.mxu0 0.0
  %2620 = vmatprep.subr.mxu0 0.0
  %2621 = vmatpush1.msra.mxu0 0.0
  %2622 = vmatprep.subr.mxu0 0.0
  %2623 = vmatpush1.msra.mxu0 0.0
  %2624 = vmatprep.subr.mxu0 0.0
  %2625 = vmatpush1.msra.mxu0 0.0
  %2626 = vmatprep.subr.mxu0 0.0
  %2627 = vmatpush1.msra.mxu0 0.0
  %2628 = vmatprep.subr.mxu0 0.0
  %2629 = vmatpush1.msra.mxu0 0.0
  %2630 = vmatprep.subr.mxu0 0.0
  %2631 = vmatpush1.msra.mxu0 0.0
  %2632 = vmatprep.subr.mxu0 0.0
  %2633 = vmatpush1.msra.mxu0 0.0
  %2634 = vmatprep.subr.mxu0 0.0
  %2635 = vmatpush1.msra.mxu0 0.0
  %2636 = vmatprep.subr.mxu0 0.0
  %2637 = vmatpush1.msra.mxu0 0.0
  %2638 = vmatprep.subr.mxu0 0.0
  %2639 = vmatpush1.msra.mxu0 0.0
  %2640 = vmatprep.subr.mxu0 0.0
  %2641 = vmatpush1.msra.mxu0 0.0
  %2642 = vmatprep.subr.mxu0 0.0
  %2643 = vmatpush1.msra.mxu0 0.0
  %2644 = vmatprep.subr.mxu0 0.0
  %2645 = vmatpush1.msra.mxu0 0.0
  %2646 = vmatprep.subr.mxu0 0.0
  %2647 = vmatpush1.msra.mxu0 0.0
  %2648 = vmatprep.subr.mxu0 0.0
  %2649 = vmatpush1.msra.mxu0 0.0
  %2650 = vmatprep.subr.mxu0 0.0
  %2651 = vmatpush1.msra.mxu0 0.0
  %2652 = vmatprep.subr.mxu0 0.0
  %2653 = vmatpush1.msra.mxu0 0.0
  %2654 = vmatprep.subr.mxu0 0.0
  %2655 = vmatpush1.msra.mxu0 0.0
  %2656 = vmatprep.subr.mxu0 0.0
  %2657 = vmatpush1.msra.mxu0 0.0
  %2658 = vmatprep.subr.mxu0 0.0
  %2659 = vmatpush1.msra.mxu0 0.0
  %2660 = vmatprep.subr.mxu0 0.0
  %2661 = vmatpush1.msra.mxu0 0.0
  %2662 = vmatprep.subr.mxu0 0.0
  %2663 = vmatpush1.msra.mxu0 0.0
  %2664 = vmatprep.subr.mxu0 0.0
  %2665 = vmatpush1.msra.mxu0 0.0
  %2666 = vmatprep.subr.mxu0 0.0
  %2667 = vmatpush1.msra.mxu0 0.0
  %2668 = vmatprep.subr.mxu0 0.0
  %2669 = vmatpush1.msra.mxu0 0.0
  %2670 = vmatprep.subr.mxu0 0.0
  %2671 = vmatpush1.msra.mxu0 0.0
  %2672 = vmatprep.subr.mxu0 0.0
  %2673 = vmatpush1.msra.mxu0 0.0
  %2674 = vmatprep.mubr.f32.mxu0 0.0
  %2675 = vmatmul.mubr.f32.gmra.mrb[0].mxu0 %v2602
  %v2676 = vpop.f32.mrb[0].mxu0
  %v2677 = vadd.f32 0.0, %v2676
  %v2678 = vpop.f32.mrb[0].mxu0
  %2679 = vmatprep.mubr.f32.mxu0 0.0
  %2680 = vmatmul.mubr.f32.gmra.mrb[0].mxu0 %v2605
  %v2681 = vpop.f32.mrb[0].mxu0
  %v2682 = vadd.f32 0.0, %v2681
  %v2683 = vpop.f32.mrb[0].mxu0
  %2684 = vdwg.mxu0
  %v2686 = vsel %vm1574, %v1914, 0
  %v2689 = vsel %vm1574, %v1915, 0
  %v2692 = vsel %vm1934, %v129, 0
  %2694 = vmatprep.subr.mxu0 0.0
  %2695 = vmatpush1.msra.mxu0 %v128
  %2696 = vmatprep.subr.mxu0 0.0
  %2697 = vmatpush1.msra.mxu0 %v2692
  %2698 = vmatprep.subr.mxu0 0.0
  %2699 = vmatpush1.msra.mxu0 0.0
  %2700 = vmatprep.subr.mxu0 0.0
  %2701 = vmatpush1.msra.mxu0 0.0
  %2702 = vmatprep.subr.mxu0 0.0
  %2703 = vmatpush1.msra.mxu0 0.0
  %2704 = vmatprep.subr.mxu0 0.0
  %2705 = vmatpush1.msra.mxu0 0.0
  %2706 = vmatprep.subr.mxu0 0.0
  %2707 = vmatpush1.msra.mxu0 0.0
  %2708 = vmatprep.subr.mxu0 0.0
  %2709 = vmatpush1.msra.mxu0 0.0
  %2710 = vmatprep.subr.mxu0 0.0
  %2711 = vmatpush1.msra.mxu0 0.0
  %2712 = vmatprep.subr.mxu0 0.0
  %2713 = vmatpush1.msra.mxu0 0.0
  %2714 = vmatprep.subr.mxu0 0.0
  %2715 = vmatpush1.msra.mxu0 0.0
  %2716 = vmatprep.subr.mxu0 0.0
  %2717 = vmatpush1.msra.mxu0 0.0
  %2718 = vmatprep.subr.mxu0 0.0
  %2719 = vmatpush1.msra.mxu0 0.0
  %2720 = vmatprep.subr.mxu0 0.0
  %2721 = vmatpush1.msra.mxu0 0.0
  %2722 = vmatprep.subr.mxu0 0.0
  %2723 = vmatpush1.msra.mxu0 0.0
  %2724 = vmatprep.subr.mxu0 0.0
  %2725 = vmatpush1.msra.mxu0 0.0
  %2726 = vmatprep.subr.mxu0 0.0
  %2727 = vmatpush1.msra.mxu0 0.0
  %2728 = vmatprep.subr.mxu0 0.0
  %2729 = vmatpush1.msra.mxu0 0.0
  %2730 = vmatprep.subr.mxu0 0.0
  %2731 = vmatpush1.msra.mxu0 0.0
  %2732 = vmatprep.subr.mxu0 0.0
  %2733 = vmatpush1.msra.mxu0 0.0
  %2734 = vmatprep.subr.mxu0 0.0
  %2735 = vmatpush1.msra.mxu0 0.0
  %2736 = vmatprep.subr.mxu0 0.0
  %2737 = vmatpush1.msra.mxu0 0.0
  %2738 = vmatprep.subr.mxu0 0.0
  %2739 = vmatpush1.msra.mxu0 0.0
  %2740 = vmatprep.subr.mxu0 0.0
  %2741 = vmatpush1.msra.mxu0 0.0
  %2742 = vmatprep.subr.mxu0 0.0
  %2743 = vmatpush1.msra.mxu0 0.0
  %2744 = vmatprep.subr.mxu0 0.0
  %2745 = vmatpush1.msra.mxu0 0.0
  %2746 = vmatprep.subr.mxu0 0.0
  %2747 = vmatpush1.msra.mxu0 0.0
  %2748 = vmatprep.subr.mxu0 0.0
  %2749 = vmatpush1.msra.mxu0 0.0
  %2750 = vmatprep.subr.mxu0 0.0
  %2751 = vmatpush1.msra.mxu0 0.0
  %2752 = vmatprep.subr.mxu0 0.0
  %2753 = vmatpush1.msra.mxu0 0.0
  %2754 = vmatprep.subr.mxu0 0.0
  %2755 = vmatpush1.msra.mxu0 0.0
  %2756 = vmatprep.subr.mxu0 0.0
  %2757 = vmatpush1.msra.mxu0 0.0
  %2758 = vmatprep.mubr.f32.mxu0 0.0
  %2759 = vmatmul.mubr.f32.gmra.mrb[0].mxu0 %v2686
  %v2760 = vpop.f32.mrb[0].mxu0
  %v2761 = vadd.f32 0.0, %v2760
  %v2762 = vpop.f32.mrb[0].mxu0
  %2763 = vmatprep.mubr.f32.mxu0 0.0
  %2764 = vmatmul.mubr.f32.gmra.mrb[0].mxu0 %v2689
  %v2765 = vpop.f32.mrb[0].mxu0
  %v2766 = vadd.f32 0.0, %v2765
  %v2767 = vpop.f32.mrb[0].mxu0
  %2768 = vdwg.mxu0
  %v2770 = vsel %vm1574, %v1916, 0
  %v2773 = vsel %vm1574, %v1917, 0
  %v2776 = vsel %vm1934, %v131, 0
  %2778 = vmatprep.subr.mxu0 0.0
  %2779 = vmatpush1.msra.mxu0 %v130
  %2780 = vmatprep.subr.mxu0 0.0
  %2781 = vmatpush1.msra.mxu0 %v2776
  %2782 = vmatprep.subr.mxu0 0.0
  %2783 = vmatpush1.msra.mxu0 0.0
  %2784 = vmatprep.subr.mxu0 0.0
  %2785 = vmatpush1.msra.mxu0 0.0
  %2786 = vmatprep.subr.mxu0 0.0
  %2787 = vmatpush1.msra.mxu0 0.0
  %2788 = vmatprep.subr.mxu0 0.0
  %2789 = vmatpush1.msra.mxu0 0.0
  %2790 = vmatprep.subr.mxu0 0.0
  %2791 = vmatpush1.msra.mxu0 0.0
  %2792 = vmatprep.subr.mxu0 0.0
  %2793 = vmatpush1.msra.mxu0 0.0
  %2794 = vmatprep.subr.mxu0 0.0
  %2795 = vmatpush1.msra.mxu0 0.0
  %2796 = vmatprep.subr.mxu0 0.0
  %2797 = vmatpush1.msra.mxu0 0.0
  %2798 = vmatprep.subr.mxu0 0.0
  %2799 = vmatpush1.msra.mxu0 0.0
  %2800 = vmatprep.subr.mxu0 0.0
  %2801 = vmatpush1.msra.mxu0 0.0
  %2802 = vmatprep.subr.mxu0 0.0
  %2803 = vmatpush1.msra.mxu0 0.0
  %2804 = vmatprep.subr.mxu0 0.0
  %2805 = vmatpush1.msra.mxu0 0.0
  %2806 = vmatprep.subr.mxu0 0.0
  %2807 = vmatpush1.msra.mxu0 0.0
  %2808 = vmatprep.subr.mxu0 0.0
  %2809 = vmatpush1.msra.mxu0 0.0
  %2810 = vmatprep.subr.mxu0 0.0
  %2811 = vmatpush1.msra.mxu0 0.0
  %2812 = vmatprep.subr.mxu0 0.0
  %2813 = vmatpush1.msra.mxu0 0.0
  %2814 = vmatprep.subr.mxu0 0.0
  %2815 = vmatpush1.msra.mxu0 0.0
  %2816 = vmatprep.subr.mxu0 0.0
  %2817 = vmatpush1.msra.mxu0 0.0
  %2818 = vmatprep.subr.mxu0 0.0
  %2819 = vmatpush1.msra.mxu0 0.0
  %2820 = vmatprep.subr.mxu0 0.0
  %2821 = vmatpush1.msra.mxu0 0.0
  %2822 = vmatprep.subr.mxu0 0.0
  %2823 = vmatpush1.msra.mxu0 0.0
  %2824 = vmatprep.subr.mxu0 0.0
  %2825 = vmatpush1.msra.mxu0 0.0
  %2826 = vmatprep.subr.mxu0 0.0
  %2827 = vmatpush1.msra.mxu0 0.0
  %2828 = vmatprep.subr.mxu0 0.0
  %2829 = vmatpush1.msra.mxu0 0.0
  %2830 = vmatprep.subr.mxu0 0.0
  %2831 = vmatpush1.msra.mxu0 0.0
  %2832 = vmatprep.subr.mxu0 0.0
  %2833 = vmatpush1.msra.mxu0 0.0
  %2834 = vmatprep.subr.mxu0 0.0
  %2835 = vmatpush1.msra.mxu0 0.0
  %2836 = vmatprep.subr.mxu0 0.0
  %2837 = vmatpush1.msra.mxu0 0.0
  %2838 = vmatprep.subr.mxu0 0.0
  %2839 = vmatpush1.msra.mxu0 0.0
  %2840 = vmatprep.subr.mxu0 0.0
  %2841 = vmatpush1.msra.mxu0 0.0
  %2842 = vmatprep.mubr.f32.mxu0 0.0
  %2843 = vmatmul.mubr.f32.gmra.mrb[0].mxu0 %v2770
  %v2844 = vpop.f32.mrb[0].mxu0
  %v2845 = vadd.f32 0.0, %v2844
  %v2846 = vpop.f32.mrb[0].mxu0
  %2847 = vmatprep.mubr.f32.mxu0 0.0
  %2848 = vmatmul.mubr.f32.gmra.mrb[0].mxu0 %v2773
  %v2849 = vpop.f32.mrb[0].mxu0
  %v2850 = vadd.f32 0.0, %v2849
  %v2851 = vpop.f32.mrb[0].mxu0
  %2852 = vdwg.mxu0
  %v2854 = vsel %vm1574, %v1918, 0
  %v2857 = vsel %vm1574, %v1919, 0
  %v2860 = vsel %vm1934, %v133, 0
  %2862 = vmatprep.subr.mxu0 0.0
  %2863 = vmatpush1.msra.mxu0 %v132
  %2864 = vmatprep.subr.mxu0 0.0
  %2865 = vmatpush1.msra.mxu0 %v2860
  %2866 = vmatprep.subr.mxu0 0.0
  %2867 = vmatpush1.msra.mxu0 0.0
  %2868 = vmatprep.subr.mxu0 0.0
  %2869 = vmatpush1.msra.mxu0 0.0
  %2870 = vmatprep.subr.mxu0 0.0
  %2871 = vmatpush1.msra.mxu0 0.0
  %2872 = vmatprep.subr.mxu0 0.0
  %2873 = vmatpush1.msra.mxu0 0.0
  %2874 = vmatprep.subr.mxu0 0.0
  %2875 = vmatpush1.msra.mxu0 0.0
  %2876 = vmatprep.subr.mxu0 0.0
  %2877 = vmatpush1.msra.mxu0 0.0
  %2878 = vmatprep.subr.mxu0 0.0
  %2879 = vmatpush1.msra.mxu0 0.0
  %2880 = vmatprep.subr.mxu0 0.0
  %2881 = vmatpush1.msra.mxu0 0.0
  %2882 = vmatprep.subr.mxu0 0.0
  %2883 = vmatpush1.msra.mxu0 0.0
  %2884 = vmatprep.subr.mxu0 0.0
  %2885 = vmatpush1.msra.mxu0 0.0
  %2886 = vmatprep.subr.mxu0 0.0
  %2887 = vmatpush1.msra.mxu0 0.0
  %2888 = vmatprep.subr.mxu0 0.0
  %2889 = vmatpush1.msra.mxu0 0.0
  %2890 = vmatprep.subr.mxu0 0.0
  %2891 = vmatpush1.msra.mxu0 0.0
  %2892 = vmatprep.subr.mxu0 0.0
  %2893 = vmatpush1.msra.mxu0 0.0
  %2894 = vmatprep.subr.mxu0 0.0
  %2895 = vmatpush1.msra.mxu0 0.0
  %2896 = vmatprep.subr.mxu0 0.0
  %2897 = vmatpush1.msra.mxu0 0.0
  %2898 = vmatprep.subr.mxu0 0.0
  %2899 = vmatpush1.msra.mxu0 0.0
  %2900 = vmatprep.subr.mxu0 0.0
  %2901 = vmatpush1.msra.mxu0 0.0
  %2902 = vmatprep.subr.mxu0 0.0
  %2903 = vmatpush1.msra.mxu0 0.0
  %2904 = vmatprep.subr.mxu0 0.0
  %2905 = vmatpush1.msra.mxu0 0.0
  %2906 = vmatprep.subr.mxu0 0.0
  %2907 = vmatpush1.msra.mxu0 0.0
  %2908 = vmatprep.subr.mxu0 0.0
  %2909 = vmatpush1.msra.mxu0 0.0
  %2910 = vmatprep.subr.mxu0 0.0
  %2911 = vmatpush1.msra.mxu0 0.0
  %2912 = vmatprep.subr.mxu0 0.0
  %2913 = vmatpush1.msra.mxu0 0.0
  %2914 = vmatprep.subr.mxu0 0.0
  %2915 = vmatpush1.msra.mxu0 0.0
  %2916 = vmatprep.subr.mxu0 0.0
  %2917 = vmatpush1.msra.mxu0 0.0
  %2918 = vmatprep.subr.mxu0 0.0
  %2919 = vmatpush1.msra.mxu0 0.0
  %2920 = vmatprep.subr.mxu0 0.0
  %2921 = vmatpush1.msra.mxu0 0.0
  %2922 = vmatprep.subr.mxu0 0.0
  %2923 = vmatpush1.msra.mxu0 0.0
  %2924 = vmatprep.subr.mxu0 0.0
  %2925 = vmatpush1.msra.mxu0 0.0
  %2926 = vmatprep.mubr.f32.mxu0 0.0
  %2927 = vmatmul.mubr.f32.gmra.mrb[0].mxu0 %v2854
  %v2928 = vpop.f32.mrb[0].mxu0
  %v2929 = vadd.f32 0.0, %v2928
  %v2930 = vpop.f32.mrb[0].mxu0
  %2931 = vmatprep.mubr.f32.mxu0 0.0
  %2932 = vmatmul.mubr.f32.gmra.mrb[0].mxu0 %v2857
  %v2933 = vpop.f32.mrb[0].mxu0
  %v2934 = vadd.f32 0.0, %v2933
  %v2935 = vpop.f32.mrb[0].mxu0
  %2936 = vdwg.mxu0
  %v2938 = vsel %vm1574, %v1920, 0
  %v2941 = vsel %vm1574, %v1921, 0
  %v2944 = vsel %vm1934, %v135, 0
  %2946 = vmatprep.subr.mxu0 0.0
  %2947 = vmatpush1.msra.mxu0 %v134
  %2948 = vmatprep.subr.mxu0 0.0
  %2949 = vmatpush1.msra.mxu0 %v2944
  %2950 = vmatprep.subr.mxu0 0.0
  %2951 = vmatpush1.msra.mxu0 0.0
  %2952 = vmatprep.subr.mxu0 0.0
  %2953 = vmatpush1.msra.mxu0 0.0
  %2954 = vmatprep.subr.mxu0 0.0
  %2955 = vmatpush1.msra.mxu0 0.0
  %2956 = vmatprep.subr.mxu0 0.0
  %2957 = vmatpush1.msra.mxu0 0.0
  %2958 = vmatprep.subr.mxu0 0.0
  %2959 = vmatpush1.msra.mxu0 0.0
  %2960 = vmatprep.subr.mxu0 0.0
  %2961 = vmatpush1.msra.mxu0 0.0
  %2962 = vmatprep.subr.mxu0 0.0
  %2963 = vmatpush1.msra.mxu0 0.0
  %2964 = vmatprep.subr.mxu0 0.0
  %2965 = vmatpush1.msra.mxu0 0.0
  %2966 = vmatprep.subr.mxu0 0.0
  %2967 = vmatpush1.msra.mxu0 0.0
  %2968 = vmatprep.subr.mxu0 0.0
  %2969 = vmatpush1.msra.mxu0 0.0
  %2970 = vmatprep.subr.mxu0 0.0
  %2971 = vmatpush1.msra.mxu0 0.0
  %2972 = vmatprep.subr.mxu0 0.0
  %2973 = vmatpush1.msra.mxu0 0.0
  %2974 = vmatprep.subr.mxu0 0.0
  %2975 = vmatpush1.msra.mxu0 0.0
  %2976 = vmatprep.subr.mxu0 0.0
  %2977 = vmatpush1.msra.mxu0 0.0
  %2978 = vmatprep.subr.mxu0 0.0
  %2979 = vmatpush1.msra.mxu0 0.0
  %2980 = vmatprep.subr.mxu0 0.0
  %2981 = vmatpush1.msra.mxu0 0.0
  %2982 = vmatprep.subr.mxu0 0.0
  %2983 = vmatpush1.msra.mxu0 0.0
  %2984 = vmatprep.subr.mxu0 0.0
  %2985 = vmatpush1.msra.mxu0 0.0
  %2986 = vmatprep.subr.mxu0 0.0
  %2987 = vmatpush1.msra.mxu0 0.0
  %2988 = vmatprep.subr.mxu0 0.0
  %2989 = vmatpush1.msra.mxu0 0.0
  %2990 = vmatprep.subr.mxu0 0.0
  %2991 = vmatpush1.msra.mxu0 0.0
  %2992 = vmatprep.subr.mxu0 0.0
  %2993 = vmatpush1.msra.mxu0 0.0
  %2994 = vmatprep.subr.mxu0 0.0
  %2995 = vmatpush1.msra.mxu0 0.0
  %2996 = vmatprep.subr.mxu0 0.0
  %2997 = vmatpush1.msra.mxu0 0.0
  %2998 = vmatprep.subr.mxu0 0.0
  %2999 = vmatpush1.msra.mxu0 0.0
  %3000 = vmatprep.subr.mxu0 0.0
  %3001 = vmatpush1.msra.mxu0 0.0
  %3002 = vmatprep.subr.mxu0 0.0
  %3003 = vmatpush1.msra.mxu0 0.0
  %3004 = vmatprep.subr.mxu0 0.0
  %3005 = vmatpush1.msra.mxu0 0.0
  %3006 = vmatprep.subr.mxu0 0.0
  %3007 = vmatpush1.msra.mxu0 0.0
  %3008 = vmatprep.subr.mxu0 0.0
  %3009 = vmatpush1.msra.mxu0 0.0
  %3010 = vmatprep.mubr.f32.mxu0 0.0
  %3011 = vmatmul.mubr.f32.gmra.mrb[0].mxu0 %v2938
  %v3012 = vpop.f32.mrb[0].mxu0
  %v3013 = vadd.f32 0.0, %v3012
  %v3014 = vpop.f32.mrb[0].mxu0
  %3015 = vmatprep.mubr.f32.mxu0 0.0
  %3016 = vmatmul.mubr.f32.gmra.mrb[0].mxu0 %v2941
  %v3017 = vpop.f32.mrb[0].mxu0
  %v3018 = vadd.f32 0.0, %v3017
  %v3019 = vpop.f32.mrb[0].mxu0
  %3020 = vdwg.mxu0
  %v3022 = vsel %vm1574, %v1922, 0
  %v3025 = vsel %vm1574, %v1923, 0
  %v3028 = vsel %vm1934, %v137, 0
  %3030 = vmatprep.subr.mxu0 0.0
  %3031 = vmatpush1.msra.mxu0 %v136
  %3032 = vmatprep.subr.mxu0 0.0
  %3033 = vmatpush1.msra.mxu0 %v3028
  %3034 = vmatprep.subr.mxu0 0.0
  %3035 = vmatpush1.msra.mxu0 0.0
  %3036 = vmatprep.subr.mxu0 0.0
  %3037 = vmatpush1.msra.mxu0 0.0
  %3038 = vmatprep.subr.mxu0 0.0
  %3039 = vmatpush1.msra.mxu0 0.0
  %3040 = vmatprep.subr.mxu0 0.0
  %3041 = vmatpush1.msra.mxu0 0.0
  %3042 = vmatprep.subr.mxu0 0.0
  %3043 = vmatpush1.msra.mxu0 0.0
  %3044 = vmatprep.subr.mxu0 0.0
  %3045 = vmatpush1.msra.mxu0 0.0
  %3046 = vmatprep.subr.mxu0 0.0
  %3047 = vmatpush1.msra.mxu0 0.0
  %3048 = vmatprep.subr.mxu0 0.0
  %3049 = vmatpush1.msra.mxu0 0.0
  %3050 = vmatprep.subr.mxu0 0.0
  %3051 = vmatpush1.msra.mxu0 0.0
  %3052 = vmatprep.subr.mxu0 0.0
  %3053 = vmatpush1.msra.mxu0 0.0
  %3054 = vmatprep.subr.mxu0 0.0
  %3055 = vmatpush1.msra.mxu0 0.0
  %3056 = vmatprep.subr.mxu0 0.0
  %3057 = vmatpush1.msra.mxu0 0.0
  %3058 = vmatprep.subr.mxu0 0.0
  %3059 = vmatpush1.msra.mxu0 0.0
  %3060 = vmatprep.subr.mxu0 0.0
  %3061 = vmatpush1.msra.mxu0 0.0
  %3062 = vmatprep.subr.mxu0 0.0
  %3063 = vmatpush1.msra.mxu0 0.0
  %3064 = vmatprep.subr.mxu0 0.0
  %3065 = vmatpush1.msra.mxu0 0.0
  %3066 = vmatprep.subr.mxu0 0.0
  %3067 = vmatpush1.msra.mxu0 0.0
  %3068 = vmatprep.subr.mxu0 0.0
  %3069 = vmatpush1.msra.mxu0 0.0
  %3070 = vmatprep.subr.mxu0 0.0
  %3071 = vmatpush1.msra.mxu0 0.0
  %3072 = vmatprep.subr.mxu0 0.0
  %3073 = vmatpush1.msra.mxu0 0.0
  %3074 = vmatprep.subr.mxu0 0.0
  %3075 = vmatpush1.msra.mxu0 0.0
  %3076 = vmatprep.subr.mxu0 0.0
  %3077 = vmatpush1.msra.mxu0 0.0
  %3078 = vmatprep.subr.mxu0 0.0
  %3079 = vmatpush1.msra.mxu0 0.0
  %3080 = vmatprep.subr.mxu0 0.0
  %3081 = vmatpush1.msra.mxu0 0.0
  %3082 = vmatprep.subr.mxu0 0.0
  %3083 = vmatpush1.msra.mxu0 0.0
  %3084 = vmatprep.subr.mxu0 0.0
  %3085 = vmatpush1.msra.mxu0 0.0
  %3086 = vmatprep.subr.mxu0 0.0
  %3087 = vmatpush1.msra.mxu0 0.0
  %3088 = vmatprep.subr.mxu0 0.0
  %3089 = vmatpush1.msra.mxu0 0.0
  %3090 = vmatprep.subr.mxu0 0.0
  %3091 = vmatpush1.msra.mxu0 0.0
  %3092 = vmatprep.subr.mxu0 0.0
  %3093 = vmatpush1.msra.mxu0 0.0
  %3094 = vmatprep.mubr.f32.mxu0 0.0
  %3095 = vmatmul.mubr.f32.gmra.mrb[0].mxu0 %v3022
  %v3096 = vpop.f32.mrb[0].mxu0
  %v3097 = vadd.f32 0.0, %v3096
  %v3098 = vpop.f32.mrb[0].mxu0
  %3099 = vmatprep.mubr.f32.mxu0 0.0
  %3100 = vmatmul.mubr.f32.gmra.mrb[0].mxu0 %v3025
  %v3101 = vpop.f32.mrb[0].mxu0
  %v3102 = vadd.f32 0.0, %v3101
  %v3103 = vpop.f32.mrb[0].mxu0
  %3104 = vdwg.mxu0
  %v3106 = vsel %vm1574, %v1924, 0
  %v3109 = vsel %vm1574, %v1925, 0
  %v3112 = vsel %vm1934, %v139, 0
  %3114 = vmatprep.subr.mxu0 0.0
  %3115 = vmatpush1.msra.mxu0 %v138
  %3116 = vmatprep.subr.mxu0 0.0
  %3117 = vmatpush1.msra.mxu0 %v3112
  %3118 = vmatprep.subr.mxu0 0.0
  %3119 = vmatpush1.msra.mxu0 0.0
  %3120 = vmatprep.subr.mxu0 0.0
  %3121 = vmatpush1.msra.mxu0 0.0
  %3122 = vmatprep.subr.mxu0 0.0
  %3123 = vmatpush1.msra.mxu0 0.0
  %3124 = vmatprep.subr.mxu0 0.0
  %3125 = vmatpush1.msra.mxu0 0.0
  %3126 = vmatprep.subr.mxu0 0.0
  %3127 = vmatpush1.msra.mxu0 0.0
  %3128 = vmatprep.subr.mxu0 0.0
  %3129 = vmatpush1.msra.mxu0 0.0
  %3130 = vmatprep.subr.mxu0 0.0
  %3131 = vmatpush1.msra.mxu0 0.0
  %3132 = vmatprep.subr.mxu0 0.0
  %3133 = vmatpush1.msra.mxu0 0.0
  %3134 = vmatprep.subr.mxu0 0.0
  %3135 = vmatpush1.msra.mxu0 0.0
  %3136 = vmatprep.subr.mxu0 0.0
  %3137 = vmatpush1.msra.mxu0 0.0
  %3138 = vmatprep.subr.mxu0 0.0
  %3139 = vmatpush1.msra.mxu0 0.0
  %3140 = vmatprep.subr.mxu0 0.0
  %3141 = vmatpush1.msra.mxu0 0.0
  %3142 = vmatprep.subr.mxu0 0.0
  %3143 = vmatpush1.msra.mxu0 0.0
  %3144 = vmatprep.subr.mxu0 0.0
  %3145 = vmatpush1.msra.mxu0 0.0
  %3146 = vmatprep.subr.mxu0 0.0
  %3147 = vmatpush1.msra.mxu0 0.0
  %3148 = vmatprep.subr.mxu0 0.0
  %3149 = vmatpush1.msra.mxu0 0.0
  %3150 = vmatprep.subr.mxu0 0.0
  %3151 = vmatpush1.msra.mxu0 0.0
  %3152 = vmatprep.subr.mxu0 0.0
  %3153 = vmatpush1.msra.mxu0 0.0
  %3154 = vmatprep.subr.mxu0 0.0
  %3155 = vmatpush1.msra.mxu0 0.0
  %3156 = vmatprep.subr.mxu0 0.0
  %3157 = vmatpush1.msra.mxu0 0.0
  %3158 = vmatprep.subr.mxu0 0.0
  %3159 = vmatpush1.msra.mxu0 0.0
  %3160 = vmatprep.subr.mxu0 0.0
  %3161 = vmatpush1.msra.mxu0 0.0
  %3162 = vmatprep.subr.mxu0 0.0
  %3163 = vmatpush1.msra.mxu0 0.0
  %3164 = vmatprep.subr.mxu0 0.0
  %3165 = vmatpush1.msra.mxu0 0.0
  %3166 = vmatprep.subr.mxu0 0.0
  %3167 = vmatpush1.msra.mxu0 0.0
  %3168 = vmatprep.subr.mxu0 0.0
  %3169 = vmatpush1.msra.mxu0 0.0
  %3170 = vmatprep.subr.mxu0 0.0
  %3171 = vmatpush1.msra.mxu0 0.0
  %3172 = vmatprep.subr.mxu0 0.0
  %3173 = vmatpush1.msra.mxu0 0.0
  %3174 = vmatprep.subr.mxu0 0.0
  %3175 = vmatpush1.msra.mxu0 0.0
  %3176 = vmatprep.subr.mxu0 0.0
  %3177 = vmatpush1.msra.mxu0 0.0
  %3178 = vmatprep.mubr.f32.mxu0 0.0
  %3179 = vmatmul.mubr.f32.gmra.mrb[0].mxu0 %v3106
  %v3180 = vpop.f32.mrb[0].mxu0
  %v3181 = vadd.f32 0.0, %v3180
  %v3182 = vpop.f32.mrb[0].mxu0
  %3183 = vmatprep.mubr.f32.mxu0 0.0
  %3184 = vmatmul.mubr.f32.gmra.mrb[0].mxu0 %v3109
  %v3185 = vpop.f32.mrb[0].mxu0
  %v3186 = vadd.f32 0.0, %v3185
  %v3187 = vpop.f32.mrb[0].mxu0
  %3188 = vdwg.mxu0
  %v3190 = vsel %vm1574, %v1926, 0
  %v3193 = vsel %vm1574, %v1927, 0
  %v3196 = vsel %vm1934, %v141, 0
  %3198 = vmatprep.subr.mxu0 0.0
  %3199 = vmatpush1.msra.mxu0 %v140
  %3200 = vmatprep.subr.mxu0 0.0
  %3201 = vmatpush1.msra.mxu0 %v3196
  %3202 = vmatprep.subr.mxu0 0.0
  %3203 = vmatpush1.msra.mxu0 0.0
  %3204 = vmatprep.subr.mxu0 0.0
  %3205 = vmatpush1.msra.mxu0 0.0
  %3206 = vmatprep.subr.mxu0 0.0
  %3207 = vmatpush1.msra.mxu0 0.0
  %3208 = vmatprep.subr.mxu0 0.0
  %3209 = vmatpush1.msra.mxu0 0.0
  %3210 = vmatprep.subr.mxu0 0.0
  %3211 = vmatpush1.msra.mxu0 0.0
  %3212 = vmatprep.subr.mxu0 0.0
  %3213 = vmatpush1.msra.mxu0 0.0
  %3214 = vmatprep.subr.mxu0 0.0
  %3215 = vmatpush1.msra.mxu0 0.0
  %3216 = vmatprep.subr.mxu0 0.0
  %3217 = vmatpush1.msra.mxu0 0.0
  %3218 = vmatprep.subr.mxu0 0.0
  %3219 = vmatpush1.msra.mxu0 0.0
  %3220 = vmatprep.subr.mxu0 0.0
  %3221 = vmatpush1.msra.mxu0 0.0
  %3222 = vmatprep.subr.mxu0 0.0
  %3223 = vmatpush1.msra.mxu0 0.0
  %3224 = vmatprep.subr.mxu0 0.0
  %3225 = vmatpush1.msra.mxu0 0.0
  %3226 = vmatprep.subr.mxu0 0.0
  %3227 = vmatpush1.msra.mxu0 0.0
  %3228 = vmatprep.subr.mxu0 0.0
  %3229 = vmatpush1.msra.mxu0 0.0
  %3230 = vmatprep.subr.mxu0 0.0
  %3231 = vmatpush1.msra.mxu0 0.0
  %3232 = vmatprep.subr.mxu0 0.0
  %3233 = vmatpush1.msra.mxu0 0.0
  %3234 = vmatprep.subr.mxu0 0.0
  %3235 = vmatpush1.msra.mxu0 0.0
  %3236 = vmatprep.subr.mxu0 0.0
  %3237 = vmatpush1.msra.mxu0 0.0
  %3238 = vmatprep.subr.mxu0 0.0
  %3239 = vmatpush1.msra.mxu0 0.0
  %3240 = vmatprep.subr.mxu0 0.0
  %3241 = vmatpush1.msra.mxu0 0.0
  %3242 = vmatprep.subr.mxu0 0.0
  %3243 = vmatpush1.msra.mxu0 0.0
  %3244 = vmatprep.subr.mxu0 0.0
  %3245 = vmatpush1.msra.mxu0 0.0
  %3246 = vmatprep.subr.mxu0 0.0
  %3247 = vmatpush1.msra.mxu0 0.0
  %3248 = vmatprep.subr.mxu0 0.0
  %3249 = vmatpush1.msra.mxu0 0.0
  %3250 = vmatprep.subr.mxu0 0.0
  %3251 = vmatpush1.msra.mxu0 0.0
  %3252 = vmatprep.subr.mxu0 0.0
  %3253 = vmatpush1.msra.mxu0 0.0
  %3254 = vmatprep.subr.mxu0 0.0
  %3255 = vmatpush1.msra.mxu0 0.0
  %3256 = vmatprep.subr.mxu0 0.0
  %3257 = vmatpush1.msra.mxu0 0.0
  %3258 = vmatprep.subr.mxu0 0.0
  %3259 = vmatpush1.msra.mxu0 0.0
  %3260 = vmatprep.subr.mxu0 0.0
  %3261 = vmatpush1.msra.mxu0 0.0
  %3262 = vmatprep.mubr.f32.mxu0 0.0
  %3263 = vmatmul.mubr.f32.gmra.mrb[0].mxu0 %v3190
  %v3264 = vpop.f32.mrb[0].mxu0
  %v3265 = vadd.f32 0.0, %v3264
  %v3266 = vpop.f32.mrb[0].mxu0
  %3267 = vmatprep.mubr.f32.mxu0 0.0
  %3268 = vmatmul.mubr.f32.gmra.mrb[0].mxu0 %v3193
  %v3269 = vpop.f32.mrb[0].mxu0
  %v3270 = vadd.f32 0.0, %v3269
  %v3271 = vpop.f32.mrb[0].mxu0
  %3272 = vdwg.mxu0
  %3273 = vst.msk [vmem:[%s3] sm:$0xff] %vm142, %v2005
  %vm3274 = vcmask 25600
  %3275 = vst.msk [vmem:[%s3 + $0x8] sm:$0x3] %vm3274, %v2010
  %3276 = vst.msk [vmem:[%s3 + $0x10] sm:$0xff] %vm142, %v2089
  %3277 = vst.msk [vmem:[%s3 + $0x18] sm:$0x3] %vm3274, %v2094
  %3278 = vst.msk [vmem:[%s3 + $0x20] sm:$0xff] %vm142, %v2173
  %3279 = vst.msk [vmem:[%s3 + $0x28] sm:$0x3] %vm3274, %v2178
  %3280 = vst.msk [vmem:[%s3 + $0x30] sm:$0xff] %vm142, %v2257
  %3281 = vst.msk [vmem:[%s3 + $0x38] sm:$0x3] %vm3274, %v2262
  %3282 = vst.msk [vmem:[%s3 + $0x40] sm:$0xff] %vm142, %v2341
  %3283 = vst.msk [vmem:[%s3 + $0x48] sm:$0x3] %vm3274, %v2346
  %3284 = vst.msk [vmem:[%s3 + $0x50] sm:$0xff] %vm142, %v2425
  %3285 = vst.msk [vmem:[%s3 + $0x58] sm:$0x3] %vm3274, %v2430
  %3286 = vst.msk [vmem:[%s3 + $0x60] sm:$0xff] %vm142, %v2509
  %3287 = vst.msk [vmem:[%s3 + $0x68] sm:$0x3] %vm3274, %v2514
  %3288 = vst.msk [vmem:[%s3 + $0x70] sm:$0xff] %vm142, %v2593
  %3289 = vst.msk [vmem:[%s3 + $0x78] sm:$0x3] %vm3274, %v2598
  %3290 = vst.msk [vmem:[%s3 + $0x80] sm:$0xff] %vm142, %v2677
  %3291 = vst.msk [vmem:[%s3 + $0x88] sm:$0x3] %vm3274, %v2682
  %3292 = vst.msk [vmem:[%s3 + $0x90] sm:$0xff] %vm142, %v2761
  %3293 = vst.msk [vmem:[%s3 + $0x98] sm:$0x3] %vm3274, %v2766
  %3294 = vst.msk [vmem:[%s3 + $0xa0] sm:$0xff] %vm142, %v2845
  %3295 = vst.msk [vmem:[%s3 + $0xa8] sm:$0x3] %vm3274, %v2850
  %3296 = vst.msk [vmem:[%s3 + $0xb0] sm:$0xff] %vm142, %v2929
  %3297 = vst.msk [vmem:[%s3 + $0xb8] sm:$0x3] %vm3274, %v2934
  %3298 = vst.msk [vmem:[%s3 + $0xc0] sm:$0xff] %vm142, %v3013
  %3299 = vst.msk [vmem:[%s3 + $0xc8] sm:$0x3] %vm3274, %v3018
  %3300 = vst.msk [vmem:[%s3 + $0xd0] sm:$0xff] %vm142, %v3097
  %3301 = vst.msk [vmem:[%s3 + $0xd8] sm:$0x3] %vm3274, %v3102
  %3302 = vst.msk [vmem:[%s3 + $0xe0] sm:$0xff] %vm142, %v3181
  %3303 = vst.msk [vmem:[%s3 + $0xe8] sm:$0x3] %vm3274, %v3186
  %3304 = vst.msk [vmem:[%s3 + $0xf0] sm:$0xff] %vm142, %v3265
  %3305 = vst.msk [vmem:[%s3 + $0xf8] sm:$0x3] %vm3274, %v3270
  // Predicated region
  $region14: #{tatt_forward.4} parent=0 // pred_check
    _
  $region15: #{tatt_forward.4} parent=0 // pred_check_branch
    %3307 = sbr.rel (0) target = $region17
  $region16: #{tatt_forward.4} parent=0 // pred_region
    _
  $region17: #{tatt_forward.4} parent=0 // pred_fallthru
    _
  // Predicated region
  $region18: #{tatt_forward.4} parent=0 // pred_check
    _
  $region19: #{tatt_forward.4} parent=0 // pred_check_branch
    %3309 = sbr.rel (0) target = $region21
  $region20: #{tatt_forward.4} parent=0 // pred_region
    _
  $region21: #{tatt_forward.4} parent=0 // pred_fallthru
    _

</llo_original>
